<compile_context>
chip_gen: v5e
topology: v5e:2x2
jax: 0.10.0
libtpu: 0.0.40
codegen_flags: <defaults>
</compile_context>

<pallas_src>
import functools

import jax
import jax.numpy as jnp
from jax import lax
from jax.experimental import pallas as pl
from jax.experimental.pallas import tpu as pltpu

LANE = 128


def _round_up(x, m):
    return (x + m - 1) // m * m


def _largest_divisor_leq(n, cap):
    for d in range(min(n, cap), 0, -1):
        if n % d == 0:
            return d
    return n


# ----------------------------------------------------------------------------
# Pallas kernels
# ----------------------------------------------------------------------------
def _basic_block_kernel(*refs, s, TR, Hm, TIN, W_out, H_out, Cp_in, Cp_out,
                        downsample, out_dtype):
    """Fused BasicBlock on one (batch, row-tile) grid cell.

    refs (downsample): xwin, w1, w2, wd, bn, out, tpad(scratch)
    refs (identity)  : xwin, w1, w2, bn, out, tpad(scratch)

      xwin : (1, s*s*TIN, Wp, Cp_in) bf16  phase-decomposed, halo-padded input window
      w1   : (9*Cp_in,  Cp_out) bf16       3x3 taps stacked along K (im2col order)
      w2   : (9*Cp_out, Cp_out) bf16
      wd   : (Cp_in, Cp_out)    bf16       1x1 downsample
      bn   : (6, Cp_out) f32               [s1, b1, s2, b2, sd, bd]
      out  : (1, TR*W_out, Cp_out) bf16    lane-dense, row-flattened output tile
      tpad : (Hm, W_out+2, Cp_out) f32     W-halo-padded conv1 output (VMEM scratch)
    """
    if downsample:
        xwin_ref, w1_ref, w2_ref, wd_ref, bn_ref, o_ref, tpad_ref = refs
    else:
        xwin_ref, w1_ref, w2_ref, bn_ref, o_ref, tpad_ref = refs
        wd_ref = None

    t_idx = pl.program_id(1)
    M1 = Hm * W_out
    M2 = TR * W_out

    # ---- conv1 (3x3, stride s) as a single K=9*Cp_in MXU contraction (bf16 -> f32)
    taps = []
    for dy in range(3):
        for dx in range(3):
            py, jr = dy % s, dy // s
            px, jc = dx % s, dx // s
            row0 = (py * s + px) * TIN + jr
            sl = xwin_ref[0, row0:row0 + Hm, jc:jc + W_out, :]
            taps.append(sl.reshape(M1, Cp_in))
    patch1 = jnp.concatenate(taps, axis=-1)                        # (M1, 9*Cp_in)
    t = jnp.dot(patch1, w1_ref[...], preferred_element_type=jnp.float32)
    t = jnp.maximum(t * bn_ref[0] + bn_ref[1], 0.0)                # BN1 + ReLU (f32)
    t = t.reshape(Hm, W_out, Cp_out)

    # conv2 zero-pads its input: intermediate halo rows outside the image are zeros.
    rowid = lax.broadcasted_iota(jnp.int32, (Hm, W_out, Cp_out), 0) + (t_idx * TR - 1)
    t = jnp.where((rowid >= 0) & (rowid < H_out), t, 0.0)

    # stage the W-halo-padded intermediate in VMEM scratch (stays on-chip)
    tpad_ref[...] = jnp.zeros((Hm, W_out + 2, Cp_out), jnp.float32)
    tpad_ref[:, 1:W_out + 1, :] = t

    # ---- conv2 (3x3, stride 1) as a single K=9*Cp_out MXU contraction -------------
    taps2 = []
    for dy in range(3):
        for dx in range(3):
            sl = tpad_ref[dy:dy + TR, dx:dx + W_out, :].astype(jnp.bfloat16)
            taps2.append(sl.reshape(M2, Cp_out))
    patch2 = jnp.concatenate(taps2, axis=-1)                       # (M2, 9*Cp_out)
    y = jnp.dot(patch2, w2_ref[...], preferred_element_type=jnp.float32)
    y = y * bn_ref[2] + bn_ref[3]                                  # BN2 (f32)

    # ---- identity / 1x1-downsample path (read straight from the phase window) -----
    py_i, j0 = (s + 1) % s, (s + 1) // s
    px_i, c0 = 1 % s, 1 // s
    base_i = (py_i * s + px_i) * TIN + j0
    ident = xwin_ref[0, base_i:base_i + TR, c0:c0 + W_out, :].reshape(M2, Cp_in)
    if downsample:
        idv = jnp.dot(ident, wd_ref[...], preferred_element_type=jnp.float32)
        idv = idv * bn_ref[4] + bn_ref[5]
    else:
        idv = ident.astype(jnp.float32)

    o_ref[0] = jnp.maximum(y + idv, 0.0).astype(out_dtype)


def _pointwise_kernel(x_ref, w_ref, sb_ref, o_ref, *, relu, out_dtype):
    """Lane-dense pointwise matmul + folded BN (+ReLU). x:(1,TL,Cin) w:(Cin,Cout)."""
    y = jnp.dot(x_ref[0], w_ref[...], preferred_element_type=jnp.float32)
    y = y * sb_ref[0] + sb_ref[1]
    if relu:
        y = jnp.maximum(y, 0.0)
    o_ref[0] = y.astype(out_dtype)


# ----------------------------------------------------------------------------
# Pallas wrappers
# ----------------------------------------------------------------------------
def basic_block_forward(x_flat, H_in, W_in, c_in, p, row_tile=8):
    """x_flat: (N, H_in*W_in, Cp_in) bf16, channels zero-padded to a lane multiple."""
    N, _, Cp_in = x_flat.shape
    c_out = p['w1'].shape[-1]
    Cp_out = _round_up(c_out, LANE)
    s = p['stride']
    assert s == 1 or p['downsample'], "stride>1 without downsample is not supported"
    if not p['downsample']:
        assert c_in == c_out

    H_out = (H_in - 1) // s + 1
    W_out = (W_in - 1) // s + 1
    TR = _largest_divisor_leq(H_out, row_tile)   # output rows per tile (raise for real BEV maps)
    nt = H_out // TR
    Hm = TR + 2                                  # conv1 rows per tile (incl. conv2 halo)
    TIN = Hm + 2 // s                            # phase-rows per tile
    Wp = W_out + 2 // s                          # phase-cols per tile

    # ---- pack phase-decomposed halo windows (one wrapper gather per fused block) --
    x = x_flat.reshape(N, H_in, W_in, Cp_in)
    P_top = s + 1
    max_row = s * ((nt - 1) * TR - 1) + (P_top - 1) + s * (TIN - 1) + (s - 1)
    P_bot = max(max_row + 1 - H_in - P_top, 0)
    xp = jnp.pad(x, ((0, 0), (P_top, P_bot), (1, s), (0, 0)))
    rows = (s * (jnp.arange(nt)[:, None, None] * TR - 1) + (P_top - 1)
            + jnp.arange(s)[None, :, None] + s * jnp.arange(TIN)[None, None, :])
    cols = s * jnp.arange(Wp)[None, :] + jnp.arange(s)[:, None]
    g = xp[:, rows]                              # (N, nt, py, TIN, W_xp, C)
    g = g[:, :, :, :, cols]                      # (N, nt, py, TIN, px, Wp, C)
    g = g.transpose(0, 1, 2, 4, 3, 5, 6)         # (N, nt, py, px, TIN, Wp, C)
    xwin = g.reshape(N * nt, s * s * TIN, Wp, Cp_in)

    # ---- pack weights / folded-BN params (lane-padded bf16; tiny, hoistable) ------
    w1 = jnp.pad(p['w1'], ((0, 0), (0, Cp_in - c_in), (0, Cp_out - c_out)))
    w1 = w1.reshape(9 * Cp_in, Cp_out).astype(jnp.bfloat16)
    w2 = jnp.pad(p['w2'], ((0, 0), (0, Cp_out - c_out), (0, Cp_out - c_out)))
    w2 = w2.reshape(9 * Cp_out, Cp_out).astype(jnp.bfloat16)

    def padc(v):
        return jnp.pad(v, (0, Cp_out - v.shape[0]))

    bn_rows = [padc(p['s1']), padc(p['b1']), padc(p['s2']), padc(p['b2'])]
    args = [xwin, w1, w2]
    in_specs = [
        pl.BlockSpec((1, s * s * TIN, Wp, Cp_in), lambda n, t: (n * nt + t, 0, 0, 0)),
        pl.BlockSpec((9 * Cp_in, Cp_out), lambda n, t: (0, 0)),
        pl.BlockSpec((9 * Cp_out, Cp_out), lambda n, t: (0, 0)),
    ]
    if p['downsample']:
        wd = jnp.pad(p['wd'], ((0, Cp_in - c_in), (0, Cp_out - c_out))).astype(jnp.bfloat16)
        args.append(wd)
        in_specs.append(pl.BlockSpec((Cp_in, Cp_out), lambda n, t: (0, 0)))
        bn_rows += [padc(p['sd']), padc(p['bd'])]
    else:
        bn_rows += [jnp.zeros((Cp_out,), jnp.float32)] * 2
    bn = jnp.stack(bn_rows).astype(jnp.float32)
    args.append(bn)
    in_specs.append(pl.BlockSpec((6, Cp_out), lambda n, t: (0, 0)))

    kernel = functools.partial(
        _basic_block_kernel, s=s, TR=TR, Hm=Hm, TIN=TIN, W_out=W_out, H_out=H_out,
        Cp_in=Cp_in, Cp_out=Cp_out, downsample=p['downsample'], out_dtype=jnp.bfloat16)

    out = pl.pallas_call(
        kernel,
        out_shape=jax.ShapeDtypeStruct((N, H_out * W_out, Cp_out), jnp.bfloat16),
        grid=(N, nt),
        in_specs=in_specs,
        out_specs=pl.BlockSpec((1, TR * W_out, Cp_out), lambda n, t: (n, t, 0)),
        scratch_shapes=[pltpu.VMEM((Hm, W_out + 2, Cp_out), jnp.float32)],
        compiler_params=pltpu.CompilerParams(
            dimension_semantics=("parallel", "parallel"),
            vmem_limit_bytes=32 * 1024 * 1024),
    )(*args)
    return out, H_out, W_out, c_out


def deblock_forward(x_flat, H, W, c_in, d, row_tile=8):
    """ConvTranspose2d(k, stride=k) + BN + ReLU as a lane-dense (C -> k*k*C) matmul."""
    N, L, Cp_in = x_flat.shape
    k = d['k']
    c_out = d['w'].shape[-1]
    Cp_out = _round_up(c_out, LANE)

    w = jnp.pad(d['w'], ((0, Cp_in - c_in), (0, 0), (0, 0), (0, Cp_out - c_out)))
    w = w.reshape(Cp_in, k * k * Cp_out).astype(jnp.bfloat16)
    sp = jnp.pad(d['s'], (0, Cp_out - c_out))
    bp = jnp.pad(d['b'], (0, Cp_out - c_out))
    sb = jnp.stack([jnp.tile(sp, k * k), jnp.tile(bp, k * k)]).astype(jnp.float32)

    TRr = _largest_divisor_leq(H, row_tile)
    nt = H // TRr
    TL = TRr * W
    kernel = functools.partial(_pointwise_kernel, relu=True, out_dtype=jnp.float32)
    y = pl.pallas_call(
        kernel,
        out_shape=jax.ShapeDtypeStruct((N, L, k * k * Cp_out), jnp.float32),
        grid=(N, nt),
        in_specs=[pl.BlockSpec((1, TL, Cp_in), lambda n, t: (n, t, 0)),
                  pl.BlockSpec((Cp_in, k * k * Cp_out), lambda n, t: (0, 0)),
                  pl.BlockSpec((2, k * k * Cp_out), lambda n, t: (0, 0))],
        out_specs=pl.BlockSpec((1, TL, k * k * Cp_out), lambda n, t: (n, t, 0)),
        compiler_params=pltpu.CompilerParams(
            dimension_semantics=("parallel", "parallel"),
            vmem_limit_bytes=32 * 1024 * 1024),
    )(x_flat, w, sb)
    # one depth-to-space at the API boundary (true channels only).
    # TODO(synk): the (dy,dx) slabs could be written pre-shuffled from the kernel via a
    # strided output index_map to drop this XLA pass.
    y = y.reshape(N, H, W, k, k, Cp_out)[..., :c_out]
    y = y.transpose(0, 1, 3, 2, 4, 5).reshape(N, H * k, W * k, c_out)
    return y


# ----------------------------------------------------------------------------
# Module forward (glue around the Pallas kernels)
# ----------------------------------------------------------------------------
def backbone_forward(params, data_dict, row_tile=8):
    """Mirror of BaseBEVResBackbone.forward. Inputs/outputs are NCHW like PyTorch."""
    sf = data_dict['spatial_features']
    N, C, H, W = sf.shape
    Cp = _round_up(C, LANE)
    x = jnp.transpose(sf, (0, 2, 3, 1)).astype(jnp.bfloat16)
    x = jnp.pad(x, ((0, 0), (0, 0), (0, 0), (0, Cp - C)))   # lane-dense channel padding
    x_flat = x.reshape(N, H * W, Cp)
    c = C
    ups = []
    for i, level in enumerate(params['blocks']):
        for bp in level:
            x_flat, H, W, c = basic_block_forward(x_flat, H, W, c, bp, row_tile)
        stride = data_dict['spatial_features'].shape[2] // H
        feat = x_flat.reshape(N, H, W, -1)[..., :c].astype(jnp.float32)
        data_dict['spatial_features_%dx' % stride] = jnp.transpose(feat, (0, 3, 1, 2))
        if len(params['deblocks']) > 0:
            ups.append(deblock_forward(x_flat, H, W, c, params['deblocks'][i], row_tile))
        else:
            ups.append(feat)
    if len(ups) > 1:
        x_out = jnp.concatenate(ups, axis=-1)
    elif len(ups) == 1:
        x_out = ups[0]
    # TODO(synk): extra trailing deblock (len(UPSAMPLE_STRIDES) > num_levels) not exercised here.
    data_dict['spatial_features_2d'] = jnp.transpose(x_out, (0, 3, 1, 2))
    return data_dict


# ----------------------------------------------------------------------------
# Deterministic parameter construction (mirrors __init__ shapes)
# ----------------------------------------------------------------------------
def _bn_affine(key, c, eps=1e-3):
    k1, k2, k3, k4 = jax.random.split(key, 4)
    gamma = jax.random.uniform(k1, (c,), minval=0.5, maxval=1.5)
    beta = jax.random.uniform(k2, (c,), minval=-0.1, maxval=0.1)
    mean = jax.random.uniform(k3, (c,), minval=-0.1, maxval=0.1)
    var = jax.random.uniform(k4, (c,), minval=0.5, maxval=1.5)
    scale = gamma / jnp.sqrt(var + eps)
    bias = beta - mean * scale
    return scale.astype(jnp.float32), bias.astype(jnp.float32)


def build_backbone_params(model_cfg, input_channels, key):
    layer_nums = model_cfg.get('LAYER_NUMS') or []
    layer_strides = model_cfg.get('LAYER_STRIDES') or []
    num_filters = model_cfg.get('NUM_FILTERS') or []
    upsample_strides = model_cfg.get('UPSAMPLE_STRIDES') or []
    num_upsample_filters = model_cfg.get('NUM_UPSAMPLE_FILTERS') or []
    num_levels = len(layer_nums)
    c_in_list = [input_channels, *num_filters[:-1]]

    keys = iter(jax.random.split(key, 1024))

    def nk():
        return next(keys)

    def make_basic_block(cin, cout, stride, downsample):
        p = {
            'w1': 0.1 * jax.random.normal(nk(), (9, cin, cout), jnp.float32),
            'w2': 0.1 * jax.random.normal(nk(), (9, cout, cout), jnp.float32),
            'stride': stride,
            'downsample': downsample,
        }
        p['s1'], p['b1'] = _bn_affine(nk(), cout)
        p['s2'], p['b2'] = _bn_affine(nk(), cout)
        if downsample:
            p['wd'] = 0.1 * jax.random.normal(nk(), (cin, cout), jnp.float32)
            p['sd'], p['bd'] = _bn_affine(nk(), cout)
        return p

    blocks, deblocks = [], []
    for idx in range(num_levels):
        level = [make_basic_block(c_in_list[idx], num_filters[idx], layer_strides[idx], True)]
        for _ in range(layer_nums[idx]):
            level.append(make_basic_block(num_filters[idx], num_filters[idx], 1, False))
        blocks.append(level)
        if len(upsample_strides) > 0:
            k = upsample_strides[idx]
            # TODO(synk): fractional UPSAMPLE_STRIDES (<1, strided-conv branch) not implemented.
            assert k >= 1
            d = {
                'w': 0.1 * jax.random.normal(
                    nk(), (num_filters[idx], k, k, num_upsample_filters[idx]), jnp.float32),
                'k': k,
            }
            d['s'], d['b'] = _bn_affine(nk(), num_upsample_filters[idx])
            deblocks.append(d)
    return {'blocks': blocks, 'deblocks': deblocks}


# ----------------------------------------------------------------------------
# Pure-JAX bf16-faithful reference (for numerical verification of the Pallas path)
# ----------------------------------------------------------------------------
def _ref_basic_block(x, p):
    s = p['stride']
    cin, cout = p['w1'].shape[1], p['w1'].shape[2]
    dn = ('NHWC', 'HWIO', 'NHWC')
    xb = x.astype(jnp.bfloat16)
    w1 = p['w1'].reshape(3, 3, cin, cout).astype(jnp.bfloat16)
    w2 = p['w2'].reshape(3, 3, cout, cout).astype(jnp.bfloat16)
    out = lax.conv_general_dilated(xb, w1, (s, s), [(1, 1), (1, 1)],
                                   dimension_numbers=dn,
                                   preferred_element_type=jnp.float32)
    out = jnp.maximum(out * p['s1'] + p['b1'], 0.0).astype(jnp.bfloat16)
    out = lax.conv_general_dilated(out, w2, (1, 1), [(1, 1), (1, 1)],
                                   dimension_numbers=dn,
                                   preferred_element_type=jnp.float32)
    out = out * p['s2'] + p['b2']
    if p['downsample']:
        wd = p['wd'][None, None].astype(jnp.bfloat16)
        iden = lax.conv_general_dilated(xb, wd, (s, s), [(0, 0), (0, 0)],
                                        dimension_numbers=dn,
                                        preferred_element_type=jnp.float32)
        iden = iden * p['sd'] + p['bd']
    else:
        iden = xb.astype(jnp.float32)
    return jnp.maximum(out + iden, 0.0).astype(jnp.bfloat16)


def _ref_deblock(x, d):
    N, H, W, _ = x.shape
    k = d['k']
    cout = d['w'].shape[-1]
    xb = x.astype(jnp.bfloat16)
    wb = d['w'].astype(jnp.bfloat16)
    out = jnp.zeros((N, H * k, W * k, cout), jnp.float32)
    for dy in range(k):
        for dx in range(k):
            v = jnp.einsum('nhwc,cd->nhwd', xb, wb[:, dy, dx, :],
                           preferred_element_type=jnp.float32)
            out = out.at[:, dy::k, dx::k, :].set(v)
    return jnp.maximum(out * d['s'] + d['b'], 0.0)


def ref_forward(params, x_nchw):
    x = jnp.transpose(x_nchw, (0, 2, 3, 1)).astype(jnp.bfloat16)
    ups = []
    for i, level in enumerate(params['blocks']):
        for bp in level:
            x = _ref_basic_block(x, bp)
        if len(params['deblocks']) > 0:
            ups.append(_ref_deblock(x, params['deblocks'][i]))
        else:
            ups.append(x.astype(jnp.float32))
    x = jnp.concatenate(ups, axis=-1) if len(ups) > 1 else ups[0]
    return jnp.transpose(x, (0, 3, 1, 2))


# ----------------------------------------------------------------------------
if __name__ == "__main__":
    key = jax.random.PRNGKey(0)
    kp, kx = jax.random.split(key)

    model_cfg = {
        'LAYER_NUMS': [1, 1],
        'LAYER_STRIDES': [1, 2],
        'NUM_FILTERS': [32, 64],
        'UPSAMPLE_STRIDES': [1, 2],
        'NUM_UPSAMPLE_FILTERS': [32, 32],
    }
    input_channels = 4
    params = build_backbone_params(model_cfg, input_channels, kp)

    # spatial_features is NCHW, matching the PyTorch module.
    x = jax.random.normal(kx, (2, input_channels, 16, 16), jnp.float32)
    data_dict = {'spatial_features': x}

    out_dict = backbone_forward(params, data_dict, row_tile=8)
    y = out_dict['spatial_features_2d']
    jax.block_until_ready(y)

    assert y.shape == (2, 64, 16, 16), y.shape
    y_ref = ref_forward(params, x)
    err = float(jnp.max(jnp.abs(y - y_ref)))
    assert jnp.allclose(y, y_ref, atol=5e-2, rtol=5e-2), err

    print("KERNEL_OK")
</pallas_src>

<mosaic_0001>
module attributes {stable_mosaic.version = 11 : i64} {
  func.func @_basic_block_kernel(%arg0: i32, %arg1: i32, %arg2: memref<1x12x18x128xbf16, #tpu.memory_space<vmem>>, %arg3: memref<1152x128xbf16, #tpu.memory_space<vmem>>, %arg4: memref<1152x128xbf16, #tpu.memory_space<vmem>>, %arg5: memref<128x128xbf16, #tpu.memory_space<vmem>>, %arg6: memref<6x128xf32, #tpu.memory_space<vmem>>, %arg7: memref<1x128x128xbf16, #tpu.memory_space<vmem>>, %arg8: memref<10x18x128xf32, #tpu.memory_space<vmem>>) attributes {dimension_semantics = [#tpu.dimension_semantics<parallel>, #tpu.dimension_semantics<parallel>], iteration_bounds = array<i64: 2, 2>, scalar_prefetch = 0 : i64, scratch_operands = 1 : i64, tpu.core_type = #tpu.core_type<tc>, window_params = [{transform_indices = @transform_0, window_bounds = array<i64: 1, 12, 18, 128>}, {pipeline_mode = #tpu.pipeline_mode<synchronous>, transform_indices = @transform_1, window_bounds = array<i64: 1152, 128>}, {pipeline_mode = #tpu.pipeline_mode<synchronous>, transform_indices = @transform_2, window_bounds = array<i64: 1152, 128>}, {pipeline_mode = #tpu.pipeline_mode<synchronous>, transform_indices = @transform_3, window_bounds = array<i64: 128, 128>}, {pipeline_mode = #tpu.pipeline_mode<synchronous>, transform_indices = @transform_4, window_bounds = array<i64: 6, 128>}, {transform_indices = @transform_5, window_bounds = array<i64: 1, 128, 128>}]} {
    %c0 = arith.constant 0 : index
    %c0_0 = arith.constant 0 : index
    %c0_1 = arith.constant 0 : index
    %c0_2 = arith.constant 0 : index
    %0 = vector.load %arg2[%c0, %c0_0, %c0_1, %c0_2] : memref<1x12x18x128xbf16, #tpu.memory_space<vmem>>, vector<1x10x16x128xbf16>
    %1 = vector.shape_cast %0 : vector<1x10x16x128xbf16> to vector<10x16x128xbf16>
    %2 = vector.shape_cast %1 : vector<10x16x128xbf16> to vector<160x128xbf16>
    %c0_3 = arith.constant 0 : index
    %c0_4 = arith.constant 0 : index
    %c1 = arith.constant 1 : index
    %c0_5 = arith.constant 0 : index
    %3 = vector.load %arg2[%c0_3, %c0_4, %c1, %c0_5] : memref<1x12x18x128xbf16, #tpu.memory_space<vmem>>, vector<1x10x16x128xbf16>
    %4 = vector.shape_cast %3 : vector<1x10x16x128xbf16> to vector<10x16x128xbf16>
    %5 = vector.shape_cast %4 : vector<10x16x128xbf16> to vector<160x128xbf16>
    %c0_6 = arith.constant 0 : index
    %c0_7 = arith.constant 0 : index
    %c2 = arith.constant 2 : index
    %c0_8 = arith.constant 0 : index
    %6 = vector.load %arg2[%c0_6, %c0_7, %c2, %c0_8] : memref<1x12x18x128xbf16, #tpu.memory_space<vmem>>, vector<1x10x16x128xbf16>
    %7 = vector.shape_cast %6 : vector<1x10x16x128xbf16> to vector<10x16x128xbf16>
    %8 = vector.shape_cast %7 : vector<10x16x128xbf16> to vector<160x128xbf16>
    %c0_9 = arith.constant 0 : index
    %c1_10 = arith.constant 1 : index
    %c0_11 = arith.constant 0 : index
    %c0_12 = arith.constant 0 : index
    %9 = vector.load %arg2[%c0_9, %c1_10, %c0_11, %c0_12] : memref<1x12x18x128xbf16, #tpu.memory_space<vmem>>, vector<1x10x16x128xbf16>
    %10 = vector.shape_cast %9 : vector<1x10x16x128xbf16> to vector<10x16x128xbf16>
    %11 = vector.shape_cast %10 : vector<10x16x128xbf16> to vector<160x128xbf16>
    %c0_13 = arith.constant 0 : index
    %c1_14 = arith.constant 1 : index
    %c1_15 = arith.constant 1 : index
    %c0_16 = arith.constant 0 : index
    %12 = vector.load %arg2[%c0_13, %c1_14, %c1_15, %c0_16] : memref<1x12x18x128xbf16, #tpu.memory_space<vmem>>, vector<1x10x16x128xbf16>
    %13 = vector.shape_cast %12 : vector<1x10x16x128xbf16> to vector<10x16x128xbf16>
    %14 = vector.shape_cast %13 : vector<10x16x128xbf16> to vector<160x128xbf16>
    %c0_17 = arith.constant 0 : index
    %c1_18 = arith.constant 1 : index
    %c2_19 = arith.constant 2 : index
    %c0_20 = arith.constant 0 : index
    %15 = vector.load %arg2[%c0_17, %c1_18, %c2_19, %c0_20] : memref<1x12x18x128xbf16, #tpu.memory_space<vmem>>, vector<1x10x16x128xbf16>
    %16 = vector.shape_cast %15 : vector<1x10x16x128xbf16> to vector<10x16x128xbf16>
    %17 = vector.shape_cast %16 : vector<10x16x128xbf16> to vector<160x128xbf16>
    %c0_21 = arith.constant 0 : index
    %c2_22 = arith.constant 2 : index
    %c0_23 = arith.constant 0 : index
    %c0_24 = arith.constant 0 : index
    %18 = vector.load %arg2[%c0_21, %c2_22, %c0_23, %c0_24] : memref<1x12x18x128xbf16, #tpu.memory_space<vmem>>, vector<1x10x16x128xbf16>
    %19 = vector.shape_cast %18 : vector<1x10x16x128xbf16> to vector<10x16x128xbf16>
    %20 = vector.shape_cast %19 : vector<10x16x128xbf16> to vector<160x128xbf16>
    %c0_25 = arith.constant 0 : index
    %c2_26 = arith.constant 2 : index
    %c1_27 = arith.constant 1 : index
    %c0_28 = arith.constant 0 : index
    %21 = vector.load %arg2[%c0_25, %c2_26, %c1_27, %c0_28] : memref<1x12x18x128xbf16, #tpu.memory_space<vmem>>, vector<1x10x16x128xbf16>
    %22 = vector.shape_cast %21 : vector<1x10x16x128xbf16> to vector<10x16x128xbf16>
    %23 = vector.shape_cast %22 : vector<10x16x128xbf16> to vector<160x128xbf16>
    %c0_29 = arith.constant 0 : index
    %c2_30 = arith.constant 2 : index
    %c2_31 = arith.constant 2 : index
    %c0_32 = arith.constant 0 : index
    %24 = vector.load %arg2[%c0_29, %c2_30, %c2_31, %c0_32] : memref<1x12x18x128xbf16, #tpu.memory_space<vmem>>, vector<1x10x16x128xbf16>
    %25 = vector.shape_cast %24 : vector<1x10x16x128xbf16> to vector<10x16x128xbf16>
    %26 = vector.shape_cast %25 : vector<10x16x128xbf16> to vector<160x128xbf16>
    %27 = tpu.concatenate %2, %5, %8, %11, %14, %17, %20, %23, %26 in 1 : vector<160x128xbf16>, vector<160x128xbf16>, vector<160x128xbf16>, vector<160x128xbf16>, vector<160x128xbf16>, vector<160x128xbf16>, vector<160x128xbf16>, vector<160x128xbf16>, vector<160x128xbf16> -> vector<160x1152xbf16>
    %c0_33 = arith.constant 0 : index
    %c0_34 = arith.constant 0 : index
    %28 = vector.load %arg3[%c0_33, %c0_34] : memref<1152x128xbf16, #tpu.memory_space<vmem>>, vector<1152x128xbf16>
    %cst = arith.constant dense<0.000000e+00> : vector<160x128xf32>
    %29 = tpu.matmul %27, %28, %cst {dimension_numbers = #tpu.dot_dimension_numbers<[1], [0], [0], [1], [0, 0, 1, 1], [], []>} : vector<160x1152xbf16>, vector<1152x128xbf16>, vector<160x128xf32> -> vector<160x128xf32>
    %c0_35 = arith.constant 0 : index
    %c0_36 = arith.constant 0 : index
    %30 = vector.load %arg6[%c0_35, %c0_36] : memref<6x128xf32, #tpu.memory_space<vmem>>, vector<1x128xf32>
    %31 = vector.shape_cast %30 : vector<1x128xf32> to vector<128xf32>
    %32 = vector.shape_cast %31 : vector<128xf32> to vector<1x128xf32>
    %33 = vector.broadcast %32 : vector<1x128xf32> to vector<160x128xf32>
    %34 = arith.mulf %29, %33 : vector<160x128xf32>
    %c1_37 = arith.constant 1 : index
    %c0_38 = arith.constant 0 : index
    %35 = vector.load %arg6[%c1_37, %c0_38] : memref<6x128xf32, #tpu.memory_space<vmem>>, vector<1x128xf32>
    %36 = vector.shape_cast %35 : vector<1x128xf32> to vector<128xf32>
    %37 = vector.shape_cast %36 : vector<128xf32> to vector<1x128xf32>
    %38 = vector.broadcast %37 : vector<1x128xf32> to vector<160x128xf32>
    %39 = arith.addf %34, %38 : vector<160x128xf32>
    %cst_39 = arith.constant 0.000000e+00 : f32
    %40 = vector.broadcast %cst_39 : f32 to vector<160x128xf32>
    %41 = arith.maximumf %39, %40 : vector<160x128xf32>
    %42 = vector.shape_cast %41 : vector<160x128xf32> to vector<10x16x128xf32>
    %43 = tpu.iota {dimensions = array<i32: 0>} : vector<10x16x128xi32>
    %c8_i32 = arith.constant 8 : i32
    %44 = arith.muli %arg1, %c8_i32 : i32
    %c1_i32 = arith.constant 1 : i32
    %45 = arith.subi %44, %c1_i32 : i32
    %46 = vector.broadcast %45 : i32 to vector<10x16x128xi32>
    %47 = arith.addi %43, %46 : vector<10x16x128xi32>
    %c0_i32 = arith.constant 0 : i32
    %48 = vector.broadcast %c0_i32 : i32 to vector<10x16x128xi32>
    %49 = arith.cmpi sge, %47, %48 : vector<10x16x128xi32>
    %c16_i32 = arith.constant 16 : i32
    %50 = vector.broadcast %c16_i32 : i32 to vector<10x16x128xi32>
    %51 = arith.cmpi slt, %47, %50 : vector<10x16x128xi32>
    %52 = arith.andi %49, %51 : vector<10x16x128xi1>
    %cst_40 = arith.constant 0.000000e+00 : f32
    %53 = vector.broadcast %cst_40 : f32 to vector<10x16x128xf32>
    %54 = arith.select %52, %42, %53 : vector<10x16x128xi1>, vector<10x16x128xf32>
    %cst_41 = arith.constant 0.000000e+00 : f32
    %55 = vector.broadcast %cst_41 : f32 to vector<10x18x128xf32>
    %c0_42 = arith.constant 0 : index
    %c0_43 = arith.constant 0 : index
    %c0_44 = arith.constant 0 : index
    %56 = vector.load %arg8[%c0_42, %c0_43, %c0_44] : memref<10x18x128xf32, #tpu.memory_space<vmem>>, vector<10x18x128xf32>
    tpu.vector_store %arg8[%c0_42, %c0_43, %c0_44], %55 {strides = array<i32>} : memref<10x18x128xf32, #tpu.memory_space<vmem>>, vector<10x18x128xf32>,
    %c0_45 = arith.constant 0 : index
    %c1_46 = arith.constant 1 : index
    %c0_47 = arith.constant 0 : index
    %57 = vector.load %arg8[%c0_45, %c1_46, %c0_47] : memref<10x18x128xf32, #tpu.memory_space<vmem>>, vector<10x16x128xf32>
    tpu.vector_store %arg8[%c0_45, %c1_46, %c0_47], %54 {strides = array<i32>} : memref<10x18x128xf32, #tpu.memory_space<vmem>>, vector<10x16x128xf32>,
    %c0_48 = arith.constant 0 : index
    %c0_49 = arith.constant 0 : index
    %c0_50 = arith.constant 0 : index
    %58 = vector.load %arg8[%c0_48, %c0_49, %c0_50] : memref<10x18x128xf32, #tpu.memory_space<vmem>>, vector<8x16x128xf32>
    %59 = arith.truncf %58 : vector<8x16x128xf32> to vector<8x16x128xbf16>
    %60 = vector.shape_cast %59 : vector<8x16x128xbf16> to vector<128x128xbf16>
    %c0_51 = arith.constant 0 : index
    %c1_52 = arith.constant 1 : index
    %c0_53 = arith.constant 0 : index
    %61 = vector.load %arg8[%c0_51, %c1_52, %c0_53] : memref<10x18x128xf32, #tpu.memory_space<vmem>>, vector<8x16x128xf32>
    %62 = arith.truncf %61 : vector<8x16x128xf32> to vector<8x16x128xbf16>
    %63 = vector.shape_cast %62 : vector<8x16x128xbf16> to vector<128x128xbf16>
    %c0_54 = arith.constant 0 : index
    %c2_55 = arith.constant 2 : index
    %c0_56 = arith.constant 0 : index
    %64 = vector.load %arg8[%c0_54, %c2_55, %c0_56] : memref<10x18x128xf32, #tpu.memory_space<vmem>>, vector<8x16x128xf32>
    %65 = arith.truncf %64 : vector<8x16x128xf32> to vector<8x16x128xbf16>
    %66 = vector.shape_cast %65 : vector<8x16x128xbf16> to vector<128x128xbf16>
    %c1_57 = arith.constant 1 : index
    %c0_58 = arith.constant 0 : index
    %c0_59 = arith.constant 0 : index
    %67 = vector.load %arg8[%c1_57, %c0_58, %c0_59] : memref<10x18x128xf32, #tpu.memory_space<vmem>>, vector<8x16x128xf32>
    %68 = arith.truncf %67 : vector<8x16x128xf32> to vector<8x16x128xbf16>
    %69 = vector.shape_cast %68 : vector<8x16x128xbf16> to vector<128x128xbf16>
    %c1_60 = arith.constant 1 : index
    %c1_61 = arith.constant 1 : index
    %c0_62 = arith.constant 0 : index
    %70 = vector.load %arg8[%c1_60, %c1_61, %c0_62] : memref<10x18x128xf32, #tpu.memory_space<vmem>>, vector<8x16x128xf32>
    %71 = arith.truncf %70 : vector<8x16x128xf32> to vector<8x16x128xbf16>
    %72 = vector.shape_cast %71 : vector<8x16x128xbf16> to vector<128x128xbf16>
    %c1_63 = arith.constant 1 : index
    %c2_64 = arith.constant 2 : index
    %c0_65 = arith.constant 0 : index
    %73 = vector.load %arg8[%c1_63, %c2_64, %c0_65] : memref<10x18x128xf32, #tpu.memory_space<vmem>>, vector<8x16x128xf32>
    %74 = arith.truncf %73 : vector<8x16x128xf32> to vector<8x16x128xbf16>
    %75 = vector.shape_cast %74 : vector<8x16x128xbf16> to vector<128x128xbf16>
    %c2_66 = arith.constant 2 : index
    %c0_67 = arith.constant 0 : index
    %c0_68 = arith.constant 0 : index
    %76 = vector.load %arg8[%c2_66, %c0_67, %c0_68] : memref<10x18x128xf32, #tpu.memory_space<vmem>>, vector<8x16x128xf32>
    %77 = arith.truncf %76 : vector<8x16x128xf32> to vector<8x16x128xbf16>
    %78 = vector.shape_cast %77 : vector<8x16x128xbf16> to vector<128x128xbf16>
    %c2_69 = arith.constant 2 : index
    %c1_70 = arith.constant 1 : index
    %c0_71 = arith.constant 0 : index
    %79 = vector.load %arg8[%c2_69, %c1_70, %c0_71] : memref<10x18x128xf32, #tpu.memory_space<vmem>>, vector<8x16x128xf32>
    %80 = arith.truncf %79 : vector<8x16x128xf32> to vector<8x16x128xbf16>
    %81 = vector.shape_cast %80 : vector<8x16x128xbf16> to vector<128x128xbf16>
    %c2_72 = arith.constant 2 : index
    %c2_73 = arith.constant 2 : index
    %c0_74 = arith.constant 0 : index
    %82 = vector.load %arg8[%c2_72, %c2_73, %c0_74] : memref<10x18x128xf32, #tpu.memory_space<vmem>>, vector<8x16x128xf32>
    %83 = arith.truncf %82 : vector<8x16x128xf32> to vector<8x16x128xbf16>
    %84 = vector.shape_cast %83 : vector<8x16x128xbf16> to vector<128x128xbf16>
    %85 = tpu.concatenate %60, %63, %66, %69, %72, %75, %78, %81, %84 in 1 : vector<128x128xbf16>, vector<128x128xbf16>, vector<128x128xbf16>, vector<128x128xbf16>, vector<128x128xbf16>, vector<128x128xbf16>, vector<128x128xbf16>, vector<128x128xbf16>, vector<128x128xbf16> -> vector<128x1152xbf16>
    %c0_75 = arith.constant 0 : index
    %c0_76 = arith.constant 0 : index
    %86 = vector.load %arg4[%c0_75, %c0_76] : memref<1152x128xbf16, #tpu.memory_space<vmem>>, vector<1152x128xbf16>
    %cst_77 = arith.constant dense<0.000000e+00> : vector<128x128xf32>
    %87 = tpu.matmul %85, %86, %cst_77 {dimension_numbers = #tpu.dot_dimension_numbers<[1], [0], [0], [1], [0, 0, 1, 1], [], []>} : vector<128x1152xbf16>, vector<1152x128xbf16>, vector<128x128xf32> -> vector<128x128xf32>
    %c2_78 = arith.constant 2 : index
    %c0_79 = arith.constant 0 : index
    %88 = vector.load %arg6[%c2_78, %c0_79] : memref<6x128xf32, #tpu.memory_space<vmem>>, vector<1x128xf32>
    %89 = vector.shape_cast %88 : vector<1x128xf32> to vector<128xf32>
    %90 = vector.shape_cast %89 : vector<128xf32> to vector<1x128xf32>
    %91 = vector.broadcast %90 : vector<1x128xf32> to vector<128x128xf32>
    %92 = arith.mulf %87, %91 : vector<128x128xf32>
    %c3 = arith.constant 3 : index
    %c0_80 = arith.constant 0 : index
    %93 = vector.load %arg6[%c3, %c0_80] : memref<6x128xf32, #tpu.memory_space<vmem>>, vector<1x128xf32>
    %94 = vector.shape_cast %93 : vector<1x128xf32> to vector<128xf32>
    %95 = vector.shape_cast %94 : vector<128xf32> to vector<1x128xf32>
    %96 = vector.broadcast %95 : vector<1x128xf32> to vector<128x128xf32>
    %97 = arith.addf %92, %96 : vector<128x128xf32>
    %c0_81 = arith.constant 0 : index
    %c2_82 = arith.constant 2 : index
    %c1_83 = arith.constant 1 : index
    %c0_84 = arith.constant 0 : index
    %98 = vector.load %arg2[%c0_81, %c2_82, %c1_83, %c0_84] : memref<1x12x18x128xbf16, #tpu.memory_space<vmem>>, vector<1x8x16x128xbf16>
    %99 = vector.shape_cast %98 : vector<1x8x16x128xbf16> to vector<8x16x128xbf16>
    %100 = vector.shape_cast %99 : vector<8x16x128xbf16> to vector<128x128xbf16>
    %c0_85 = arith.constant 0 : index
    %c0_86 = arith.constant 0 : index
    %101 = vector.load %arg5[%c0_85, %c0_86] : memref<128x128xbf16, #tpu.memory_space<vmem>>, vector<128x128xbf16>
    %cst_87 = arith.constant dense<0.000000e+00> : vector<128x128xf32>
    %102 = tpu.matmul %100, %101, %cst_87 {dimension_numbers = #tpu.dot_dimension_numbers<[1], [0], [0], [1], [0, 0, 1, 1], [], []>} : vector<128x128xbf16>, vector<128x128xbf16>, vector<128x128xf32> -> vector<128x128xf32>
    %c4 = arith.constant 4 : index
    %c0_88 = arith.constant 0 : index
    %103 = vector.load %arg6[%c4, %c0_88] : memref<6x128xf32, #tpu.memory_space<vmem>>, vector<1x128xf32>
    %104 = vector.shape_cast %103 : vector<1x128xf32> to vector<128xf32>
    %105 = vector.shape_cast %104 : vector<128xf32> to vector<1x128xf32>
    %106 = vector.broadcast %105 : vector<1x128xf32> to vector<128x128xf32>
    %107 = arith.mulf %102, %106 : vector<128x128xf32>
    %c5 = arith.constant 5 : index
    %c0_89 = arith.constant 0 : index
    %108 = vector.load %arg6[%c5, %c0_89] : memref<6x128xf32, #tpu.memory_space<vmem>>, vector<1x128xf32>
    %109 = vector.shape_cast %108 : vector<1x128xf32> to vector<128xf32>
    %110 = vector.shape_cast %109 : vector<128xf32> to vector<1x128xf32>
    %111 = vector.broadcast %110 : vector<1x128xf32> to vector<128x128xf32>
    %112 = arith.addf %107, %111 : vector<128x128xf32>
    %113 = arith.addf %97, %112 : vector<128x128xf32>
    %cst_90 = arith.constant 0.000000e+00 : f32
    %114 = vector.broadcast %cst_90 : f32 to vector<128x128xf32>
    %115 = arith.maximumf %113, %114 : vector<128x128xf32>
    %116 = arith.truncf %115 : vector<128x128xf32> to vector<128x128xbf16>
    %c0_91 = arith.constant 0 : index
    %c0_92 = arith.constant 0 : index
    %c0_93 = arith.constant 0 : index
    %117 = vector.load %arg7[%c0_91, %c0_92, %c0_93] : memref<1x128x128xbf16, #tpu.memory_space<vmem>>, vector<1x128x128xbf16>
    %118 = vector.shape_cast %117 : vector<1x128x128xbf16> to vector<128x128xbf16>
    %119 = vector.shape_cast %116 : vector<128x128xbf16> to vector<1x128x128xbf16>
    tpu.vector_store %arg7[%c0_91, %c0_92, %c0_93], %119 {strides = array<i32>} : memref<1x128x128xbf16, #tpu.memory_space<vmem>>, vector<1x128x128xbf16>,
    return
  }
  func.func @transform_0(%arg0: i32, %arg1: i32) -> (i32, i32, i32, i32) {
    %c2_i32 = arith.constant 2 : i32
    %0 = arith.muli %arg0, %c2_i32 : i32
    %1 = arith.addi %0, %arg1 : i32
    %c0_i32 = arith.constant 0 : i32
    %c0_i32_0 = arith.constant 0 : i32
    %c0_i32_1 = arith.constant 0 : i32
    %c0_i32_2 = arith.constant 0 : i32
    return %1, %c0_i32, %c0_i32_0, %c0_i32_1 : i32, i32, i32, i32
  }
  func.func @transform_1(%arg0: i32, %arg1: i32) -> (i32, i32) {
    %c0_i32 = arith.constant 0 : i32
    %c0_i32_0 = arith.constant 0 : i32
    %c0_i32_1 = arith.constant 0 : i32
    return %c0_i32, %c0_i32_0 : i32, i32
  }
  func.func @transform_2(%arg0: i32, %arg1: i32) -> (i32, i32) {
    %c0_i32 = arith.constant 0 : i32
    %c0_i32_0 = arith.constant 0 : i32
    %c0_i32_1 = arith.constant 0 : i32
    return %c0_i32, %c0_i32_0 : i32, i32
  }
  func.func @transform_3(%arg0: i32, %arg1: i32) -> (i32, i32) {
    %c0_i32 = arith.constant 0 : i32
    %c0_i32_0 = arith.constant 0 : i32
    %c0_i32_1 = arith.constant 0 : i32
    return %c0_i32, %c0_i32_0 : i32, i32
  }
  func.func @transform_4(%arg0: i32, %arg1: i32) -> (i32, i32) {
    %c0_i32 = arith.constant 0 : i32
    %c0_i32_0 = arith.constant 0 : i32
    %c0_i32_1 = arith.constant 0 : i32
    return %c0_i32, %c0_i32_0 : i32, i32
  }
  func.func @transform_5(%arg0: i32, %arg1: i32) -> (i32, i32, i32) {
    %c0_i32 = arith.constant 0 : i32
    %c0_i32_0 = arith.constant 0 : i32
    return %arg0, %arg1, %c0_i32 : i32, i32, i32
  }
}

</mosaic_0001>

<llo_original>
// kernel: tpu_custom_call.1
$region0: #{tpu_custom_call.1}
  #allocation0 [shape = 'u32[]', space=smem, size = 0x4, offset = 0x4, fixed_abs, tag = 'smem constant byte address 0x4 - core index']
  #allocation1 [shape = 'u32[72,128]{1,0:T(1,128)}', space=vmem, size = 0x9000, scoped, tag = 'internal scratch']
  #allocation2 [shape = 'f32[10,18,128]{2,1,0:T(8,128)}', space=vmem, size = 0x1e000, scoped, tag = 'scratch operand']
  %s0 = inlined_call_operand.vmem [shape: bf16[4,12,18,128], index: 0, kind: input, shape index: {}]
  %s1 = inlined_call_operand.vmem [shape: bf16[1152,128], index: 1, kind: input, shape index: {}]
  %s2 = inlined_call_operand.hbm [shape: bf16[1152,128], index: 2, kind: input, shape index: {}]
  %s3 = inlined_call_operand.vmem [shape: bf16[128,128], index: 3, kind: input, shape index: {}]
  %s4 = inlined_call_operand.vmem [shape: f32[6,128], index: 4, kind: input, shape index: {}]
  %s5 = inlined_call_operand.hbm [shape: bf16[2,256,128], index: 5, kind: output, shape index: {}]
  %s6 = sld [smem:[#allocation0]]
  $region57: #{tpu_custom_call.1} parent=0
    _
  %s8 = ssub.s32 1, %s6
  %s9 = scalar_select 0, %s8, %s6
  $region1: #{tpu_custom_call.1} parent=0
    #allocation3 [shape = 'u8[294912]{0}', space=vmem, size = 0x48000, scoped, tag = 'input window, operand 2, single buffered']
    #allocation4 [shape = 's32[2]{0}', space=sflag, size = 0x8, scoped, tag = 'scoped memory for tpu_custom_call.1']
    #allocation5 [shape = 's32[2]{0}', space=sflag, size = 0x8, scoped, tag = 'scoped memory for tpu_custom_call.1']
    #allocation6 [shape = 'u8[65536]{0}', space=vmem, size = 0x10000, scoped, tag = 'output window, operand 0']
    %10 = vsyncpa [#allocation4], 0
    %11 = vsyncpa [#allocation5], 0
    %s12 = scalar_lea.sflag [#allocation5], 1
    %13 = vsyncpa %s12, 0
    loop: start=0, step=1, limit=6
    $region2: #{tpu_custom_call.1} parent=1 // loop_pre_header
      _
    $region3: #{tpu_custom_call.1} parent=1 // loop_header
      %s15 = sphi 0, %s19
      %p16 = scmp.ge.s32.totalorder %s15, 6
      %s22 = sphi 0, %s34
      %s23 = sphi 0, %s30
      %s24 = sphi 0, %s22
      %s25 = sphi 0, %s23
      %s26 = sphi 0, %s24
      %s27 = sphi 0, %s25
      %s41 = sphi 0, %s43
      %s44 = sphi 0, %s41
      %s45 = sphi 0, %s44
      %s61 = sphi 0, %s45
      %s65 = sphi 0, %s65
      %s67 = sphi 0, %s65
      %s68 = sphi 0, %s67
      %s82 = sphi 0, %s68
      %s86 = sphi 0, %s86
      %s88 = sphi 0, %s86
      %s89 = sphi 0, %s88
      %s103 = sphi 0, %s89
      %s107 = sphi 0, %s107
      %s109 = sphi 0, %s107
      %s110 = sphi 0, %s109
      %s124 = sphi 0, %s110
      %s128 = sphi 0, %s128
      %s130 = sphi 0, %s128
      %s131 = sphi 0, %s130
      %s145 = sphi 0, %s131
      %s153 = sphi 0, %s155
      %s156 = sphi 0, %s153
      %s157 = sphi 0, %s156
      %s173 = sphi 0, %s157
    $region4: #{tpu_custom_call.1} parent=1 // loop_header_branch
      %18 = sbr.rel (%p16) target = $region8
    $region5: #{tpu_custom_call.1} parent=1 // loop_body
      %s20 = ssub.s32 %s15, 1
      %s21 = ssub.s32 %s15, 2
      %s28 = sadd.s32 1, %s23
      %p29 = scmp.ge.s32.totalorder %s28, 2
      %s30 = scalar_select %p29, 0, %s28
      %s31 = sadd.s32 1, %s22
      %s32 = scalar_select %p29, %s31, %s22
      %p33 = scmp.ge.s32.totalorder %s32, 2
      %s34 = scalar_select %p33, 0, %s32
      %s35 = smul.u32 %s22, 2
      %s36 = sadd.s32 %s35, %s23
      %s37 = smul.u32 %s34, 2
      %s38 = sadd.s32 %s37, %s30
      %s39 = ssub.s32 %s36, %s38
      %p40 = scmp.eq.s32.totalorder %s39, 0
      %s42 = sadd.s32 %s41, 1
      %s43 = scalar_select %p40, %s41, %s42
      %p46 = pneg %p40
      %p47 = scmp.eq.s32.totalorder %s15, 3
      %p48 = por %p46, %p47
      %p49 = scmp.ne.s32.totalorder %s41, %s44
      %p50 = scmp.eq.s32.totalorder %s15, 0
      %p51 = por %p49, %p50
      %p52 = scmp.ne.s32.totalorder %s41, %s44
      %p53 = scmp.eq.s32.totalorder %s20, 3
      %p54 = por %p52, %p53
      %p55 = scmp.ne.s32.totalorder %s44, %s45
      %p56 = scmp.eq.s32.totalorder %s20, 0
      %p57 = por %p55, %p56
      %p58 = scmp.ne.s32.totalorder %s44, %s45
      %p59 = scmp.eq.s32.totalorder %s21, 3
      %p60 = por %p58, %p59
      %p62 = scmp.ne.s32.totalorder %s45, %s61
      %p63 = scmp.eq.s32.totalorder %s21, 0
      %p64 = por %p62, %p63
      %s66 = sadd.s32 %s65, 1
      %p69 = scmp.eq.s32.totalorder %s15, 3
      %p70 = scmp.ne.s32.totalorder %s65, %s67
      %p71 = scmp.eq.s32.totalorder %s15, 0
      %p72 = por %p70, %p71
      %p73 = scmp.ne.s32.totalorder %s65, %s67
      %p74 = scmp.eq.s32.totalorder %s20, 3
      %p75 = por %p73, %p74
      %p76 = scmp.ne.s32.totalorder %s67, %s68
      %p77 = scmp.eq.s32.totalorder %s20, 0
      %p78 = por %p76, %p77
      %p79 = scmp.ne.s32.totalorder %s67, %s68
      %p80 = scmp.eq.s32.totalorder %s21, 3
      %p81 = por %p79, %p80
      %p83 = scmp.ne.s32.totalorder %s68, %s82
      %p84 = scmp.eq.s32.totalorder %s21, 0
      %p85 = por %p83, %p84
      %s87 = sadd.s32 %s86, 1
      %p90 = scmp.eq.s32.totalorder %s15, 3
      %p91 = scmp.ne.s32.totalorder %s86, %s88
      %p92 = scmp.eq.s32.totalorder %s15, 0
      %p93 = por %p91, %p92
      %p94 = scmp.ne.s32.totalorder %s86, %s88
      %p95 = scmp.eq.s32.totalorder %s20, 3
      %p96 = por %p94, %p95
      %p97 = scmp.ne.s32.totalorder %s88, %s89
      %p98 = scmp.eq.s32.totalorder %s20, 0
      %p99 = por %p97, %p98
      %p100 = scmp.ne.s32.totalorder %s88, %s89
      %p101 = scmp.eq.s32.totalorder %s21, 3
      %p102 = por %p100, %p101
      %p104 = scmp.ne.s32.totalorder %s89, %s103
      %p105 = scmp.eq.s32.totalorder %s21, 0
      %p106 = por %p104, %p105
      %s108 = sadd.s32 %s107, 1
      %p111 = scmp.eq.s32.totalorder %s15, 3
      %p112 = scmp.ne.s32.totalorder %s107, %s109
      %p113 = scmp.eq.s32.totalorder %s15, 0
      %p114 = por %p112, %p113
      %p115 = scmp.ne.s32.totalorder %s107, %s109
      %p116 = scmp.eq.s32.totalorder %s20, 3
      %p117 = por %p115, %p116
      %p118 = scmp.ne.s32.totalorder %s109, %s110
      %p119 = scmp.eq.s32.totalorder %s20, 0
      %p120 = por %p118, %p119
      %p121 = scmp.ne.s32.totalorder %s109, %s110
      %p122 = scmp.eq.s32.totalorder %s21, 3
      %p123 = por %p121, %p122
      %p125 = scmp.ne.s32.totalorder %s110, %s124
      %p126 = scmp.eq.s32.totalorder %s21, 0
      %p127 = por %p125, %p126
      %s129 = sadd.s32 %s128, 1
      %p132 = scmp.eq.s32.totalorder %s15, 3
      %p133 = scmp.ne.s32.totalorder %s128, %s130
      %p134 = scmp.eq.s32.totalorder %s15, 0
      %p135 = por %p133, %p134
      %p136 = scmp.ne.s32.totalorder %s128, %s130
      %p137 = scmp.eq.s32.totalorder %s20, 3
      %p138 = por %p136, %p137
      %p139 = scmp.ne.s32.totalorder %s130, %s131
      %p140 = scmp.eq.s32.totalorder %s20, 0
      %p141 = por %p139, %p140
      %p142 = scmp.ne.s32.totalorder %s130, %s131
      %p143 = scmp.eq.s32.totalorder %s21, 3
      %p144 = por %p142, %p143
      %p146 = scmp.ne.s32.totalorder %s131, %s145
      %p147 = scmp.eq.s32.totalorder %s21, 0
      %p148 = por %p146, %p147
      %s149 = ssub.s32 %s22, %s34
      %s150 = ssub.s32 %s23, %s30
      %s151 = sor.u32 %s149, %s150
      %p152 = scmp.eq.s32.totalorder %s151, 0
      %s154 = sadd.s32 %s153, 1
      %s155 = scalar_select %p152, %s153, %s154
      %p158 = pneg %p152
      %p159 = scmp.eq.s32.totalorder %s15, 3
      %p160 = por %p158, %p159
      %p161 = scmp.ne.s32.totalorder %s153, %s156
      %p162 = scmp.eq.s32.totalorder %s15, 0
      %p163 = por %p161, %p162
      %p164 = scmp.ne.s32.totalorder %s153, %s156
      %p165 = scmp.eq.s32.totalorder %s20, 3
      %p166 = por %p164, %p165
      %p167 = scmp.ne.s32.totalorder %s156, %s157
      %p168 = scmp.eq.s32.totalorder %s20, 0
      %p169 = por %p167, %p168
      %p170 = scmp.ne.s32.totalorder %s156, %s157
      %p171 = scmp.eq.s32.totalorder %s21, 3
      %p172 = por %p170, %p171
      %p174 = scmp.ne.s32.totalorder %s157, %s173
      %p175 = scmp.eq.s32.totalorder %s21, 0
      %p176 = por %p174, %p175
      %p177 = scmp.le.s32.totalorder 1, %s15
      %p178 = scmp.lt.s32.totalorder %s15, 5
      %p179 = pnand %p177, %p178
      %p180 = pneg %p179
      // Predicated region
      $region9: #{tpu_custom_call.1} parent=5 // pred_check
        _
      $region10: #{tpu_custom_call.1} parent=5 // pred_check_branch
        %182 = sbr.rel (%p179) target = $region12
      $region11: #{tpu_custom_call.1} parent=5 // pred_region
        %s183 = ssub.s32 %s15, 1
        // Predicated region
        $region13: #{tpu_custom_call.1} parent=11 // pred_check
          %p184 = pneg %p78
        $region14: #{tpu_custom_call.1} parent=11 // pred_check_branch
          %186 = sbr.rel (%p184) target = $region16
        $region15: #{tpu_custom_call.1} parent=11 // pred_region
          _
        $region16: #{tpu_custom_call.1} parent=11 // pred_fallthru
          _
        // Predicated region
        $region17: #{tpu_custom_call.1} parent=11 // pred_check
          %p187 = pneg %p99
        $region18: #{tpu_custom_call.1} parent=11 // pred_check_branch
          %189 = sbr.rel (%p187) target = $region20
        $region19: #{tpu_custom_call.1} parent=11 // pred_region
          %191 = vsyncadd [#allocation4], 0
          %s192 = sshll.u32 %s2, 4
          %s193 = int_to_ptr.hbm [resolvable:$true] %s192
          %s194 = sshll.u32 [#allocation3], 4
          %s195 = int_to_ptr.vmem [resolvable:$true] %s194
          %200 = dma.hbm_to_vmem [thread:$0]  %s193, 9216, %s195, [#allocation4], 64, 64, 4
        $region20: #{tpu_custom_call.1} parent=11 // pred_fallthru
          _
        // Predicated region
        $region21: #{tpu_custom_call.1} parent=11 // pred_check
          %p201 = pneg %p120
        $region22: #{tpu_custom_call.1} parent=11 // pred_check_branch
          %203 = sbr.rel (%p201) target = $region24
        $region23: #{tpu_custom_call.1} parent=11 // pred_region
          _
        $region24: #{tpu_custom_call.1} parent=11 // pred_fallthru
          _
        // Predicated region
        $region25: #{tpu_custom_call.1} parent=11 // pred_check
          %p204 = pneg %p141
        $region26: #{tpu_custom_call.1} parent=11 // pred_check_branch
          %206 = sbr.rel (%p204) target = $region28
        $region27: #{tpu_custom_call.1} parent=11 // pred_region
          _
        $region28: #{tpu_custom_call.1} parent=11 // pred_fallthru
          _
      $region12: #{tpu_custom_call.1} parent=5 // pred_fallthru
        _
      %p207 = scmp.lt.s32.totalorder %s15, 4
      // Predicated region
      $region29: #{tpu_custom_call.1} parent=5 // pred_check
        %p208 = pneg %p207
      $region30: #{tpu_custom_call.1} parent=5 // pred_check_branch
        %210 = sbr.rel (%p208) target = $region32
      $region31: #{tpu_custom_call.1} parent=5 // pred_region
        // Predicated region
        $region33: #{tpu_custom_call.1} parent=31 // pred_check
          %p211 = pneg %p51
        $region34: #{tpu_custom_call.1} parent=31 // pred_check_branch
          %213 = sbr.rel (%p211) target = $region36
        $region35: #{tpu_custom_call.1} parent=31 // pred_region
          %s214 = smul.u32 %s22, 2
          %s215 = sadd.s32 %s214, %s23
          %p216 = scmp.lt.s32.totalorder %s215, 3
          %s217 = scalar_select %p216, %s215, 3
          %s218 = smul.addr %s217, 36
          %s219 = smul.addr %s218, 4
          %s220 = scalar_lea.vmem %s0, %s219
          %s221 = smul.u32 %s22, 2
          %s222 = sadd.s32 %s221, %s23
        $region36: #{tpu_custom_call.1} parent=31 // pred_fallthru
          _
      $region32: #{tpu_custom_call.1} parent=5 // pred_fallthru
        _
      %p223 = scmp.le.s32.totalorder 1, %s15
      %p224 = scmp.lt.s32.totalorder %s15, 5
      %p225 = pnand %p223, %p224
      %p226 = pneg %p225
      // Predicated region
      $region37: #{tpu_custom_call.1} parent=5 // pred_check
        _
      $region38: #{tpu_custom_call.1} parent=5 // pred_check_branch
        %228 = sbr.rel (%p225) target = $region40
      $region39: #{tpu_custom_call.1} parent=5 // pred_region
        %s229 = ssub.s32 %s15, 1
        // Predicated region
        $region41: #{tpu_custom_call.1} parent=39 // pred_check
          %p230 = pneg %p99
        $region42: #{tpu_custom_call.1} parent=39 // pred_check_branch
          %232 = sbr.rel (%p230) target = $region44
        $region43: #{tpu_custom_call.1} parent=39 // pred_region
          %234 = dma.done [#allocation4], 9216
        $region44: #{tpu_custom_call.1} parent=39 // pred_fallthru
          _
        %s235 = smul.u32 %s24, 2
        %s236 = sadd.s32 %s235, %s25
        %p237 = scmp.lt.s32.totalorder %s236, 3
        %s238 = scalar_select %p237, %s236, 3
        %s239 = smul.addr %s238, 36
        %s240 = smul.addr %s239, 4
        %s241 = scalar_lea.vmem %s0, %s240
        %p242 = pneg %p57
        %p243 = pneg %p54
        %p244 = pneg %p78
        %p245 = pneg %p75
        %p246 = pneg %p99
        %p247 = pneg %p96
        %p248 = pneg %p120
        %p249 = pneg %p117
        %p250 = pneg %p141
        %p251 = pneg %p138
        %p252 = pneg %p169
        %p253 = pneg %p166
        %s254 = sand.u32 %s156, 1
        %s255 = scalar_lea.sflag [#allocation5], %s254
        %s256 = sand.u32 %s156, 1
        %s257 = smul.addr %s256, 64
        %s258 = scalar_lea.vmem [#allocation6], %s257
        %s259 = smul.u32 %s24, 2
        %s260 = sadd.s32 %s259, %s25
        %p261 = scmp.lt.s32.totalorder %s260, 3
        %s262 = scalar_select %p261, %s260, 3
        %s263 = smul.addr %s262, 36
        %s264 = smul.addr %s263, 4
        %s265 = scalar_lea.vmem %s0, %s264
        %s266 = smul.u32 %s24, 2
        %s267 = sadd.s32 %s266, %s25
        %s268 = smul.u32 16, %s25
        %v269 = vld [vmem:[%s265] sm:$0xf]
        %v270 = vld [vmem:[%s265 + $0x4] sm:$0xf]
        %v271 = vld [vmem:[%s265 + $0xc] sm:$0xf]
        %v272 = vld [vmem:[%s265 + $0x10] sm:$0xf]
        %v273 = vld [vmem:[%s265 + $0x18] sm:$0xf]
        %v274 = vld [vmem:[%s265 + $0x1c] sm:$0xf]
        %v275 = vld [vmem:[%s265 + $0x24] sm:$0xf]
        %v276 = vld [vmem:[%s265 + $0x28] sm:$0xf]
        %v277 = vld [vmem:[%s265 + $0x30] sm:$0xf]
        %v278 = vld [vmem:[%s265 + $0x34] sm:$0xf]
        %v279 = vld [vmem:[%s265 + $0x3c] sm:$0xf]
        %v280 = vld [vmem:[%s265 + $0x40] sm:$0xf]
        %v281 = vld [vmem:[%s265 + $0x48] sm:$0xf]
        %v282 = vld [vmem:[%s265 + $0x4c] sm:$0xf]
        %v283 = vld [vmem:[%s265 + $0x54] sm:$0xf]
        %v284 = vld [vmem:[%s265 + $0x58] sm:$0xf]
        %v285 = vld [vmem:[%s265 + $0x60] sm:$0xf]
        %v286 = vld [vmem:[%s265 + $0x64] sm:$0xf]
        %v287 = vld [vmem:[%s265 + $0x6c] sm:$0xf]
        %v288 = vld [vmem:[%s265 + $0x70] sm:$0xf]
        %v289 = vld [vmem:[%s265 + $0x8] sm:$0x1]
        %v290 = vld [vmem:[%s265 + $0x14] sm:$0x1]
        %v291 = vld [vmem:[%s265 + $0x20] sm:$0x1]
        %v292 = vld [vmem:[%s265 + $0x2c] sm:$0x1]
        %v293 = vld [vmem:[%s265 + $0x38] sm:$0x1]
        %v294 = vld [vmem:[%s265 + $0x44] sm:$0x1]
        %v295 = vld [vmem:[%s265 + $0x50] sm:$0x1]
        %v296 = vld [vmem:[%s265 + $0x5c] sm:$0x1]
        %v297 = vld [vmem:[%s265 + $0x68] sm:$0x1]
        %v298 = vld [vmem:[%s265 + $0x74] sm:$0x1]
        %vm299 = vsmask.f32 3328
        %vm300 = vsmask.f32 7440
        %vm301 = vmor %vm299, %vm300
        %v303 = vshrl.u32 %v269, 16
        %v305 = vrot.slane %v303, 4
        %v306 = vshll.u32 %v269, 16
        %v308 = vrot.slane %v306, 5
        %v309 = vor.u32 %v305, %v308
        %v310 = vrot.slane %v309, 4
        %v312 = vshll.u32 %v270, 16
        %v314 = vrot.slane %v312, 5
        %v315 = vsel %vm301, %v310, %v314
        %v316 = vshrl.u32 %v270, 16
        %v318 = vrot.slane %v316, 4
        %v319 = vor.u32 %v318, %v314
        %v320 = vrot.slane %v319, 4
        %v322 = vshll.u32 %v289, 16
        %v324 = vrot.slane %v322, 5
        %v325 = vsel %vm301, %v320, %v324
        %v327 = vshrl.u32 %v271, 16
        %v329 = vrot.slane %v327, 4
        %v330 = vshll.u32 %v271, 16
        %v332 = vrot.slane %v330, 5
        %v333 = vor.u32 %v329, %v332
        %v334 = vrot.slane %v333, 4
        %v336 = vshll.u32 %v272, 16
        %v338 = vrot.slane %v336, 5
        %v339 = vsel %vm301, %v334, %v338
        %v340 = vshrl.u32 %v272, 16
        %v342 = vrot.slane %v340, 4
        %v343 = vor.u32 %v342, %v338
        %v344 = vrot.slane %v343, 4
        %v346 = vshll.u32 %v290, 16
        %v348 = vrot.slane %v346, 5
        %v349 = vsel %vm301, %v344, %v348
        %v351 = vshrl.u32 %v273, 16
        %v353 = vrot.slane %v351, 4
        %v354 = vshll.u32 %v273, 16
        %v356 = vrot.slane %v354, 5
        %v357 = vor.u32 %v353, %v356
        %v358 = vrot.slane %v357, 4
        %v360 = vshll.u32 %v274, 16
        %v362 = vrot.slane %v360, 5
        %v363 = vsel %vm301, %v358, %v362
        %v364 = vshrl.u32 %v274, 16
        %v366 = vrot.slane %v364, 4
        %v367 = vor.u32 %v366, %v362
        %v368 = vrot.slane %v367, 4
        %v370 = vshll.u32 %v291, 16
        %v372 = vrot.slane %v370, 5
        %v373 = vsel %vm301, %v368, %v372
        %v375 = vshrl.u32 %v275, 16
        %v377 = vrot.slane %v375, 4
        %v378 = vshll.u32 %v275, 16
        %v380 = vrot.slane %v378, 5
        %v381 = vor.u32 %v377, %v380
        %v382 = vrot.slane %v381, 4
        %v384 = vshll.u32 %v276, 16
        %v386 = vrot.slane %v384, 5
        %v387 = vsel %vm301, %v382, %v386
        %v388 = vshrl.u32 %v276, 16
        %v390 = vrot.slane %v388, 4
        %v391 = vor.u32 %v390, %v386
        %v392 = vrot.slane %v391, 4
        %v394 = vshll.u32 %v292, 16
        %v396 = vrot.slane %v394, 5
        %v397 = vsel %vm301, %v392, %v396
        %v399 = vshrl.u32 %v277, 16
        %v401 = vrot.slane %v399, 4
        %v402 = vshll.u32 %v277, 16
        %v404 = vrot.slane %v402, 5
        %v405 = vor.u32 %v401, %v404
        %v406 = vrot.slane %v405, 4
        %v408 = vshll.u32 %v278, 16
        %v410 = vrot.slane %v408, 5
        %v411 = vsel %vm301, %v406, %v410
        %v412 = vshrl.u32 %v278, 16
        %v414 = vrot.slane %v412, 4
        %v415 = vor.u32 %v414, %v410
        %v416 = vrot.slane %v415, 4
        %v418 = vshll.u32 %v293, 16
        %v420 = vrot.slane %v418, 5
        %v421 = vsel %vm301, %v416, %v420
        %v423 = vshrl.u32 %v279, 16
        %v425 = vrot.slane %v423, 4
        %v426 = vshll.u32 %v279, 16
        %v428 = vrot.slane %v426, 5
        %v429 = vor.u32 %v425, %v428
        %v430 = vrot.slane %v429, 4
        %v432 = vshll.u32 %v280, 16
        %v434 = vrot.slane %v432, 5
        %v435 = vsel %vm301, %v430, %v434
        %v436 = vshrl.u32 %v280, 16
        %v438 = vrot.slane %v436, 4
        %v439 = vor.u32 %v438, %v434
        %v440 = vrot.slane %v439, 4
        %v442 = vshll.u32 %v294, 16
        %v444 = vrot.slane %v442, 5
        %v445 = vsel %vm301, %v440, %v444
        %v447 = vshrl.u32 %v281, 16
        %v449 = vrot.slane %v447, 4
        %v450 = vshll.u32 %v281, 16
        %v452 = vrot.slane %v450, 5
        %v453 = vor.u32 %v449, %v452
        %v454 = vrot.slane %v453, 4
        %v456 = vshll.u32 %v282, 16
        %v458 = vrot.slane %v456, 5
        %v459 = vsel %vm301, %v454, %v458
        %v460 = vshrl.u32 %v282, 16
        %v462 = vrot.slane %v460, 4
        %v463 = vor.u32 %v462, %v458
        %v464 = vrot.slane %v463, 4
        %v466 = vshll.u32 %v295, 16
        %v468 = vrot.slane %v466, 5
        %v469 = vsel %vm301, %v464, %v468
        %v471 = vshrl.u32 %v283, 16
        %v473 = vrot.slane %v471, 4
        %v474 = vshll.u32 %v283, 16
        %v476 = vrot.slane %v474, 5
        %v477 = vor.u32 %v473, %v476
        %v478 = vrot.slane %v477, 4
        %v480 = vshll.u32 %v284, 16
        %v482 = vrot.slane %v480, 5
        %v483 = vsel %vm301, %v478, %v482
        %v484 = vshrl.u32 %v284, 16
        %v486 = vrot.slane %v484, 4
        %v487 = vor.u32 %v486, %v482
        %v488 = vrot.slane %v487, 4
        %v490 = vshll.u32 %v296, 16
        %v492 = vrot.slane %v490, 5
        %v493 = vsel %vm301, %v488, %v492
        %v495 = vshrl.u32 %v285, 16
        %v497 = vrot.slane %v495, 4
        %v498 = vshll.u32 %v285, 16
        %v500 = vrot.slane %v498, 5
        %v501 = vor.u32 %v497, %v500
        %v502 = vrot.slane %v501, 4
        %v504 = vshll.u32 %v286, 16
        %v506 = vrot.slane %v504, 5
        %v507 = vsel %vm301, %v502, %v506
        %v508 = vshrl.u32 %v286, 16
        %v510 = vrot.slane %v508, 4
        %v511 = vor.u32 %v510, %v506
        %v512 = vrot.slane %v511, 4
        %v514 = vshll.u32 %v297, 16
        %v516 = vrot.slane %v514, 5
        %v517 = vsel %vm301, %v512, %v516
        %v519 = vshrl.u32 %v287, 16
        %v521 = vrot.slane %v519, 4
        %v522 = vshll.u32 %v287, 16
        %v524 = vrot.slane %v522, 5
        %v525 = vor.u32 %v521, %v524
        %v526 = vrot.slane %v525, 4
        %v528 = vshll.u32 %v288, 16
        %v530 = vrot.slane %v528, 5
        %v531 = vsel %vm301, %v526, %v530
        %v532 = vshrl.u32 %v288, 16
        %v534 = vrot.slane %v532, 4
        %v535 = vor.u32 %v534, %v530
        %v536 = vrot.slane %v535, 4
        %v538 = vshll.u32 %v298, 16
        %v540 = vrot.slane %v538, 5
        %v541 = vsel %vm301, %v536, %v540
        %v542 = vld [vmem:[%s265] sm:$0xe]
        %v543 = vld [vmem:[%s265 + $0xc] sm:$0xe]
        %v544 = vld [vmem:[%s265 + $0x18] sm:$0xe]
        %v545 = vld [vmem:[%s265 + $0x24] sm:$0xe]
        %v546 = vld [vmem:[%s265 + $0x30] sm:$0xe]
        %v547 = vld [vmem:[%s265 + $0x3c] sm:$0xe]
        %v548 = vld [vmem:[%s265 + $0x48] sm:$0xe]
        %v549 = vld [vmem:[%s265 + $0x54] sm:$0xe]
        %v550 = vld [vmem:[%s265 + $0x60] sm:$0xe]
        %v551 = vld [vmem:[%s265 + $0x6c] sm:$0xe]
        %vm582 = vcmask 1042432
        %vm583 = vcmask 1046532
        %vm584 = vmor %vm582, %vm583
        %v585 = vrot.slane %v542, 5
        %v586 = vrot.slane %v585, 4
        %v587 = vrot.slane %v270, 5
        %v588 = vsel %vm584, %v586, %v587
        %v589 = vrot.slane %v587, 4
        %v590 = vrot.slane %v289, 5
        %v591 = vsel %vm584, %v589, %v590
        %v592 = vrot.slane %v543, 5
        %v593 = vrot.slane %v592, 4
        %v594 = vrot.slane %v272, 5
        %v595 = vsel %vm584, %v593, %v594
        %v596 = vrot.slane %v594, 4
        %v597 = vrot.slane %v290, 5
        %v598 = vsel %vm584, %v596, %v597
        %v599 = vrot.slane %v544, 5
        %v600 = vrot.slane %v599, 4
        %v601 = vrot.slane %v274, 5
        %v602 = vsel %vm584, %v600, %v601
        %v603 = vrot.slane %v601, 4
        %v604 = vrot.slane %v291, 5
        %v605 = vsel %vm584, %v603, %v604
        %v606 = vrot.slane %v545, 5
        %v607 = vrot.slane %v606, 4
        %v608 = vrot.slane %v276, 5
        %v609 = vsel %vm584, %v607, %v608
        %v610 = vrot.slane %v608, 4
        %v611 = vrot.slane %v292, 5
        %v612 = vsel %vm584, %v610, %v611
        %v613 = vrot.slane %v546, 5
        %v614 = vrot.slane %v613, 4
        %v615 = vrot.slane %v278, 5
        %v616 = vsel %vm584, %v614, %v615
        %v617 = vrot.slane %v615, 4
        %v618 = vrot.slane %v293, 5
        %v619 = vsel %vm584, %v617, %v618
        %v620 = vrot.slane %v547, 5
        %v621 = vrot.slane %v620, 4
        %v622 = vrot.slane %v280, 5
        %v623 = vsel %vm584, %v621, %v622
        %v624 = vrot.slane %v622, 4
        %v625 = vrot.slane %v294, 5
        %v626 = vsel %vm584, %v624, %v625
        %v627 = vrot.slane %v548, 5
        %v628 = vrot.slane %v627, 4
        %v629 = vrot.slane %v282, 5
        %v630 = vsel %vm584, %v628, %v629
        %v631 = vrot.slane %v629, 4
        %v632 = vrot.slane %v295, 5
        %v633 = vsel %vm584, %v631, %v632
        %v634 = vrot.slane %v549, 5
        %v635 = vrot.slane %v634, 4
        %v636 = vrot.slane %v284, 5
        %v637 = vsel %vm584, %v635, %v636
        %v638 = vrot.slane %v636, 4
        %v639 = vrot.slane %v296, 5
        %v640 = vsel %vm584, %v638, %v639
        %v641 = vrot.slane %v550, 5
        %v642 = vrot.slane %v641, 4
        %v643 = vrot.slane %v286, 5
        %v644 = vsel %vm584, %v642, %v643
        %v645 = vrot.slane %v643, 4
        %v646 = vrot.slane %v297, 5
        %v647 = vsel %vm584, %v645, %v646
        %v648 = vrot.slane %v551, 5
        %v649 = vrot.slane %v648, 4
        %v650 = vrot.slane %v288, 5
        %v651 = vsel %vm584, %v649, %v650
        %v652 = vrot.slane %v650, 4
        %v653 = vrot.slane %v298, 5
        %v654 = vsel %vm584, %v652, %v653
        %s655 = scalar_lea.vmem %s265, 12
        %v656 = vld [vmem:[%s655] sm:$0xf]
        %v657 = vld [vmem:[%s655 + $0x4] sm:$0xf]
        %v658 = vld [vmem:[%s655 + $0xc] sm:$0xf]
        %v659 = vld [vmem:[%s655 + $0x10] sm:$0xf]
        %v660 = vld [vmem:[%s655 + $0x18] sm:$0xf]
        %v661 = vld [vmem:[%s655 + $0x1c] sm:$0xf]
        %v662 = vld [vmem:[%s655 + $0x24] sm:$0xf]
        %v663 = vld [vmem:[%s655 + $0x28] sm:$0xf]
        %v664 = vld [vmem:[%s655 + $0x30] sm:$0xf]
        %v665 = vld [vmem:[%s655 + $0x34] sm:$0xf]
        %v666 = vld [vmem:[%s655 + $0x3c] sm:$0xf]
        %v667 = vld [vmem:[%s655 + $0x40] sm:$0xf]
        %v668 = vld [vmem:[%s655 + $0x48] sm:$0xf]
        %v669 = vld [vmem:[%s655 + $0x4c] sm:$0xf]
        %v670 = vld [vmem:[%s655 + $0x54] sm:$0xf]
        %v671 = vld [vmem:[%s655 + $0x58] sm:$0xf]
        %v672 = vld [vmem:[%s655 + $0x60] sm:$0xf]
        %v673 = vld [vmem:[%s655 + $0x64] sm:$0xf]
        %v674 = vld [vmem:[%s655 + $0x6c] sm:$0xf]
        %v675 = vld [vmem:[%s655 + $0x70] sm:$0xf]
        %v676 = vld [vmem:[%s655 + $0x8] sm:$0x1]
        %v677 = vld [vmem:[%s655 + $0x14] sm:$0x1]
        %v678 = vld [vmem:[%s655 + $0x20] sm:$0x1]
        %v679 = vld [vmem:[%s655 + $0x2c] sm:$0x1]
        %v680 = vld [vmem:[%s655 + $0x38] sm:$0x1]
        %v681 = vld [vmem:[%s655 + $0x44] sm:$0x1]
        %v682 = vld [vmem:[%s655 + $0x50] sm:$0x1]
        %v683 = vld [vmem:[%s655 + $0x5c] sm:$0x1]
        %v684 = vld [vmem:[%s655 + $0x68] sm:$0x1]
        %v685 = vld [vmem:[%s655 + $0x74] sm:$0x1]
        %v687 = vshrl.u32 %v656, 16
        %v689 = vrot.slane %v687, 4
        %v690 = vshll.u32 %v656, 16
        %v692 = vrot.slane %v690, 5
        %v693 = vor.u32 %v689, %v692
        %v694 = vrot.slane %v693, 4
        %v696 = vshll.u32 %v657, 16
        %v698 = vrot.slane %v696, 5
        %v699 = vsel %vm301, %v694, %v698
        %v700 = vshrl.u32 %v657, 16
        %v702 = vrot.slane %v700, 4
        %v703 = vor.u32 %v702, %v698
        %v704 = vrot.slane %v703, 4
        %v706 = vshll.u32 %v676, 16
        %v708 = vrot.slane %v706, 5
        %v709 = vsel %vm301, %v704, %v708
        %v711 = vshrl.u32 %v658, 16
        %v713 = vrot.slane %v711, 4
        %v714 = vshll.u32 %v658, 16
        %v716 = vrot.slane %v714, 5
        %v717 = vor.u32 %v713, %v716
        %v718 = vrot.slane %v717, 4
        %v720 = vshll.u32 %v659, 16
        %v722 = vrot.slane %v720, 5
        %v723 = vsel %vm301, %v718, %v722
        %v724 = vshrl.u32 %v659, 16
        %v726 = vrot.slane %v724, 4
        %v727 = vor.u32 %v726, %v722
        %v728 = vrot.slane %v727, 4
        %v730 = vshll.u32 %v677, 16
        %v732 = vrot.slane %v730, 5
        %v733 = vsel %vm301, %v728, %v732
        %v735 = vshrl.u32 %v660, 16
        %v737 = vrot.slane %v735, 4
        %v738 = vshll.u32 %v660, 16
        %v740 = vrot.slane %v738, 5
        %v741 = vor.u32 %v737, %v740
        %v742 = vrot.slane %v741, 4
        %v744 = vshll.u32 %v661, 16
        %v746 = vrot.slane %v744, 5
        %v747 = vsel %vm301, %v742, %v746
        %v748 = vshrl.u32 %v661, 16
        %v750 = vrot.slane %v748, 4
        %v751 = vor.u32 %v750, %v746
        %v752 = vrot.slane %v751, 4
        %v754 = vshll.u32 %v678, 16
        %v756 = vrot.slane %v754, 5
        %v757 = vsel %vm301, %v752, %v756
        %v759 = vshrl.u32 %v662, 16
        %v761 = vrot.slane %v759, 4
        %v762 = vshll.u32 %v662, 16
        %v764 = vrot.slane %v762, 5
        %v765 = vor.u32 %v761, %v764
        %v766 = vrot.slane %v765, 4
        %v768 = vshll.u32 %v663, 16
        %v770 = vrot.slane %v768, 5
        %v771 = vsel %vm301, %v766, %v770
        %v772 = vshrl.u32 %v663, 16
        %v774 = vrot.slane %v772, 4
        %v775 = vor.u32 %v774, %v770
        %v776 = vrot.slane %v775, 4
        %v778 = vshll.u32 %v679, 16
        %v780 = vrot.slane %v778, 5
        %v781 = vsel %vm301, %v776, %v780
        %v783 = vshrl.u32 %v664, 16
        %v785 = vrot.slane %v783, 4
        %v786 = vshll.u32 %v664, 16
        %v788 = vrot.slane %v786, 5
        %v789 = vor.u32 %v785, %v788
        %v790 = vrot.slane %v789, 4
        %v792 = vshll.u32 %v665, 16
        %v794 = vrot.slane %v792, 5
        %v795 = vsel %vm301, %v790, %v794
        %v796 = vshrl.u32 %v665, 16
        %v798 = vrot.slane %v796, 4
        %v799 = vor.u32 %v798, %v794
        %v800 = vrot.slane %v799, 4
        %v802 = vshll.u32 %v680, 16
        %v804 = vrot.slane %v802, 5
        %v805 = vsel %vm301, %v800, %v804
        %v807 = vshrl.u32 %v666, 16
        %v809 = vrot.slane %v807, 4
        %v810 = vshll.u32 %v666, 16
        %v812 = vrot.slane %v810, 5
        %v813 = vor.u32 %v809, %v812
        %v814 = vrot.slane %v813, 4
        %v816 = vshll.u32 %v667, 16
        %v818 = vrot.slane %v816, 5
        %v819 = vsel %vm301, %v814, %v818
        %v820 = vshrl.u32 %v667, 16
        %v822 = vrot.slane %v820, 4
        %v823 = vor.u32 %v822, %v818
        %v824 = vrot.slane %v823, 4
        %v826 = vshll.u32 %v681, 16
        %v828 = vrot.slane %v826, 5
        %v829 = vsel %vm301, %v824, %v828
        %v831 = vshrl.u32 %v668, 16
        %v833 = vrot.slane %v831, 4
        %v834 = vshll.u32 %v668, 16
        %v836 = vrot.slane %v834, 5
        %v837 = vor.u32 %v833, %v836
        %v838 = vrot.slane %v837, 4
        %v840 = vshll.u32 %v669, 16
        %v842 = vrot.slane %v840, 5
        %v843 = vsel %vm301, %v838, %v842
        %v844 = vshrl.u32 %v669, 16
        %v846 = vrot.slane %v844, 4
        %v847 = vor.u32 %v846, %v842
        %v848 = vrot.slane %v847, 4
        %v850 = vshll.u32 %v682, 16
        %v852 = vrot.slane %v850, 5
        %v853 = vsel %vm301, %v848, %v852
        %v855 = vshrl.u32 %v670, 16
        %v857 = vrot.slane %v855, 4
        %v858 = vshll.u32 %v670, 16
        %v860 = vrot.slane %v858, 5
        %v861 = vor.u32 %v857, %v860
        %v862 = vrot.slane %v861, 4
        %v864 = vshll.u32 %v671, 16
        %v866 = vrot.slane %v864, 5
        %v867 = vsel %vm301, %v862, %v866
        %v868 = vshrl.u32 %v671, 16
        %v870 = vrot.slane %v868, 4
        %v871 = vor.u32 %v870, %v866
        %v872 = vrot.slane %v871, 4
        %v874 = vshll.u32 %v683, 16
        %v876 = vrot.slane %v874, 5
        %v877 = vsel %vm301, %v872, %v876
        %v879 = vshrl.u32 %v672, 16
        %v881 = vrot.slane %v879, 4
        %v882 = vshll.u32 %v672, 16
        %v884 = vrot.slane %v882, 5
        %v885 = vor.u32 %v881, %v884
        %v886 = vrot.slane %v885, 4
        %v888 = vshll.u32 %v673, 16
        %v890 = vrot.slane %v888, 5
        %v891 = vsel %vm301, %v886, %v890
        %v892 = vshrl.u32 %v673, 16
        %v894 = vrot.slane %v892, 4
        %v895 = vor.u32 %v894, %v890
        %v896 = vrot.slane %v895, 4
        %v898 = vshll.u32 %v684, 16
        %v900 = vrot.slane %v898, 5
        %v901 = vsel %vm301, %v896, %v900
        %v903 = vshrl.u32 %v674, 16
        %v905 = vrot.slane %v903, 4
        %v906 = vshll.u32 %v674, 16
        %v908 = vrot.slane %v906, 5
        %v909 = vor.u32 %v905, %v908
        %v910 = vrot.slane %v909, 4
        %v912 = vshll.u32 %v675, 16
        %v914 = vrot.slane %v912, 5
        %v915 = vsel %vm301, %v910, %v914
        %v916 = vshrl.u32 %v675, 16
        %v918 = vrot.slane %v916, 4
        %v919 = vor.u32 %v918, %v914
        %v920 = vrot.slane %v919, 4
        %v922 = vshll.u32 %v685, 16
        %v924 = vrot.slane %v922, 5
        %v925 = vsel %vm301, %v920, %v924
        %v926 = vld [vmem:[%s655] sm:$0xe]
        %v927 = vld [vmem:[%s655 + $0xc] sm:$0xe]
        %v928 = vld [vmem:[%s655 + $0x18] sm:$0xe]
        %v929 = vld [vmem:[%s655 + $0x24] sm:$0xe]
        %v930 = vld [vmem:[%s655 + $0x30] sm:$0xe]
        %v931 = vld [vmem:[%s655 + $0x3c] sm:$0xe]
        %v932 = vld [vmem:[%s655 + $0x48] sm:$0xe]
        %v933 = vld [vmem:[%s655 + $0x54] sm:$0xe]
        %v934 = vld [vmem:[%s655 + $0x60] sm:$0xe]
        %v935 = vld [vmem:[%s655 + $0x6c] sm:$0xe]
        %v966 = vrot.slane %v926, 5
        %v967 = vrot.slane %v966, 4
        %v968 = vrot.slane %v657, 5
        %v969 = vsel %vm584, %v967, %v968
        %v970 = vrot.slane %v968, 4
        %v971 = vrot.slane %v676, 5
        %v972 = vsel %vm584, %v970, %v971
        %v973 = vrot.slane %v927, 5
        %v974 = vrot.slane %v973, 4
        %v975 = vrot.slane %v659, 5
        %v976 = vsel %vm584, %v974, %v975
        %v977 = vrot.slane %v975, 4
        %v978 = vrot.slane %v677, 5
        %v979 = vsel %vm584, %v977, %v978
        %v980 = vrot.slane %v928, 5
        %v981 = vrot.slane %v980, 4
        %v982 = vrot.slane %v661, 5
        %v983 = vsel %vm584, %v981, %v982
        %v984 = vrot.slane %v982, 4
        %v985 = vrot.slane %v678, 5
        %v986 = vsel %vm584, %v984, %v985
        %v987 = vrot.slane %v929, 5
        %v988 = vrot.slane %v987, 4
        %v989 = vrot.slane %v663, 5
        %v990 = vsel %vm584, %v988, %v989
        %v991 = vrot.slane %v989, 4
        %v992 = vrot.slane %v679, 5
        %v993 = vsel %vm584, %v991, %v992
        %v994 = vrot.slane %v930, 5
        %v995 = vrot.slane %v994, 4
        %v996 = vrot.slane %v665, 5
        %v997 = vsel %vm584, %v995, %v996
        %v998 = vrot.slane %v996, 4
        %v999 = vrot.slane %v680, 5
        %v1000 = vsel %vm584, %v998, %v999
        %v1001 = vrot.slane %v931, 5
        %v1002 = vrot.slane %v1001, 4
        %v1003 = vrot.slane %v667, 5
        %v1004 = vsel %vm584, %v1002, %v1003
        %v1005 = vrot.slane %v1003, 4
        %v1006 = vrot.slane %v681, 5
        %v1007 = vsel %vm584, %v1005, %v1006
        %v1008 = vrot.slane %v932, 5
        %v1009 = vrot.slane %v1008, 4
        %v1010 = vrot.slane %v669, 5
        %v1011 = vsel %vm584, %v1009, %v1010
        %v1012 = vrot.slane %v1010, 4
        %v1013 = vrot.slane %v682, 5
        %v1014 = vsel %vm584, %v1012, %v1013
        %v1015 = vrot.slane %v933, 5
        %v1016 = vrot.slane %v1015, 4
        %v1017 = vrot.slane %v671, 5
        %v1018 = vsel %vm584, %v1016, %v1017
        %v1019 = vrot.slane %v1017, 4
        %v1020 = vrot.slane %v683, 5
        %v1021 = vsel %vm584, %v1019, %v1020
        %v1022 = vrot.slane %v934, 5
        %v1023 = vrot.slane %v1022, 4
        %v1024 = vrot.slane %v673, 5
        %v1025 = vsel %vm584, %v1023, %v1024
        %v1026 = vrot.slane %v1024, 4
        %v1027 = vrot.slane %v684, 5
        %v1028 = vsel %vm584, %v1026, %v1027
        %v1029 = vrot.slane %v935, 5
        %v1030 = vrot.slane %v1029, 4
        %v1031 = vrot.slane %v675, 5
        %v1032 = vsel %vm584, %v1030, %v1031
        %v1033 = vrot.slane %v1031, 4
        %v1034 = vrot.slane %v685, 5
        %v1035 = vsel %vm584, %v1033, %v1034
        %s1036 = scalar_lea.vmem %s265, 24
        %v1037 = vld [vmem:[%s1036] sm:$0xf]
        %v1038 = vld [vmem:[%s1036 + $0x4] sm:$0xf]
        %v1039 = vld [vmem:[%s1036 + $0xc] sm:$0xf]
        %v1040 = vld [vmem:[%s1036 + $0x10] sm:$0xf]
        %v1041 = vld [vmem:[%s1036 + $0x18] sm:$0xf]
        %v1042 = vld [vmem:[%s1036 + $0x1c] sm:$0xf]
        %v1043 = vld [vmem:[%s1036 + $0x24] sm:$0xf]
        %v1044 = vld [vmem:[%s1036 + $0x28] sm:$0xf]
        %v1045 = vld [vmem:[%s1036 + $0x30] sm:$0xf]
        %v1046 = vld [vmem:[%s1036 + $0x34] sm:$0xf]
        %v1047 = vld [vmem:[%s1036 + $0x3c] sm:$0xf]
        %v1048 = vld [vmem:[%s1036 + $0x40] sm:$0xf]
        %v1049 = vld [vmem:[%s1036 + $0x48] sm:$0xf]
        %v1050 = vld [vmem:[%s1036 + $0x4c] sm:$0xf]
        %v1051 = vld [vmem:[%s1036 + $0x54] sm:$0xf]
        %v1052 = vld [vmem:[%s1036 + $0x58] sm:$0xf]
        %v1053 = vld [vmem:[%s1036 + $0x60] sm:$0xf]
        %v1054 = vld [vmem:[%s1036 + $0x64] sm:$0xf]
        %v1055 = vld [vmem:[%s1036 + $0x6c] sm:$0xf]
        %v1056 = vld [vmem:[%s1036 + $0x70] sm:$0xf]
        %v1057 = vld [vmem:[%s1036 + $0x8] sm:$0x1]
        %v1058 = vld [vmem:[%s1036 + $0x14] sm:$0x1]
        %v1059 = vld [vmem:[%s1036 + $0x20] sm:$0x1]
        %v1060 = vld [vmem:[%s1036 + $0x2c] sm:$0x1]
        %v1061 = vld [vmem:[%s1036 + $0x38] sm:$0x1]
        %v1062 = vld [vmem:[%s1036 + $0x44] sm:$0x1]
        %v1063 = vld [vmem:[%s1036 + $0x50] sm:$0x1]
        %v1064 = vld [vmem:[%s1036 + $0x5c] sm:$0x1]
        %v1065 = vld [vmem:[%s1036 + $0x68] sm:$0x1]
        %v1066 = vld [vmem:[%s1036 + $0x74] sm:$0x1]
        %v1068 = vshrl.u32 %v1037, 16
        %v1070 = vrot.slane %v1068, 4
        %v1071 = vshll.u32 %v1037, 16
        %v1073 = vrot.slane %v1071, 5
        %v1074 = vor.u32 %v1070, %v1073
        %v1075 = vrot.slane %v1074, 4
        %v1077 = vshll.u32 %v1038, 16
        %v1079 = vrot.slane %v1077, 5
        %v1080 = vsel %vm301, %v1075, %v1079
        %v1081 = vshrl.u32 %v1038, 16
        %v1083 = vrot.slane %v1081, 4
        %v1084 = vor.u32 %v1083, %v1079
        %v1085 = vrot.slane %v1084, 4
        %v1087 = vshll.u32 %v1057, 16
        %v1089 = vrot.slane %v1087, 5
        %v1090 = vsel %vm301, %v1085, %v1089
        %v1092 = vshrl.u32 %v1039, 16
        %v1094 = vrot.slane %v1092, 4
        %v1095 = vshll.u32 %v1039, 16
        %v1097 = vrot.slane %v1095, 5
        %v1098 = vor.u32 %v1094, %v1097
        %v1099 = vrot.slane %v1098, 4
        %v1101 = vshll.u32 %v1040, 16
        %v1103 = vrot.slane %v1101, 5
        %v1104 = vsel %vm301, %v1099, %v1103
        %v1105 = vshrl.u32 %v1040, 16
        %v1107 = vrot.slane %v1105, 4
        %v1108 = vor.u32 %v1107, %v1103
        %v1109 = vrot.slane %v1108, 4
        %v1111 = vshll.u32 %v1058, 16
        %v1113 = vrot.slane %v1111, 5
        %v1114 = vsel %vm301, %v1109, %v1113
        %v1116 = vshrl.u32 %v1041, 16
        %v1118 = vrot.slane %v1116, 4
        %v1119 = vshll.u32 %v1041, 16
        %v1121 = vrot.slane %v1119, 5
        %v1122 = vor.u32 %v1118, %v1121
        %v1123 = vrot.slane %v1122, 4
        %v1125 = vshll.u32 %v1042, 16
        %v1127 = vrot.slane %v1125, 5
        %v1128 = vsel %vm301, %v1123, %v1127
        %v1129 = vshrl.u32 %v1042, 16
        %v1131 = vrot.slane %v1129, 4
        %v1132 = vor.u32 %v1131, %v1127
        %v1133 = vrot.slane %v1132, 4
        %v1135 = vshll.u32 %v1059, 16
        %v1137 = vrot.slane %v1135, 5
        %v1138 = vsel %vm301, %v1133, %v1137
        %v1140 = vshrl.u32 %v1043, 16
        %v1142 = vrot.slane %v1140, 4
        %v1143 = vshll.u32 %v1043, 16
        %v1145 = vrot.slane %v1143, 5
        %v1146 = vor.u32 %v1142, %v1145
        %v1147 = vrot.slane %v1146, 4
        %v1149 = vshll.u32 %v1044, 16
        %v1151 = vrot.slane %v1149, 5
        %v1152 = vsel %vm301, %v1147, %v1151
        %v1153 = vshrl.u32 %v1044, 16
        %v1155 = vrot.slane %v1153, 4
        %v1156 = vor.u32 %v1155, %v1151
        %v1157 = vrot.slane %v1156, 4
        %v1159 = vshll.u32 %v1060, 16
        %v1161 = vrot.slane %v1159, 5
        %v1162 = vsel %vm301, %v1157, %v1161
        %v1164 = vshrl.u32 %v1045, 16
        %v1166 = vrot.slane %v1164, 4
        %v1167 = vshll.u32 %v1045, 16
        %v1169 = vrot.slane %v1167, 5
        %v1170 = vor.u32 %v1166, %v1169
        %v1171 = vrot.slane %v1170, 4
        %v1173 = vshll.u32 %v1046, 16
        %v1175 = vrot.slane %v1173, 5
        %v1176 = vsel %vm301, %v1171, %v1175
        %v1177 = vshrl.u32 %v1046, 16
        %v1179 = vrot.slane %v1177, 4
        %v1180 = vor.u32 %v1179, %v1175
        %v1181 = vrot.slane %v1180, 4
        %v1183 = vshll.u32 %v1061, 16
        %v1185 = vrot.slane %v1183, 5
        %v1186 = vsel %vm301, %v1181, %v1185
        %v1188 = vshrl.u32 %v1047, 16
        %v1190 = vrot.slane %v1188, 4
        %v1191 = vshll.u32 %v1047, 16
        %v1193 = vrot.slane %v1191, 5
        %v1194 = vor.u32 %v1190, %v1193
        %v1195 = vrot.slane %v1194, 4
        %v1197 = vshll.u32 %v1048, 16
        %v1199 = vrot.slane %v1197, 5
        %v1200 = vsel %vm301, %v1195, %v1199
        %v1201 = vshrl.u32 %v1048, 16
        %v1203 = vrot.slane %v1201, 4
        %v1204 = vor.u32 %v1203, %v1199
        %v1205 = vrot.slane %v1204, 4
        %v1207 = vshll.u32 %v1062, 16
        %v1209 = vrot.slane %v1207, 5
        %v1210 = vsel %vm301, %v1205, %v1209
        %v1212 = vshrl.u32 %v1049, 16
        %v1214 = vrot.slane %v1212, 4
        %v1215 = vshll.u32 %v1049, 16
        %v1217 = vrot.slane %v1215, 5
        %v1218 = vor.u32 %v1214, %v1217
        %v1219 = vrot.slane %v1218, 4
        %v1221 = vshll.u32 %v1050, 16
        %v1223 = vrot.slane %v1221, 5
        %v1224 = vsel %vm301, %v1219, %v1223
        %v1225 = vshrl.u32 %v1050, 16
        %v1227 = vrot.slane %v1225, 4
        %v1228 = vor.u32 %v1227, %v1223
        %v1229 = vrot.slane %v1228, 4
        %v1231 = vshll.u32 %v1063, 16
        %v1233 = vrot.slane %v1231, 5
        %v1234 = vsel %vm301, %v1229, %v1233
        %v1236 = vshrl.u32 %v1051, 16
        %v1238 = vrot.slane %v1236, 4
        %v1239 = vshll.u32 %v1051, 16
        %v1241 = vrot.slane %v1239, 5
        %v1242 = vor.u32 %v1238, %v1241
        %v1243 = vrot.slane %v1242, 4
        %v1245 = vshll.u32 %v1052, 16
        %v1247 = vrot.slane %v1245, 5
        %v1248 = vsel %vm301, %v1243, %v1247
        %v1249 = vshrl.u32 %v1052, 16
        %v1251 = vrot.slane %v1249, 4
        %v1252 = vor.u32 %v1251, %v1247
        %v1253 = vrot.slane %v1252, 4
        %v1255 = vshll.u32 %v1064, 16
        %v1257 = vrot.slane %v1255, 5
        %v1258 = vsel %vm301, %v1253, %v1257
        %v1260 = vshrl.u32 %v1053, 16
        %v1262 = vrot.slane %v1260, 4
        %v1263 = vshll.u32 %v1053, 16
        %v1265 = vrot.slane %v1263, 5
        %v1266 = vor.u32 %v1262, %v1265
        %v1267 = vrot.slane %v1266, 4
        %v1269 = vshll.u32 %v1054, 16
        %v1271 = vrot.slane %v1269, 5
        %v1272 = vsel %vm301, %v1267, %v1271
        %v1273 = vshrl.u32 %v1054, 16
        %v1275 = vrot.slane %v1273, 4
        %v1276 = vor.u32 %v1275, %v1271
        %v1277 = vrot.slane %v1276, 4
        %v1279 = vshll.u32 %v1065, 16
        %v1281 = vrot.slane %v1279, 5
        %v1282 = vsel %vm301, %v1277, %v1281
        %v1284 = vshrl.u32 %v1055, 16
        %v1286 = vrot.slane %v1284, 4
        %v1287 = vshll.u32 %v1055, 16
        %v1289 = vrot.slane %v1287, 5
        %v1290 = vor.u32 %v1286, %v1289
        %v1291 = vrot.slane %v1290, 4
        %v1293 = vshll.u32 %v1056, 16
        %v1295 = vrot.slane %v1293, 5
        %v1296 = vsel %vm301, %v1291, %v1295
        %v1297 = vshrl.u32 %v1056, 16
        %v1299 = vrot.slane %v1297, 4
        %v1300 = vor.u32 %v1299, %v1295
        %v1301 = vrot.slane %v1300, 4
        %v1303 = vshll.u32 %v1066, 16
        %v1305 = vrot.slane %v1303, 5
        %v1306 = vsel %vm301, %v1301, %v1305
        %v1307 = vld [vmem:[%s1036] sm:$0xe]
        %v1308 = vld [vmem:[%s1036 + $0xc] sm:$0xe]
        %v1309 = vld [vmem:[%s1036 + $0x18] sm:$0xe]
        %v1310 = vld [vmem:[%s1036 + $0x24] sm:$0xe]
        %v1311 = vld [vmem:[%s1036 + $0x30] sm:$0xe]
        %v1312 = vld [vmem:[%s1036 + $0x3c] sm:$0xe]
        %v1313 = vld [vmem:[%s1036 + $0x48] sm:$0xe]
        %v1314 = vld [vmem:[%s1036 + $0x54] sm:$0xe]
        %v1315 = vld [vmem:[%s1036 + $0x60] sm:$0xe]
        %v1316 = vld [vmem:[%s1036 + $0x6c] sm:$0xe]
        %v1347 = vrot.slane %v1307, 5
        %v1348 = vrot.slane %v1347, 4
        %v1349 = vrot.slane %v1038, 5
        %v1350 = vsel %vm584, %v1348, %v1349
        %v1351 = vrot.slane %v1349, 4
        %v1352 = vrot.slane %v1057, 5
        %v1353 = vsel %vm584, %v1351, %v1352
        %v1354 = vrot.slane %v1308, 5
        %v1355 = vrot.slane %v1354, 4
        %v1356 = vrot.slane %v1040, 5
        %v1357 = vsel %vm584, %v1355, %v1356
        %v1358 = vrot.slane %v1356, 4
        %v1359 = vrot.slane %v1058, 5
        %v1360 = vsel %vm584, %v1358, %v1359
        %v1361 = vrot.slane %v1309, 5
        %v1362 = vrot.slane %v1361, 4
        %v1363 = vrot.slane %v1042, 5
        %v1364 = vsel %vm584, %v1362, %v1363
        %v1365 = vrot.slane %v1363, 4
        %v1366 = vrot.slane %v1059, 5
        %v1367 = vsel %vm584, %v1365, %v1366
        %v1368 = vrot.slane %v1310, 5
        %v1369 = vrot.slane %v1368, 4
        %v1370 = vrot.slane %v1044, 5
        %v1371 = vsel %vm584, %v1369, %v1370
        %v1372 = vrot.slane %v1370, 4
        %v1373 = vrot.slane %v1060, 5
        %v1374 = vsel %vm584, %v1372, %v1373
        %v1375 = vrot.slane %v1311, 5
        %v1376 = vrot.slane %v1375, 4
        %v1377 = vrot.slane %v1046, 5
        %v1378 = vsel %vm584, %v1376, %v1377
        %v1379 = vrot.slane %v1377, 4
        %v1380 = vrot.slane %v1061, 5
        %v1381 = vsel %vm584, %v1379, %v1380
        %v1382 = vrot.slane %v1312, 5
        %v1383 = vrot.slane %v1382, 4
        %v1384 = vrot.slane %v1048, 5
        %v1385 = vsel %vm584, %v1383, %v1384
        %v1386 = vrot.slane %v1384, 4
        %v1387 = vrot.slane %v1062, 5
        %v1388 = vsel %vm584, %v1386, %v1387
        %v1389 = vrot.slane %v1313, 5
        %v1390 = vrot.slane %v1389, 4
        %v1391 = vrot.slane %v1050, 5
        %v1392 = vsel %vm584, %v1390, %v1391
        %v1393 = vrot.slane %v1391, 4
        %v1394 = vrot.slane %v1063, 5
        %v1395 = vsel %vm584, %v1393, %v1394
        %v1396 = vrot.slane %v1314, 5
        %v1397 = vrot.slane %v1396, 4
        %v1398 = vrot.slane %v1052, 5
        %v1399 = vsel %vm584, %v1397, %v1398
        %v1400 = vrot.slane %v1398, 4
        %v1401 = vrot.slane %v1064, 5
        %v1402 = vsel %vm584, %v1400, %v1401
        %v1403 = vrot.slane %v1315, 5
        %v1404 = vrot.slane %v1403, 4
        %v1405 = vrot.slane %v1054, 5
        %v1406 = vsel %vm584, %v1404, %v1405
        %v1407 = vrot.slane %v1405, 4
        %v1408 = vrot.slane %v1065, 5
        %v1409 = vsel %vm584, %v1407, %v1408
        %v1410 = vrot.slane %v1316, 5
        %v1411 = vrot.slane %v1410, 4
        %v1412 = vrot.slane %v1056, 5
        %v1413 = vsel %vm584, %v1411, %v1412
        %v1414 = vrot.slane %v1412, 4
        %v1415 = vrot.slane %v1066, 5
        %v1416 = vsel %vm584, %v1414, %v1415
        %v1427 = vunpack.c.l.b16 %v269
        %v1428 = vunpack.c.l.b16 %v270
        %v1429 = vunpack.c.l.b16 %v271
        %v1430 = vunpack.c.l.b16 %v272
        %v1431 = vunpack.c.l.b16 %v273
        %v1432 = vunpack.c.l.b16 %v274
        %v1433 = vunpack.c.l.b16 %v275
        %v1434 = vunpack.c.l.b16 %v276
        %v1435 = vunpack.c.l.b16 %v277
        %v1436 = vunpack.c.l.b16 %v278
        %v1437 = vunpack.c.l.b16 %v279
        %v1438 = vunpack.c.l.b16 %v280
        %v1439 = vunpack.c.l.b16 %v281
        %v1440 = vunpack.c.l.b16 %v282
        %v1441 = vunpack.c.l.b16 %v283
        %v1442 = vunpack.c.l.b16 %v284
        %v1443 = vunpack.c.l.b16 %v285
        %v1444 = vunpack.c.l.b16 %v286
        %v1445 = vunpack.c.l.b16 %v287
        %v1446 = vunpack.c.l.b16 %v288
        %v1447 = vpack.c.b16 %v1428, %v1427
        %v1448 = vpack.c.b16 %v1430, %v1429
        %v1449 = vpack.c.b16 %v1432, %v1431
        %v1450 = vpack.c.b16 %v1434, %v1433
        %v1451 = vpack.c.b16 %v1436, %v1435
        %v1452 = vpack.c.b16 %v1438, %v1437
        %v1453 = vpack.c.b16 %v1440, %v1439
        %v1454 = vpack.c.b16 %v1442, %v1441
        %v1455 = vpack.c.b16 %v1444, %v1443
        %v1456 = vpack.c.b16 %v1446, %v1445
        %v1467 = vunpack.c.l.b16 %v315
        %v1468 = vunpack.c.l.b16 %v325
        %v1469 = vunpack.c.l.b16 %v339
        %v1470 = vunpack.c.l.b16 %v349
        %v1471 = vunpack.c.l.b16 %v363
        %v1472 = vunpack.c.l.b16 %v373
        %v1473 = vunpack.c.l.b16 %v387
        %v1474 = vunpack.c.l.b16 %v397
        %v1475 = vunpack.c.l.b16 %v411
        %v1476 = vunpack.c.l.b16 %v421
        %v1477 = vunpack.c.l.b16 %v435
        %v1478 = vunpack.c.l.b16 %v445
        %v1479 = vunpack.c.l.b16 %v459
        %v1480 = vunpack.c.l.b16 %v469
        %v1481 = vunpack.c.l.b16 %v483
        %v1482 = vunpack.c.l.b16 %v493
        %v1483 = vunpack.c.l.b16 %v507
        %v1484 = vunpack.c.l.b16 %v517
        %v1485 = vunpack.c.l.b16 %v531
        %v1486 = vunpack.c.l.b16 %v541
        %v1487 = vpack.c.b16 %v1468, %v1467
        %v1488 = vpack.c.b16 %v1470, %v1469
        %v1489 = vpack.c.b16 %v1472, %v1471
        %v1490 = vpack.c.b16 %v1474, %v1473
        %v1491 = vpack.c.b16 %v1476, %v1475
        %v1492 = vpack.c.b16 %v1478, %v1477
        %v1493 = vpack.c.b16 %v1480, %v1479
        %v1494 = vpack.c.b16 %v1482, %v1481
        %v1495 = vpack.c.b16 %v1484, %v1483
        %v1496 = vpack.c.b16 %v1486, %v1485
        %v1507 = vunpack.c.l.b16 %v588
        %v1508 = vunpack.c.l.b16 %v591
        %v1509 = vunpack.c.l.b16 %v595
        %v1510 = vunpack.c.l.b16 %v598
        %v1511 = vunpack.c.l.b16 %v602
        %v1512 = vunpack.c.l.b16 %v605
        %v1513 = vunpack.c.l.b16 %v609
        %v1514 = vunpack.c.l.b16 %v612
        %v1515 = vunpack.c.l.b16 %v616
        %v1516 = vunpack.c.l.b16 %v619
        %v1517 = vunpack.c.l.b16 %v623
        %v1518 = vunpack.c.l.b16 %v626
        %v1519 = vunpack.c.l.b16 %v630
        %v1520 = vunpack.c.l.b16 %v633
        %v1521 = vunpack.c.l.b16 %v637
        %v1522 = vunpack.c.l.b16 %v640
        %v1523 = vunpack.c.l.b16 %v644
        %v1524 = vunpack.c.l.b16 %v647
        %v1525 = vunpack.c.l.b16 %v651
        %v1526 = vunpack.c.l.b16 %v654
        %v1527 = vpack.c.b16 %v1508, %v1507
        %v1528 = vpack.c.b16 %v1510, %v1509
        %v1529 = vpack.c.b16 %v1512, %v1511
        %v1530 = vpack.c.b16 %v1514, %v1513
        %v1531 = vpack.c.b16 %v1516, %v1515
        %v1532 = vpack.c.b16 %v1518, %v1517
        %v1533 = vpack.c.b16 %v1520, %v1519
        %v1534 = vpack.c.b16 %v1522, %v1521
        %v1535 = vpack.c.b16 %v1524, %v1523
        %v1536 = vpack.c.b16 %v1526, %v1525
        %v1557 = vunpack.c.l.b16 %v656
        %v1558 = vunpack.c.l.b16 %v657
        %v1559 = vunpack.c.l.b16 %v658
        %v1560 = vunpack.c.l.b16 %v659
        %v1561 = vunpack.c.l.b16 %v660
        %v1562 = vunpack.c.l.b16 %v661
        %v1563 = vunpack.c.l.b16 %v662
        %v1564 = vunpack.c.l.b16 %v663
        %v1565 = vunpack.c.l.b16 %v664
        %v1566 = vunpack.c.l.b16 %v665
        %v1567 = vunpack.c.l.b16 %v666
        %v1568 = vunpack.c.l.b16 %v667
        %v1569 = vunpack.c.l.b16 %v668
        %v1570 = vunpack.c.l.b16 %v669
        %v1571 = vunpack.c.l.b16 %v670
        %v1572 = vunpack.c.l.b16 %v671
        %v1573 = vunpack.c.l.b16 %v672
        %v1574 = vunpack.c.l.b16 %v673
        %v1575 = vunpack.c.l.b16 %v674
        %v1576 = vunpack.c.l.b16 %v675
        %v1577 = vpack.c.b16 %v1558, %v1557
        %v1578 = vpack.c.b16 %v1560, %v1559
        %v1579 = vpack.c.b16 %v1562, %v1561
        %v1580 = vpack.c.b16 %v1564, %v1563
        %v1581 = vpack.c.b16 %v1566, %v1565
        %v1582 = vpack.c.b16 %v1568, %v1567
        %v1583 = vpack.c.b16 %v1570, %v1569
        %v1584 = vpack.c.b16 %v1572, %v1571
        %v1585 = vpack.c.b16 %v1574, %v1573
        %v1586 = vpack.c.b16 %v1576, %v1575
        %v1597 = vunpack.c.l.b16 %v699
        %v1598 = vunpack.c.l.b16 %v709
        %v1599 = vunpack.c.l.b16 %v723
        %v1600 = vunpack.c.l.b16 %v733
        %v1601 = vunpack.c.l.b16 %v747
        %v1602 = vunpack.c.l.b16 %v757
        %v1603 = vunpack.c.l.b16 %v771
        %v1604 = vunpack.c.l.b16 %v781
        %v1605 = vunpack.c.l.b16 %v795
        %v1606 = vunpack.c.l.b16 %v805
        %v1607 = vunpack.c.l.b16 %v819
        %v1608 = vunpack.c.l.b16 %v829
        %v1609 = vunpack.c.l.b16 %v843
        %v1610 = vunpack.c.l.b16 %v853
        %v1611 = vunpack.c.l.b16 %v867
        %v1612 = vunpack.c.l.b16 %v877
        %v1613 = vunpack.c.l.b16 %v891
        %v1614 = vunpack.c.l.b16 %v901
        %v1615 = vunpack.c.l.b16 %v915
        %v1616 = vunpack.c.l.b16 %v925
        %v1617 = vpack.c.b16 %v1598, %v1597
        %v1618 = vpack.c.b16 %v1600, %v1599
        %v1619 = vpack.c.b16 %v1602, %v1601
        %v1620 = vpack.c.b16 %v1604, %v1603
        %v1621 = vpack.c.b16 %v1606, %v1605
        %v1622 = vpack.c.b16 %v1608, %v1607
        %v1623 = vpack.c.b16 %v1610, %v1609
        %v1624 = vpack.c.b16 %v1612, %v1611
        %v1625 = vpack.c.b16 %v1614, %v1613
        %v1626 = vpack.c.b16 %v1616, %v1615
        %v1637 = vunpack.c.l.b16 %v969
        %v1638 = vunpack.c.l.b16 %v972
        %v1639 = vunpack.c.l.b16 %v976
        %v1640 = vunpack.c.l.b16 %v979
        %v1641 = vunpack.c.l.b16 %v983
        %v1642 = vunpack.c.l.b16 %v986
        %v1643 = vunpack.c.l.b16 %v990
        %v1644 = vunpack.c.l.b16 %v993
        %v1645 = vunpack.c.l.b16 %v997
        %v1646 = vunpack.c.l.b16 %v1000
        %v1647 = vunpack.c.l.b16 %v1004
        %v1648 = vunpack.c.l.b16 %v1007
        %v1649 = vunpack.c.l.b16 %v1011
        %v1650 = vunpack.c.l.b16 %v1014
        %v1651 = vunpack.c.l.b16 %v1018
        %v1652 = vunpack.c.l.b16 %v1021
        %v1653 = vunpack.c.l.b16 %v1025
        %v1654 = vunpack.c.l.b16 %v1028
        %v1655 = vunpack.c.l.b16 %v1032
        %v1656 = vunpack.c.l.b16 %v1035
        %v1657 = vpack.c.b16 %v1638, %v1637
        %v1658 = vpack.c.b16 %v1640, %v1639
        %v1659 = vpack.c.b16 %v1642, %v1641
        %v1660 = vpack.c.b16 %v1644, %v1643
        %v1661 = vpack.c.b16 %v1646, %v1645
        %v1662 = vpack.c.b16 %v1648, %v1647
        %v1663 = vpack.c.b16 %v1650, %v1649
        %v1664 = vpack.c.b16 %v1652, %v1651
        %v1665 = vpack.c.b16 %v1654, %v1653
        %v1666 = vpack.c.b16 %v1656, %v1655
        %v1687 = vunpack.c.l.b16 %v1037
        %v1688 = vunpack.c.l.b16 %v1038
        %v1689 = vunpack.c.l.b16 %v1039
        %v1690 = vunpack.c.l.b16 %v1040
        %v1691 = vunpack.c.l.b16 %v1041
        %v1692 = vunpack.c.l.b16 %v1042
        %v1693 = vunpack.c.l.b16 %v1043
        %v1694 = vunpack.c.l.b16 %v1044
        %v1695 = vunpack.c.l.b16 %v1045
        %v1696 = vunpack.c.l.b16 %v1046
        %v1697 = vunpack.c.l.b16 %v1047
        %v1698 = vunpack.c.l.b16 %v1048
        %v1699 = vunpack.c.l.b16 %v1049
        %v1700 = vunpack.c.l.b16 %v1050
        %v1701 = vunpack.c.l.b16 %v1051
        %v1702 = vunpack.c.l.b16 %v1052
        %v1703 = vunpack.c.l.b16 %v1053
        %v1704 = vunpack.c.l.b16 %v1054
        %v1705 = vunpack.c.l.b16 %v1055
        %v1706 = vunpack.c.l.b16 %v1056
        %v1707 = vpack.c.b16 %v1688, %v1687
        %v1708 = vpack.c.b16 %v1690, %v1689
        %v1709 = vpack.c.b16 %v1692, %v1691
        %v1710 = vpack.c.b16 %v1694, %v1693
        %v1711 = vpack.c.b16 %v1696, %v1695
        %v1712 = vpack.c.b16 %v1698, %v1697
        %v1713 = vpack.c.b16 %v1700, %v1699
        %v1714 = vpack.c.b16 %v1702, %v1701
        %v1715 = vpack.c.b16 %v1704, %v1703
        %v1716 = vpack.c.b16 %v1706, %v1705
        %v1727 = vunpack.c.l.b16 %v1080
        %v1728 = vunpack.c.l.b16 %v1090
        %v1729 = vunpack.c.l.b16 %v1104
        %v1730 = vunpack.c.l.b16 %v1114
        %v1731 = vunpack.c.l.b16 %v1128
        %v1732 = vunpack.c.l.b16 %v1138
        %v1733 = vunpack.c.l.b16 %v1152
        %v1734 = vunpack.c.l.b16 %v1162
        %v1735 = vunpack.c.l.b16 %v1176
        %v1736 = vunpack.c.l.b16 %v1186
        %v1737 = vunpack.c.l.b16 %v1200
        %v1738 = vunpack.c.l.b16 %v1210
        %v1739 = vunpack.c.l.b16 %v1224
        %v1740 = vunpack.c.l.b16 %v1234
        %v1741 = vunpack.c.l.b16 %v1248
        %v1742 = vunpack.c.l.b16 %v1258
        %v1743 = vunpack.c.l.b16 %v1272
        %v1744 = vunpack.c.l.b16 %v1282
        %v1745 = vunpack.c.l.b16 %v1296
        %v1746 = vunpack.c.l.b16 %v1306
        %v1747 = vpack.c.b16 %v1728, %v1727
        %v1748 = vpack.c.b16 %v1730, %v1729
        %v1749 = vpack.c.b16 %v1732, %v1731
        %v1750 = vpack.c.b16 %v1734, %v1733
        %v1751 = vpack.c.b16 %v1736, %v1735
        %v1752 = vpack.c.b16 %v1738, %v1737
        %v1753 = vpack.c.b16 %v1740, %v1739
        %v1754 = vpack.c.b16 %v1742, %v1741
        %v1755 = vpack.c.b16 %v1744, %v1743
        %v1756 = vpack.c.b16 %v1746, %v1745
        %v1767 = vunpack.c.l.b16 %v1350
        %v1768 = vunpack.c.l.b16 %v1353
        %v1769 = vunpack.c.l.b16 %v1357
        %v1770 = vunpack.c.l.b16 %v1360
        %v1771 = vunpack.c.l.b16 %v1364
        %v1772 = vunpack.c.l.b16 %v1367
        %v1773 = vunpack.c.l.b16 %v1371
        %v1774 = vunpack.c.l.b16 %v1374
        %v1775 = vunpack.c.l.b16 %v1378
        %v1776 = vunpack.c.l.b16 %v1381
        %v1777 = vunpack.c.l.b16 %v1385
        %v1778 = vunpack.c.l.b16 %v1388
        %v1779 = vunpack.c.l.b16 %v1392
        %v1780 = vunpack.c.l.b16 %v1395
        %v1781 = vunpack.c.l.b16 %v1399
        %v1782 = vunpack.c.l.b16 %v1402
        %v1783 = vunpack.c.l.b16 %v1406
        %v1784 = vunpack.c.l.b16 %v1409
        %v1785 = vunpack.c.l.b16 %v1413
        %v1786 = vunpack.c.l.b16 %v1416
        %v1787 = vpack.c.b16 %v1768, %v1767
        %v1788 = vpack.c.b16 %v1770, %v1769
        %v1789 = vpack.c.b16 %v1772, %v1771
        %v1790 = vpack.c.b16 %v1774, %v1773
        %v1791 = vpack.c.b16 %v1776, %v1775
        %v1792 = vpack.c.b16 %v1778, %v1777
        %v1793 = vpack.c.b16 %v1780, %v1779
        %v1794 = vpack.c.b16 %v1782, %v1781
        %v1795 = vpack.c.b16 %v1784, %v1783
        %v1796 = vpack.c.b16 %v1786, %v1785
        %v1807 = vld [vmem:[%s1] sm:$0xf]
        %v1808 = vld [vmem:[%s1 + $0x4] sm:$0xf]
        %v1809 = vld [vmem:[%s1 + $0x8] sm:$0xf]
        %v1810 = vld [vmem:[%s1 + $0xc] sm:$0xf]
        %v1811 = vld [vmem:[%s1 + $0x10] sm:$0xf]
        %v1812 = vld [vmem:[%s1 + $0x14] sm:$0xf]
        %v1813 = vld [vmem:[%s1 + $0x18] sm:$0xf]
        %v1814 = vld [vmem:[%s1 + $0x1c] sm:$0xf]
        %v1815 = vld [vmem:[%s1 + $0x20] sm:$0xf]
        %v1816 = vld [vmem:[%s1 + $0x24] sm:$0xf]
        %v1817 = vld [vmem:[%s1 + $0x28] sm:$0xf]
        %v1818 = vld [vmem:[%s1 + $0x2c] sm:$0xf]
        %v1819 = vld [vmem:[%s1 + $0x30] sm:$0xf]
        %v1820 = vld [vmem:[%s1 + $0x34] sm:$0xf]
        %v1821 = vld [vmem:[%s1 + $0x38] sm:$0xf]
        %v1822 = vld [vmem:[%s1 + $0x3c] sm:$0xf]
        %v1823 = vld [vmem:[%s1 + $0x40] sm:$0xf]
        %v1824 = vld [vmem:[%s1 + $0x44] sm:$0xf]
        %v1825 = vld [vmem:[%s1 + $0x48] sm:$0xf]
        %v1826 = vld [vmem:[%s1 + $0x4c] sm:$0xf]
        %v1827 = vld [vmem:[%s1 + $0x50] sm:$0xf]
        %v1828 = vld [vmem:[%s1 + $0x54] sm:$0xf]
        %v1829 = vld [vmem:[%s1 + $0x58] sm:$0xf]
        %v1830 = vld [vmem:[%s1 + $0x5c] sm:$0xf]
        %v1831 = vld [vmem:[%s1 + $0x60] sm:$0xf]
        %v1832 = vld [vmem:[%s1 + $0x64] sm:$0xf]
        %v1833 = vld [vmem:[%s1 + $0x68] sm:$0xf]
        %v1834 = vld [vmem:[%s1 + $0x6c] sm:$0xf]
        %v1835 = vld [vmem:[%s1 + $0x70] sm:$0xf]
        %v1836 = vld [vmem:[%s1 + $0x74] sm:$0xf]
        %v1837 = vld [vmem:[%s1 + $0x78] sm:$0xf]
        %v1838 = vld [vmem:[%s1 + $0x7c] sm:$0xf]
        %v1839 = vld [vmem:[%s1 + $0x80] sm:$0xf]
        %v1840 = vld [vmem:[%s1 + $0x84] sm:$0xf]
        %v1841 = vld [vmem:[%s1 + $0x88] sm:$0xf]
        %v1842 = vld [vmem:[%s1 + $0x8c] sm:$0xf]
        %v1843 = vld [vmem:[%s1 + $0x90] sm:$0xf]
        %v1844 = vld [vmem:[%s1 + $0x94] sm:$0xf]
        %v1845 = vld [vmem:[%s1 + $0x98] sm:$0xf]
        %v1846 = vld [vmem:[%s1 + $0x9c] sm:$0xf]
        %v1847 = vld [vmem:[%s1 + $0xa0] sm:$0xf]
        %v1848 = vld [vmem:[%s1 + $0xa4] sm:$0xf]
        %v1849 = vld [vmem:[%s1 + $0xa8] sm:$0xf]
        %v1850 = vld [vmem:[%s1 + $0xac] sm:$0xf]
        %v1851 = vld [vmem:[%s1 + $0xb0] sm:$0xf]
        %v1852 = vld [vmem:[%s1 + $0xb4] sm:$0xf]
        %v1853 = vld [vmem:[%s1 + $0xb8] sm:$0xf]
        %v1854 = vld [vmem:[%s1 + $0xbc] sm:$0xf]
        %v1855 = vld [vmem:[%s1 + $0xc0] sm:$0xf]
        %v1856 = vld [vmem:[%s1 + $0xc4] sm:$0xf]
        %v1857 = vld [vmem:[%s1 + $0xc8] sm:$0xf]
        %v1858 = vld [vmem:[%s1 + $0xcc] sm:$0xf]
        %v1859 = vld [vmem:[%s1 + $0xd0] sm:$0xf]
        %v1860 = vld [vmem:[%s1 + $0xd4] sm:$0xf]
        %v1861 = vld [vmem:[%s1 + $0xd8] sm:$0xf]
        %v1862 = vld [vmem:[%s1 + $0xdc] sm:$0xf]
        %v1863 = vld [vmem:[%s1 + $0xe0] sm:$0xf]
        %v1864 = vld [vmem:[%s1 + $0xe4] sm:$0xf]
        %v1865 = vld [vmem:[%s1 + $0xe8] sm:$0xf]
        %v1866 = vld [vmem:[%s1 + $0xec] sm:$0xf]
        %v1867 = vld [vmem:[%s1 + $0xf0] sm:$0xf]
        %v1868 = vld [vmem:[%s1 + $0xf4] sm:$0xf]
        %v1869 = vld [vmem:[%s1 + $0xf8] sm:$0xf]
        %v1870 = vld [vmem:[%s1 + $0xfc] sm:$0xf]
        %v1871 = vld [vmem:[%s1 + $0x100] sm:$0xf]
        %v1872 = vld [vmem:[%s1 + $0x104] sm:$0xf]
        %v1873 = vld [vmem:[%s1 + $0x108] sm:$0xf]
        %v1874 = vld [vmem:[%s1 + $0x10c] sm:$0xf]
        %v1875 = vld [vmem:[%s1 + $0x110] sm:$0xf]
        %v1876 = vld [vmem:[%s1 + $0x114] sm:$0xf]
        %v1877 = vld [vmem:[%s1 + $0x118] sm:$0xf]
        %v1878 = vld [vmem:[%s1 + $0x11c] sm:$0xf]
        %v1879 = vld [vmem:[%s1 + $0x120] sm:$0xf]
        %v1880 = vld [vmem:[%s1 + $0x124] sm:$0xf]
        %v1881 = vld [vmem:[%s1 + $0x128] sm:$0xf]
        %v1882 = vld [vmem:[%s1 + $0x12c] sm:$0xf]
        %v1883 = vld [vmem:[%s1 + $0x130] sm:$0xf]
        %v1884 = vld [vmem:[%s1 + $0x134] sm:$0xf]
        %v1885 = vld [vmem:[%s1 + $0x138] sm:$0xf]
        %v1886 = vld [vmem:[%s1 + $0x13c] sm:$0xf]
        %v1887 = vld [vmem:[%s1 + $0x140] sm:$0xf]
        %v1888 = vld [vmem:[%s1 + $0x144] sm:$0xf]
        %v1889 = vld [vmem:[%s1 + $0x148] sm:$0xf]
        %v1890 = vld [vmem:[%s1 + $0x14c] sm:$0xf]
        %v1891 = vld [vmem:[%s1 + $0x150] sm:$0xf]
        %v1892 = vld [vmem:[%s1 + $0x154] sm:$0xf]
        %v1893 = vld [vmem:[%s1 + $0x158] sm:$0xf]
        %v1894 = vld [vmem:[%s1 + $0x15c] sm:$0xf]
        %v1895 = vld [vmem:[%s1 + $0x160] sm:$0xf]
        %v1896 = vld [vmem:[%s1 + $0x164] sm:$0xf]
        %v1897 = vld [vmem:[%s1 + $0x168] sm:$0xf]
        %v1898 = vld [vmem:[%s1 + $0x16c] sm:$0xf]
        %v1899 = vld [vmem:[%s1 + $0x170] sm:$0xf]
        %v1900 = vld [vmem:[%s1 + $0x174] sm:$0xf]
        %v1901 = vld [vmem:[%s1 + $0x178] sm:$0xf]
        %v1902 = vld [vmem:[%s1 + $0x17c] sm:$0xf]
        %v1903 = vld [vmem:[%s1 + $0x180] sm:$0xf]
        %v1904 = vld [vmem:[%s1 + $0x184] sm:$0xf]
        %v1905 = vld [vmem:[%s1 + $0x188] sm:$0xf]
        %v1906 = vld [vmem:[%s1 + $0x18c] sm:$0xf]
        %v1907 = vld [vmem:[%s1 + $0x190] sm:$0xf]
        %v1908 = vld [vmem:[%s1 + $0x194] sm:$0xf]
        %v1909 = vld [vmem:[%s1 + $0x198] sm:$0xf]
        %v1910 = vld [vmem:[%s1 + $0x19c] sm:$0xf]
        %v1911 = vld [vmem:[%s1 + $0x1a0] sm:$0xf]
        %v1912 = vld [vmem:[%s1 + $0x1a4] sm:$0xf]
        %v1913 = vld [vmem:[%s1 + $0x1a8] sm:$0xf]
        %v1914 = vld [vmem:[%s1 + $0x1ac] sm:$0xf]
        %v1915 = vld [vmem:[%s1 + $0x1b0] sm:$0xf]
        %v1916 = vld [vmem:[%s1 + $0x1b4] sm:$0xf]
        %v1917 = vld [vmem:[%s1 + $0x1b8] sm:$0xf]
        %v1918 = vld [vmem:[%s1 + $0x1bc] sm:$0xf]
        %v1919 = vld [vmem:[%s1 + $0x1c0] sm:$0xf]
        %v1920 = vld [vmem:[%s1 + $0x1c4] sm:$0xf]
        %v1921 = vld [vmem:[%s1 + $0x1c8] sm:$0xf]
        %v1922 = vld [vmem:[%s1 + $0x1cc] sm:$0xf]
        %v1923 = vld [vmem:[%s1 + $0x1d0] sm:$0xf]
        %v1924 = vld [vmem:[%s1 + $0x1d4] sm:$0xf]
        %v1925 = vld [vmem:[%s1 + $0x1d8] sm:$0xf]
        %v1926 = vld [vmem:[%s1 + $0x1dc] sm:$0xf]
        %v1927 = vld [vmem:[%s1 + $0x1e0] sm:$0xf]
        %v1928 = vld [vmem:[%s1 + $0x1e4] sm:$0xf]
        %v1929 = vld [vmem:[%s1 + $0x1e8] sm:$0xf]
        %v1930 = vld [vmem:[%s1 + $0x1ec] sm:$0xf]
        %v1931 = vld [vmem:[%s1 + $0x1f0] sm:$0xf]
        %v1932 = vld [vmem:[%s1 + $0x1f4] sm:$0xf]
        %v1933 = vld [vmem:[%s1 + $0x1f8] sm:$0xf]
        %v1934 = vld [vmem:[%s1 + $0x1fc] sm:$0xf]
        %v1935 = vld [vmem:[%s1 + $0x200] sm:$0xf]
        %v1936 = vld [vmem:[%s1 + $0x204] sm:$0xf]
        %v1937 = vld [vmem:[%s1 + $0x208] sm:$0xf]
        %v1938 = vld [vmem:[%s1 + $0x20c] sm:$0xf]
        %v1939 = vld [vmem:[%s1 + $0x210] sm:$0xf]
        %v1940 = vld [vmem:[%s1 + $0x214] sm:$0xf]
        %v1941 = vld [vmem:[%s1 + $0x218] sm:$0xf]
        %v1942 = vld [vmem:[%s1 + $0x21c] sm:$0xf]
        %v1943 = vld [vmem:[%s1 + $0x220] sm:$0xf]
        %v1944 = vld [vmem:[%s1 + $0x224] sm:$0xf]
        %v1945 = vld [vmem:[%s1 + $0x228] sm:$0xf]
        %v1946 = vld [vmem:[%s1 + $0x22c] sm:$0xf]
        %v1947 = vld [vmem:[%s1 + $0x230] sm:$0xf]
        %v1948 = vld [vmem:[%s1 + $0x234] sm:$0xf]
        %v1949 = vld [vmem:[%s1 + $0x238] sm:$0xf]
        %v1950 = vld [vmem:[%s1 + $0x23c] sm:$0xf]
        %v2095 = vunpack.c.l.b16 %v1807
        %v2096 = vunpack.c.l.b16 %v1808
        %v2097 = vunpack.c.l.b16 %v1809
        %v2098 = vunpack.c.l.b16 %v1810
        %v2099 = vunpack.c.l.b16 %v1811
        %v2100 = vunpack.c.l.b16 %v1812
        %v2101 = vunpack.c.l.b16 %v1813
        %v2102 = vunpack.c.l.b16 %v1814
        %v2103 = vunpack.c.l.b16 %v1815
        %v2104 = vunpack.c.l.b16 %v1816
        %v2105 = vunpack.c.l.b16 %v1817
        %v2106 = vunpack.c.l.b16 %v1818
        %v2107 = vunpack.c.l.b16 %v1819
        %v2108 = vunpack.c.l.b16 %v1820
        %v2109 = vunpack.c.l.b16 %v1821
        %v2110 = vunpack.c.l.b16 %v1822
        %v2111 = vunpack.c.l.b16 %v1823
        %v2112 = vunpack.c.l.b16 %v1824
        %v2113 = vunpack.c.l.b16 %v1825
        %v2114 = vunpack.c.l.b16 %v1826
        %v2115 = vunpack.c.l.b16 %v1827
        %v2116 = vunpack.c.l.b16 %v1828
        %v2117 = vunpack.c.l.b16 %v1829
        %v2118 = vunpack.c.l.b16 %v1830
        %v2119 = vunpack.c.l.b16 %v1831
        %v2120 = vunpack.c.l.b16 %v1832
        %v2121 = vunpack.c.l.b16 %v1833
        %v2122 = vunpack.c.l.b16 %v1834
        %v2123 = vunpack.c.l.b16 %v1835
        %v2124 = vunpack.c.l.b16 %v1836
        %v2125 = vunpack.c.l.b16 %v1837
        %v2126 = vunpack.c.l.b16 %v1838
        %v2127 = vunpack.c.l.b16 %v1839
        %v2128 = vunpack.c.l.b16 %v1840
        %v2129 = vunpack.c.l.b16 %v1841
        %v2130 = vunpack.c.l.b16 %v1842
        %v2131 = vunpack.c.l.b16 %v1843
        %v2132 = vunpack.c.l.b16 %v1844
        %v2133 = vunpack.c.l.b16 %v1845
        %v2134 = vunpack.c.l.b16 %v1846
        %v2135 = vunpack.c.l.b16 %v1847
        %v2136 = vunpack.c.l.b16 %v1848
        %v2137 = vunpack.c.l.b16 %v1849
        %v2138 = vunpack.c.l.b16 %v1850
        %v2139 = vunpack.c.l.b16 %v1851
        %v2140 = vunpack.c.l.b16 %v1852
        %v2141 = vunpack.c.l.b16 %v1853
        %v2142 = vunpack.c.l.b16 %v1854
        %v2143 = vunpack.c.l.b16 %v1855
        %v2144 = vunpack.c.l.b16 %v1856
        %v2145 = vunpack.c.l.b16 %v1857
        %v2146 = vunpack.c.l.b16 %v1858
        %v2147 = vunpack.c.l.b16 %v1859
        %v2148 = vunpack.c.l.b16 %v1860
        %v2149 = vunpack.c.l.b16 %v1861
        %v2150 = vunpack.c.l.b16 %v1862
        %v2151 = vunpack.c.l.b16 %v1863
        %v2152 = vunpack.c.l.b16 %v1864
        %v2153 = vunpack.c.l.b16 %v1865
        %v2154 = vunpack.c.l.b16 %v1866
        %v2155 = vunpack.c.l.b16 %v1867
        %v2156 = vunpack.c.l.b16 %v1868
        %v2157 = vunpack.c.l.b16 %v1869
        %v2158 = vunpack.c.l.b16 %v1870
        %v2159 = vunpack.c.l.b16 %v1871
        %v2160 = vunpack.c.l.b16 %v1872
        %v2161 = vunpack.c.l.b16 %v1873
        %v2162 = vunpack.c.l.b16 %v1874
        %v2163 = vunpack.c.l.b16 %v1875
        %v2164 = vunpack.c.l.b16 %v1876
        %v2165 = vunpack.c.l.b16 %v1877
        %v2166 = vunpack.c.l.b16 %v1878
        %v2167 = vunpack.c.l.b16 %v1879
        %v2168 = vunpack.c.l.b16 %v1880
        %v2169 = vunpack.c.l.b16 %v1881
        %v2170 = vunpack.c.l.b16 %v1882
        %v2171 = vunpack.c.l.b16 %v1883
        %v2172 = vunpack.c.l.b16 %v1884
        %v2173 = vunpack.c.l.b16 %v1885
        %v2174 = vunpack.c.l.b16 %v1886
        %v2175 = vunpack.c.l.b16 %v1887
        %v2176 = vunpack.c.l.b16 %v1888
        %v2177 = vunpack.c.l.b16 %v1889
        %v2178 = vunpack.c.l.b16 %v1890
        %v2179 = vunpack.c.l.b16 %v1891
        %v2180 = vunpack.c.l.b16 %v1892
        %v2181 = vunpack.c.l.b16 %v1893
        %v2182 = vunpack.c.l.b16 %v1894
        %v2183 = vunpack.c.l.b16 %v1895
        %v2184 = vunpack.c.l.b16 %v1896
        %v2185 = vunpack.c.l.b16 %v1897
        %v2186 = vunpack.c.l.b16 %v1898
        %v2187 = vunpack.c.l.b16 %v1899
        %v2188 = vunpack.c.l.b16 %v1900
        %v2189 = vunpack.c.l.b16 %v1901
        %v2190 = vunpack.c.l.b16 %v1902
        %v2191 = vunpack.c.l.b16 %v1903
        %v2192 = vunpack.c.l.b16 %v1904
        %v2193 = vunpack.c.l.b16 %v1905
        %v2194 = vunpack.c.l.b16 %v1906
        %v2195 = vunpack.c.l.b16 %v1907
        %v2196 = vunpack.c.l.b16 %v1908
        %v2197 = vunpack.c.l.b16 %v1909
        %v2198 = vunpack.c.l.b16 %v1910
        %v2199 = vunpack.c.l.b16 %v1911
        %v2200 = vunpack.c.l.b16 %v1912
        %v2201 = vunpack.c.l.b16 %v1913
        %v2202 = vunpack.c.l.b16 %v1914
        %v2203 = vunpack.c.l.b16 %v1915
        %v2204 = vunpack.c.l.b16 %v1916
        %v2205 = vunpack.c.l.b16 %v1917
        %v2206 = vunpack.c.l.b16 %v1918
        %v2207 = vunpack.c.l.b16 %v1919
        %v2208 = vunpack.c.l.b16 %v1920
        %v2209 = vunpack.c.l.b16 %v1921
        %v2210 = vunpack.c.l.b16 %v1922
        %v2211 = vunpack.c.l.b16 %v1923
        %v2212 = vunpack.c.l.b16 %v1924
        %v2213 = vunpack.c.l.b16 %v1925
        %v2214 = vunpack.c.l.b16 %v1926
        %v2215 = vunpack.c.l.b16 %v1927
        %v2216 = vunpack.c.l.b16 %v1928
        %v2217 = vunpack.c.l.b16 %v1929
        %v2218 = vunpack.c.l.b16 %v1930
        %v2219 = vunpack.c.l.b16 %v1931
        %v2220 = vunpack.c.l.b16 %v1932
        %v2221 = vunpack.c.l.b16 %v1933
        %v2222 = vunpack.c.l.b16 %v1934
        %v2223 = vunpack.c.l.b16 %v1935
        %v2224 = vunpack.c.l.b16 %v1936
        %v2225 = vunpack.c.l.b16 %v1937
        %v2226 = vunpack.c.l.b16 %v1938
        %v2227 = vunpack.c.l.b16 %v1939
        %v2228 = vunpack.c.l.b16 %v1940
        %v2229 = vunpack.c.l.b16 %v1941
        %v2230 = vunpack.c.l.b16 %v1942
        %v2231 = vunpack.c.l.b16 %v1943
        %v2232 = vunpack.c.l.b16 %v1944
        %v2233 = vunpack.c.l.b16 %v1945
        %v2234 = vunpack.c.l.b16 %v1946
        %v2235 = vunpack.c.l.b16 %v1947
        %v2236 = vunpack.c.l.b16 %v1948
        %v2237 = vunpack.c.l.b16 %v1949
        %v2238 = vunpack.c.l.b16 %v1950
        %v2239 = vpack.c.b16 %v2096, %v2095
        %v2240 = vpack.c.b16 %v2098, %v2097
        %v2241 = vpack.c.b16 %v2100, %v2099
        %v2242 = vpack.c.b16 %v2102, %v2101
        %v2243 = vpack.c.b16 %v2104, %v2103
        %v2244 = vpack.c.b16 %v2106, %v2105
        %v2245 = vpack.c.b16 %v2108, %v2107
        %v2246 = vpack.c.b16 %v2110, %v2109
        %v2247 = vpack.c.b16 %v2112, %v2111
        %v2248 = vpack.c.b16 %v2114, %v2113
        %v2249 = vpack.c.b16 %v2116, %v2115
        %v2250 = vpack.c.b16 %v2118, %v2117
        %v2251 = vpack.c.b16 %v2120, %v2119
        %v2252 = vpack.c.b16 %v2122, %v2121
        %v2253 = vpack.c.b16 %v2124, %v2123
        %v2254 = vpack.c.b16 %v2126, %v2125
        %v2255 = vpack.c.b16 %v2128, %v2127
        %v2256 = vpack.c.b16 %v2130, %v2129
        %v2257 = vpack.c.b16 %v2132, %v2131
        %v2258 = vpack.c.b16 %v2134, %v2133
        %v2259 = vpack.c.b16 %v2136, %v2135
        %v2260 = vpack.c.b16 %v2138, %v2137
        %v2261 = vpack.c.b16 %v2140, %v2139
        %v2262 = vpack.c.b16 %v2142, %v2141
        %v2263 = vpack.c.b16 %v2144, %v2143
        %v2264 = vpack.c.b16 %v2146, %v2145
        %v2265 = vpack.c.b16 %v2148, %v2147
        %v2266 = vpack.c.b16 %v2150, %v2149
        %v2267 = vpack.c.b16 %v2152, %v2151
        %v2268 = vpack.c.b16 %v2154, %v2153
        %v2269 = vpack.c.b16 %v2156, %v2155
        %v2270 = vpack.c.b16 %v2158, %v2157
        %v2271 = vpack.c.b16 %v2160, %v2159
        %v2272 = vpack.c.b16 %v2162, %v2161
        %v2273 = vpack.c.b16 %v2164, %v2163
        %v2274 = vpack.c.b16 %v2166, %v2165
        %v2275 = vpack.c.b16 %v2168, %v2167
        %v2276 = vpack.c.b16 %v2170, %v2169
        %v2277 = vpack.c.b16 %v2172, %v2171
        %v2278 = vpack.c.b16 %v2174, %v2173
        %v2279 = vpack.c.b16 %v2176, %v2175
        %v2280 = vpack.c.b16 %v2178, %v2177
        %v2281 = vpack.c.b16 %v2180, %v2179
        %v2282 = vpack.c.b16 %v2182, %v2181
        %v2283 = vpack.c.b16 %v2184, %v2183
        %v2284 = vpack.c.b16 %v2186, %v2185
        %v2285 = vpack.c.b16 %v2188, %v2187
        %v2286 = vpack.c.b16 %v2190, %v2189
        %v2287 = vpack.c.b16 %v2192, %v2191
        %v2288 = vpack.c.b16 %v2194, %v2193
        %v2289 = vpack.c.b16 %v2196, %v2195
        %v2290 = vpack.c.b16 %v2198, %v2197
        %v2291 = vpack.c.b16 %v2200, %v2199
        %v2292 = vpack.c.b16 %v2202, %v2201
        %v2293 = vpack.c.b16 %v2204, %v2203
        %v2294 = vpack.c.b16 %v2206, %v2205
        %v2295 = vpack.c.b16 %v2208, %v2207
        %v2296 = vpack.c.b16 %v2210, %v2209
        %v2297 = vpack.c.b16 %v2212, %v2211
        %v2298 = vpack.c.b16 %v2214, %v2213
        %v2299 = vpack.c.b16 %v2216, %v2215
        %v2300 = vpack.c.b16 %v2218, %v2217
        %v2301 = vpack.c.b16 %v2220, %v2219
        %v2302 = vpack.c.b16 %v2222, %v2221
        %v2303 = vpack.c.b16 %v2224, %v2223
        %v2304 = vpack.c.b16 %v2226, %v2225
        %v2305 = vpack.c.b16 %v2228, %v2227
        %v2306 = vpack.c.b16 %v2230, %v2229
        %v2307 = vpack.c.b16 %v2232, %v2231
        %v2308 = vpack.c.b16 %v2234, %v2233
        %v2309 = vpack.c.b16 %v2236, %v2235
        %v2310 = vpack.c.b16 %v2238, %v2237
        %2383 = vmatpush.bf16.msra.mxu0 %v2246
        %2384 = vmatpush.bf16.msra.mxu0 %v2245
        %2385 = vmatpush.bf16.msra.mxu0 %v2244
        %2386 = vmatpush.bf16.msra.mxu0 %v2243
        %2387 = vmatpush.bf16.msra.mxu0 %v2242
        %2388 = vmatpush.bf16.msra.mxu0 %v2241
        %2389 = vmatpush.bf16.msra.mxu0 %v2240
        %2390 = vmatpush.bf16.msra.mxu0 %v2239
        %2391 = vmatmul.bf16.gmra.mxu0 %v1447
        %v2392 = vpop.f32.mrf.mxu0
        %v2393 = vadd.f32 0.0, %v2392
        %v2394 = vpop.f32.mrf.mxu0
        %v2395 = vadd.f32 0.0, %v2394
        %2396 = vmatmul.bf16.gmra.mxu0 %v1448
        %v2397 = vpop.f32.mrf.mxu0
        %v2398 = vadd.f32 0.0, %v2397
        %v2399 = vpop.f32.mrf.mxu0
        %v2400 = vadd.f32 0.0, %v2399
        %2401 = vmatmul.bf16.gmra.mxu0 %v1449
        %v2402 = vpop.f32.mrf.mxu0
        %v2403 = vadd.f32 0.0, %v2402
        %v2404 = vpop.f32.mrf.mxu0
        %v2405 = vadd.f32 0.0, %v2404
        %2406 = vmatmul.bf16.gmra.mxu0 %v1450
        %v2407 = vpop.f32.mrf.mxu0
        %v2408 = vadd.f32 0.0, %v2407
        %v2409 = vpop.f32.mrf.mxu0
        %v2410 = vadd.f32 0.0, %v2409
        %2411 = vmatmul.bf16.gmra.mxu0 %v1451
        %v2412 = vpop.f32.mrf.mxu0
        %v2413 = vadd.f32 0.0, %v2412
        %v2414 = vpop.f32.mrf.mxu0
        %v2415 = vadd.f32 0.0, %v2414
        %2416 = vmatmul.bf16.gmra.mxu0 %v1452
        %v2417 = vpop.f32.mrf.mxu0
        %v2418 = vadd.f32 0.0, %v2417
        %v2419 = vpop.f32.mrf.mxu0
        %v2420 = vadd.f32 0.0, %v2419
        %2421 = vmatmul.bf16.gmra.mxu0 %v1453
        %v2422 = vpop.f32.mrf.mxu0
        %v2423 = vadd.f32 0.0, %v2422
        %v2424 = vpop.f32.mrf.mxu0
        %v2425 = vadd.f32 0.0, %v2424
        %2426 = vmatmul.bf16.gmra.mxu0 %v1454
        %v2427 = vpop.f32.mrf.mxu0
        %v2428 = vadd.f32 0.0, %v2427
        %v2429 = vpop.f32.mrf.mxu0
        %v2430 = vadd.f32 0.0, %v2429
        %2431 = vmatmul.bf16.gmra.mxu0 %v1455
        %v2432 = vpop.f32.mrf.mxu0
        %v2433 = vadd.f32 0.0, %v2432
        %v2434 = vpop.f32.mrf.mxu0
        %v2435 = vadd.f32 0.0, %v2434
        %2436 = vmatmul.bf16.gmra.mxu0 %v1456
        %v2437 = vpop.f32.mrf.mxu0
        %v2438 = vadd.f32 0.0, %v2437
        %v2439 = vpop.f32.mrf.mxu0
        %v2440 = vadd.f32 0.0, %v2439
        %2441 = vdwg.mxu0
        %2442 = vmatpush.bf16.msra.mxu0 %v2254
        %2443 = vmatpush.bf16.msra.mxu0 %v2253
        %2444 = vmatpush.bf16.msra.mxu0 %v2252
        %2445 = vmatpush.bf16.msra.mxu0 %v2251
        %2446 = vmatpush.bf16.msra.mxu0 %v2250
        %2447 = vmatpush.bf16.msra.mxu0 %v2249
        %2448 = vmatpush.bf16.msra.mxu0 %v2248
        %2449 = vmatpush.bf16.msra.mxu0 %v2247
        %2450 = vmatmul.bf16.gmra.mxu0 %v1487
        %v2451 = vpop.f32.mrf.mxu0
        %v2452 = vadd.f32 %v2393, %v2451
        %v2453 = vpop.f32.mrf.mxu0
        %v2454 = vadd.f32 %v2395, %v2453
        %2455 = vmatmul.bf16.gmra.mxu0 %v1488
        %v2456 = vpop.f32.mrf.mxu0
        %v2457 = vadd.f32 %v2398, %v2456
        %v2458 = vpop.f32.mrf.mxu0
        %v2459 = vadd.f32 %v2400, %v2458
        %2460 = vmatmul.bf16.gmra.mxu0 %v1489
        %v2461 = vpop.f32.mrf.mxu0
        %v2462 = vadd.f32 %v2403, %v2461
        %v2463 = vpop.f32.mrf.mxu0
        %v2464 = vadd.f32 %v2405, %v2463
        %2465 = vmatmul.bf16.gmra.mxu0 %v1490
        %v2466 = vpop.f32.mrf.mxu0
        %v2467 = vadd.f32 %v2408, %v2466
        %v2468 = vpop.f32.mrf.mxu0
        %v2469 = vadd.f32 %v2410, %v2468
        %2470 = vmatmul.bf16.gmra.mxu0 %v1491
        %v2471 = vpop.f32.mrf.mxu0
        %v2472 = vadd.f32 %v2413, %v2471
        %v2473 = vpop.f32.mrf.mxu0
        %v2474 = vadd.f32 %v2415, %v2473
        %2475 = vmatmul.bf16.gmra.mxu0 %v1492
        %v2476 = vpop.f32.mrf.mxu0
        %v2477 = vadd.f32 %v2418, %v2476
        %v2478 = vpop.f32.mrf.mxu0
        %v2479 = vadd.f32 %v2420, %v2478
        %2480 = vmatmul.bf16.gmra.mxu0 %v1493
        %v2481 = vpop.f32.mrf.mxu0
        %v2482 = vadd.f32 %v2423, %v2481
        %v2483 = vpop.f32.mrf.mxu0
        %v2484 = vadd.f32 %v2425, %v2483
        %2485 = vmatmul.bf16.gmra.mxu0 %v1494
        %v2486 = vpop.f32.mrf.mxu0
        %v2487 = vadd.f32 %v2428, %v2486
        %v2488 = vpop.f32.mrf.mxu0
        %v2489 = vadd.f32 %v2430, %v2488
        %2490 = vmatmul.bf16.gmra.mxu0 %v1495
        %v2491 = vpop.f32.mrf.mxu0
        %v2492 = vadd.f32 %v2433, %v2491
        %v2493 = vpop.f32.mrf.mxu0
        %v2494 = vadd.f32 %v2435, %v2493
        %2495 = vmatmul.bf16.gmra.mxu0 %v1496
        %v2496 = vpop.f32.mrf.mxu0
        %v2497 = vadd.f32 %v2438, %v2496
        %v2498 = vpop.f32.mrf.mxu0
        %v2499 = vadd.f32 %v2440, %v2498
        %2500 = vdwg.mxu0
        %2501 = vmatpush.bf16.msra.mxu0 %v2262
        %2502 = vmatpush.bf16.msra.mxu0 %v2261
        %2503 = vmatpush.bf16.msra.mxu0 %v2260
        %2504 = vmatpush.bf16.msra.mxu0 %v2259
        %2505 = vmatpush.bf16.msra.mxu0 %v2258
        %2506 = vmatpush.bf16.msra.mxu0 %v2257
        %2507 = vmatpush.bf16.msra.mxu0 %v2256
        %2508 = vmatpush.bf16.msra.mxu0 %v2255
        %2509 = vmatmul.bf16.gmra.mxu0 %v1527
        %v2510 = vpop.f32.mrf.mxu0
        %v2511 = vadd.f32 %v2452, %v2510
        %v2512 = vpop.f32.mrf.mxu0
        %v2513 = vadd.f32 %v2454, %v2512
        %2514 = vmatmul.bf16.gmra.mxu0 %v1528
        %v2515 = vpop.f32.mrf.mxu0
        %v2516 = vadd.f32 %v2457, %v2515
        %v2517 = vpop.f32.mrf.mxu0
        %v2518 = vadd.f32 %v2459, %v2517
        %2519 = vmatmul.bf16.gmra.mxu0 %v1529
        %v2520 = vpop.f32.mrf.mxu0
        %v2521 = vadd.f32 %v2462, %v2520
        %v2522 = vpop.f32.mrf.mxu0
        %v2523 = vadd.f32 %v2464, %v2522
        %2524 = vmatmul.bf16.gmra.mxu0 %v1530
        %v2525 = vpop.f32.mrf.mxu0
        %v2526 = vadd.f32 %v2467, %v2525
        %v2527 = vpop.f32.mrf.mxu0
        %v2528 = vadd.f32 %v2469, %v2527
        %2529 = vmatmul.bf16.gmra.mxu0 %v1531
        %v2530 = vpop.f32.mrf.mxu0
        %v2531 = vadd.f32 %v2472, %v2530
        %v2532 = vpop.f32.mrf.mxu0
        %v2533 = vadd.f32 %v2474, %v2532
        %2534 = vmatmul.bf16.gmra.mxu0 %v1532
        %v2535 = vpop.f32.mrf.mxu0
        %v2536 = vadd.f32 %v2477, %v2535
        %v2537 = vpop.f32.mrf.mxu0
        %v2538 = vadd.f32 %v2479, %v2537
        %2539 = vmatmul.bf16.gmra.mxu0 %v1533
        %v2540 = vpop.f32.mrf.mxu0
        %v2541 = vadd.f32 %v2482, %v2540
        %v2542 = vpop.f32.mrf.mxu0
        %v2543 = vadd.f32 %v2484, %v2542
        %2544 = vmatmul.bf16.gmra.mxu0 %v1534
        %v2545 = vpop.f32.mrf.mxu0
        %v2546 = vadd.f32 %v2487, %v2545
        %v2547 = vpop.f32.mrf.mxu0
        %v2548 = vadd.f32 %v2489, %v2547
        %2549 = vmatmul.bf16.gmra.mxu0 %v1535
        %v2550 = vpop.f32.mrf.mxu0
        %v2551 = vadd.f32 %v2492, %v2550
        %v2552 = vpop.f32.mrf.mxu0
        %v2553 = vadd.f32 %v2494, %v2552
        %2554 = vmatmul.bf16.gmra.mxu0 %v1536
        %v2555 = vpop.f32.mrf.mxu0
        %v2556 = vadd.f32 %v2497, %v2555
        %v2557 = vpop.f32.mrf.mxu0
        %v2558 = vadd.f32 %v2499, %v2557
        %2559 = vdwg.mxu0
        %2560 = vmatpush.bf16.msra.mxu0 %v2270
        %2561 = vmatpush.bf16.msra.mxu0 %v2269
        %2562 = vmatpush.bf16.msra.mxu0 %v2268
        %2563 = vmatpush.bf16.msra.mxu0 %v2267
        %2564 = vmatpush.bf16.msra.mxu0 %v2266
        %2565 = vmatpush.bf16.msra.mxu0 %v2265
        %2566 = vmatpush.bf16.msra.mxu0 %v2264
        %2567 = vmatpush.bf16.msra.mxu0 %v2263
        %2568 = vmatmul.bf16.gmra.mxu0 %v1577
        %v2569 = vpop.f32.mrf.mxu0
        %v2570 = vadd.f32 %v2511, %v2569
        %v2571 = vpop.f32.mrf.mxu0
        %v2572 = vadd.f32 %v2513, %v2571
        %2573 = vmatmul.bf16.gmra.mxu0 %v1578
        %v2574 = vpop.f32.mrf.mxu0
        %v2575 = vadd.f32 %v2516, %v2574
        %v2576 = vpop.f32.mrf.mxu0
        %v2577 = vadd.f32 %v2518, %v2576
        %2578 = vmatmul.bf16.gmra.mxu0 %v1579
        %v2579 = vpop.f32.mrf.mxu0
        %v2580 = vadd.f32 %v2521, %v2579
        %v2581 = vpop.f32.mrf.mxu0
        %v2582 = vadd.f32 %v2523, %v2581
        %2583 = vmatmul.bf16.gmra.mxu0 %v1580
        %v2584 = vpop.f32.mrf.mxu0
        %v2585 = vadd.f32 %v2526, %v2584
        %v2586 = vpop.f32.mrf.mxu0
        %v2587 = vadd.f32 %v2528, %v2586
        %2588 = vmatmul.bf16.gmra.mxu0 %v1581
        %v2589 = vpop.f32.mrf.mxu0
        %v2590 = vadd.f32 %v2531, %v2589
        %v2591 = vpop.f32.mrf.mxu0
        %v2592 = vadd.f32 %v2533, %v2591
        %2593 = vmatmul.bf16.gmra.mxu0 %v1582
        %v2594 = vpop.f32.mrf.mxu0
        %v2595 = vadd.f32 %v2536, %v2594
        %v2596 = vpop.f32.mrf.mxu0
        %v2597 = vadd.f32 %v2538, %v2596
        %2598 = vmatmul.bf16.gmra.mxu0 %v1583
        %v2599 = vpop.f32.mrf.mxu0
        %v2600 = vadd.f32 %v2541, %v2599
        %v2601 = vpop.f32.mrf.mxu0
        %v2602 = vadd.f32 %v2543, %v2601
        %2603 = vmatmul.bf16.gmra.mxu0 %v1584
        %v2604 = vpop.f32.mrf.mxu0
        %v2605 = vadd.f32 %v2546, %v2604
        %v2606 = vpop.f32.mrf.mxu0
        %v2607 = vadd.f32 %v2548, %v2606
        %2608 = vmatmul.bf16.gmra.mxu0 %v1585
        %v2609 = vpop.f32.mrf.mxu0
        %v2610 = vadd.f32 %v2551, %v2609
        %v2611 = vpop.f32.mrf.mxu0
        %v2612 = vadd.f32 %v2553, %v2611
        %2613 = vmatmul.bf16.gmra.mxu0 %v1586
        %v2614 = vpop.f32.mrf.mxu0
        %v2615 = vadd.f32 %v2556, %v2614
        %v2616 = vpop.f32.mrf.mxu0
        %v2617 = vadd.f32 %v2558, %v2616
        %2618 = vdwg.mxu0
        %2619 = vmatpush.bf16.msra.mxu0 %v2278
        %2620 = vmatpush.bf16.msra.mxu0 %v2277
        %2621 = vmatpush.bf16.msra.mxu0 %v2276
        %2622 = vmatpush.bf16.msra.mxu0 %v2275
        %2623 = vmatpush.bf16.msra.mxu0 %v2274
        %2624 = vmatpush.bf16.msra.mxu0 %v2273
        %2625 = vmatpush.bf16.msra.mxu0 %v2272
        %2626 = vmatpush.bf16.msra.mxu0 %v2271
        %2627 = vmatmul.bf16.gmra.mxu0 %v1617
        %v2628 = vpop.f32.mrf.mxu0
        %v2629 = vadd.f32 %v2570, %v2628
        %v2630 = vpop.f32.mrf.mxu0
        %v2631 = vadd.f32 %v2572, %v2630
        %2632 = vmatmul.bf16.gmra.mxu0 %v1618
        %v2633 = vpop.f32.mrf.mxu0
        %v2634 = vadd.f32 %v2575, %v2633
        %v2635 = vpop.f32.mrf.mxu0
        %v2636 = vadd.f32 %v2577, %v2635
        %2637 = vmatmul.bf16.gmra.mxu0 %v1619
        %v2638 = vpop.f32.mrf.mxu0
        %v2639 = vadd.f32 %v2580, %v2638
        %v2640 = vpop.f32.mrf.mxu0
        %v2641 = vadd.f32 %v2582, %v2640
        %2642 = vmatmul.bf16.gmra.mxu0 %v1620
        %v2643 = vpop.f32.mrf.mxu0
        %v2644 = vadd.f32 %v2585, %v2643
        %v2645 = vpop.f32.mrf.mxu0
        %v2646 = vadd.f32 %v2587, %v2645
        %2647 = vmatmul.bf16.gmra.mxu0 %v1621
        %v2648 = vpop.f32.mrf.mxu0
        %v2649 = vadd.f32 %v2590, %v2648
        %v2650 = vpop.f32.mrf.mxu0
        %v2651 = vadd.f32 %v2592, %v2650
        %2652 = vmatmul.bf16.gmra.mxu0 %v1622
        %v2653 = vpop.f32.mrf.mxu0
        %v2654 = vadd.f32 %v2595, %v2653
        %v2655 = vpop.f32.mrf.mxu0
        %v2656 = vadd.f32 %v2597, %v2655
        %2657 = vmatmul.bf16.gmra.mxu0 %v1623
        %v2658 = vpop.f32.mrf.mxu0
        %v2659 = vadd.f32 %v2600, %v2658
        %v2660 = vpop.f32.mrf.mxu0
        %v2661 = vadd.f32 %v2602, %v2660
        %2662 = vmatmul.bf16.gmra.mxu0 %v1624
        %v2663 = vpop.f32.mrf.mxu0
        %v2664 = vadd.f32 %v2605, %v2663
        %v2665 = vpop.f32.mrf.mxu0
        %v2666 = vadd.f32 %v2607, %v2665
        %2667 = vmatmul.bf16.gmra.mxu0 %v1625
        %v2668 = vpop.f32.mrf.mxu0
        %v2669 = vadd.f32 %v2610, %v2668
        %v2670 = vpop.f32.mrf.mxu0
        %v2671 = vadd.f32 %v2612, %v2670
        %2672 = vmatmul.bf16.gmra.mxu0 %v1626
        %v2673 = vpop.f32.mrf.mxu0
        %v2674 = vadd.f32 %v2615, %v2673
        %v2675 = vpop.f32.mrf.mxu0
        %v2676 = vadd.f32 %v2617, %v2675
        %2677 = vdwg.mxu0
        %2678 = vmatpush.bf16.msra.mxu0 %v2286
        %2679 = vmatpush.bf16.msra.mxu0 %v2285
        %2680 = vmatpush.bf16.msra.mxu0 %v2284
        %2681 = vmatpush.bf16.msra.mxu0 %v2283
        %2682 = vmatpush.bf16.msra.mxu0 %v2282
        %2683 = vmatpush.bf16.msra.mxu0 %v2281
        %2684 = vmatpush.bf16.msra.mxu0 %v2280
        %2685 = vmatpush.bf16.msra.mxu0 %v2279
        %2686 = vmatmul.bf16.gmra.mxu0 %v1657
        %v2687 = vpop.f32.mrf.mxu0
        %v2688 = vadd.f32 %v2629, %v2687
        %v2689 = vpop.f32.mrf.mxu0
        %v2690 = vadd.f32 %v2631, %v2689
        %2691 = vmatmul.bf16.gmra.mxu0 %v1658
        %v2692 = vpop.f32.mrf.mxu0
        %v2693 = vadd.f32 %v2634, %v2692
        %v2694 = vpop.f32.mrf.mxu0
        %v2695 = vadd.f32 %v2636, %v2694
        %2696 = vmatmul.bf16.gmra.mxu0 %v1659
        %v2697 = vpop.f32.mrf.mxu0
        %v2698 = vadd.f32 %v2639, %v2697
        %v2699 = vpop.f32.mrf.mxu0
        %v2700 = vadd.f32 %v2641, %v2699
        %2701 = vmatmul.bf16.gmra.mxu0 %v1660
        %v2702 = vpop.f32.mrf.mxu0
        %v2703 = vadd.f32 %v2644, %v2702
        %v2704 = vpop.f32.mrf.mxu0
        %v2705 = vadd.f32 %v2646, %v2704
        %2706 = vmatmul.bf16.gmra.mxu0 %v1661
        %v2707 = vpop.f32.mrf.mxu0
        %v2708 = vadd.f32 %v2649, %v2707
        %v2709 = vpop.f32.mrf.mxu0
        %v2710 = vadd.f32 %v2651, %v2709
        %2711 = vmatmul.bf16.gmra.mxu0 %v1662
        %v2712 = vpop.f32.mrf.mxu0
        %v2713 = vadd.f32 %v2654, %v2712
        %v2714 = vpop.f32.mrf.mxu0
        %v2715 = vadd.f32 %v2656, %v2714
        %2716 = vmatmul.bf16.gmra.mxu0 %v1663
        %v2717 = vpop.f32.mrf.mxu0
        %v2718 = vadd.f32 %v2659, %v2717
        %v2719 = vpop.f32.mrf.mxu0
        %v2720 = vadd.f32 %v2661, %v2719
        %2721 = vmatmul.bf16.gmra.mxu0 %v1664
        %v2722 = vpop.f32.mrf.mxu0
        %v2723 = vadd.f32 %v2664, %v2722
        %v2724 = vpop.f32.mrf.mxu0
        %v2725 = vadd.f32 %v2666, %v2724
        %2726 = vmatmul.bf16.gmra.mxu0 %v1665
        %v2727 = vpop.f32.mrf.mxu0
        %v2728 = vadd.f32 %v2669, %v2727
        %v2729 = vpop.f32.mrf.mxu0
        %v2730 = vadd.f32 %v2671, %v2729
        %2731 = vmatmul.bf16.gmra.mxu0 %v1666
        %v2732 = vpop.f32.mrf.mxu0
        %v2733 = vadd.f32 %v2674, %v2732
        %v2734 = vpop.f32.mrf.mxu0
        %v2735 = vadd.f32 %v2676, %v2734
        %2736 = vdwg.mxu0
        %2737 = vmatpush.bf16.msra.mxu0 %v2294
        %2738 = vmatpush.bf16.msra.mxu0 %v2293
        %2739 = vmatpush.bf16.msra.mxu0 %v2292
        %2740 = vmatpush.bf16.msra.mxu0 %v2291
        %2741 = vmatpush.bf16.msra.mxu0 %v2290
        %2742 = vmatpush.bf16.msra.mxu0 %v2289
        %2743 = vmatpush.bf16.msra.mxu0 %v2288
        %2744 = vmatpush.bf16.msra.mxu0 %v2287
        %2745 = vmatmul.bf16.gmra.mxu0 %v1707
        %v2746 = vpop.f32.mrf.mxu0
        %v2747 = vadd.f32 %v2688, %v2746
        %v2748 = vpop.f32.mrf.mxu0
        %v2749 = vadd.f32 %v2690, %v2748
        %2750 = vmatmul.bf16.gmra.mxu0 %v1708
        %v2751 = vpop.f32.mrf.mxu0
        %v2752 = vadd.f32 %v2693, %v2751
        %v2753 = vpop.f32.mrf.mxu0
        %v2754 = vadd.f32 %v2695, %v2753
        %2755 = vmatmul.bf16.gmra.mxu0 %v1709
        %v2756 = vpop.f32.mrf.mxu0
        %v2757 = vadd.f32 %v2698, %v2756
        %v2758 = vpop.f32.mrf.mxu0
        %v2759 = vadd.f32 %v2700, %v2758
        %2760 = vmatmul.bf16.gmra.mxu0 %v1710
        %v2761 = vpop.f32.mrf.mxu0
        %v2762 = vadd.f32 %v2703, %v2761
        %v2763 = vpop.f32.mrf.mxu0
        %v2764 = vadd.f32 %v2705, %v2763
        %2765 = vmatmul.bf16.gmra.mxu0 %v1711
        %v2766 = vpop.f32.mrf.mxu0
        %v2767 = vadd.f32 %v2708, %v2766
        %v2768 = vpop.f32.mrf.mxu0
        %v2769 = vadd.f32 %v2710, %v2768
        %2770 = vmatmul.bf16.gmra.mxu0 %v1712
        %v2771 = vpop.f32.mrf.mxu0
        %v2772 = vadd.f32 %v2713, %v2771
        %v2773 = vpop.f32.mrf.mxu0
        %v2774 = vadd.f32 %v2715, %v2773
        %2775 = vmatmul.bf16.gmra.mxu0 %v1713
        %v2776 = vpop.f32.mrf.mxu0
        %v2777 = vadd.f32 %v2718, %v2776
        %v2778 = vpop.f32.mrf.mxu0
        %v2779 = vadd.f32 %v2720, %v2778
        %2780 = vmatmul.bf16.gmra.mxu0 %v1714
        %v2781 = vpop.f32.mrf.mxu0
        %v2782 = vadd.f32 %v2723, %v2781
        %v2783 = vpop.f32.mrf.mxu0
        %v2784 = vadd.f32 %v2725, %v2783
        %2785 = vmatmul.bf16.gmra.mxu0 %v1715
        %v2786 = vpop.f32.mrf.mxu0
        %v2787 = vadd.f32 %v2728, %v2786
        %v2788 = vpop.f32.mrf.mxu0
        %v2789 = vadd.f32 %v2730, %v2788
        %2790 = vmatmul.bf16.gmra.mxu0 %v1716
        %v2791 = vpop.f32.mrf.mxu0
        %v2792 = vadd.f32 %v2733, %v2791
        %v2793 = vpop.f32.mrf.mxu0
        %v2794 = vadd.f32 %v2735, %v2793
        %2795 = vdwg.mxu0
        %2796 = vmatpush.bf16.msra.mxu0 %v2302
        %2797 = vmatpush.bf16.msra.mxu0 %v2301
        %2798 = vmatpush.bf16.msra.mxu0 %v2300
        %2799 = vmatpush.bf16.msra.mxu0 %v2299
        %2800 = vmatpush.bf16.msra.mxu0 %v2298
        %2801 = vmatpush.bf16.msra.mxu0 %v2297
        %2802 = vmatpush.bf16.msra.mxu0 %v2296
        %2803 = vmatpush.bf16.msra.mxu0 %v2295
        %2804 = vmatmul.bf16.gmra.mxu0 %v1747
        %v2805 = vpop.f32.mrf.mxu0
        %v2806 = vadd.f32 %v2747, %v2805
        %v2807 = vpop.f32.mrf.mxu0
        %v2808 = vadd.f32 %v2749, %v2807
        %2809 = vmatmul.bf16.gmra.mxu0 %v1748
        %v2810 = vpop.f32.mrf.mxu0
        %v2811 = vadd.f32 %v2752, %v2810
        %v2812 = vpop.f32.mrf.mxu0
        %v2813 = vadd.f32 %v2754, %v2812
        %2814 = vmatmul.bf16.gmra.mxu0 %v1749
        %v2815 = vpop.f32.mrf.mxu0
        %v2816 = vadd.f32 %v2757, %v2815
        %v2817 = vpop.f32.mrf.mxu0
        %v2818 = vadd.f32 %v2759, %v2817
        %2819 = vmatmul.bf16.gmra.mxu0 %v1750
        %v2820 = vpop.f32.mrf.mxu0
        %v2821 = vadd.f32 %v2762, %v2820
        %v2822 = vpop.f32.mrf.mxu0
        %v2823 = vadd.f32 %v2764, %v2822
        %2824 = vmatmul.bf16.gmra.mxu0 %v1751
        %v2825 = vpop.f32.mrf.mxu0
        %v2826 = vadd.f32 %v2767, %v2825
        %v2827 = vpop.f32.mrf.mxu0
        %v2828 = vadd.f32 %v2769, %v2827
        %2829 = vmatmul.bf16.gmra.mxu0 %v1752
        %v2830 = vpop.f32.mrf.mxu0
        %v2831 = vadd.f32 %v2772, %v2830
        %v2832 = vpop.f32.mrf.mxu0
        %v2833 = vadd.f32 %v2774, %v2832
        %2834 = vmatmul.bf16.gmra.mxu0 %v1753
        %v2835 = vpop.f32.mrf.mxu0
        %v2836 = vadd.f32 %v2777, %v2835
        %v2837 = vpop.f32.mrf.mxu0
        %v2838 = vadd.f32 %v2779, %v2837
        %2839 = vmatmul.bf16.gmra.mxu0 %v1754
        %v2840 = vpop.f32.mrf.mxu0
        %v2841 = vadd.f32 %v2782, %v2840
        %v2842 = vpop.f32.mrf.mxu0
        %v2843 = vadd.f32 %v2784, %v2842
        %2844 = vmatmul.bf16.gmra.mxu0 %v1755
        %v2845 = vpop.f32.mrf.mxu0
        %v2846 = vadd.f32 %v2787, %v2845
        %v2847 = vpop.f32.mrf.mxu0
        %v2848 = vadd.f32 %v2789, %v2847
        %2849 = vmatmul.bf16.gmra.mxu0 %v1756
        %v2850 = vpop.f32.mrf.mxu0
        %v2851 = vadd.f32 %v2792, %v2850
        %v2852 = vpop.f32.mrf.mxu0
        %v2853 = vadd.f32 %v2794, %v2852
        %2854 = vdwg.mxu0
        %2855 = vmatpush.bf16.msra.mxu0 %v2310
        %2856 = vmatpush.bf16.msra.mxu0 %v2309
        %2857 = vmatpush.bf16.msra.mxu0 %v2308
        %2858 = vmatpush.bf16.msra.mxu0 %v2307
        %2859 = vmatpush.bf16.msra.mxu0 %v2306
        %2860 = vmatpush.bf16.msra.mxu0 %v2305
        %2861 = vmatpush.bf16.msra.mxu0 %v2304
        %2862 = vmatpush.bf16.msra.mxu0 %v2303
        %2863 = vmatmul.bf16.gmra.mxu0 %v1787
        %v2864 = vpop.f32.mrf.mxu0
        %v2865 = vadd.f32 %v2806, %v2864
        %v2866 = vpop.f32.mrf.mxu0
        %v2867 = vadd.f32 %v2808, %v2866
        %2868 = vmatmul.bf16.gmra.mxu0 %v1788
        %v2869 = vpop.f32.mrf.mxu0
        %v2870 = vadd.f32 %v2811, %v2869
        %v2871 = vpop.f32.mrf.mxu0
        %v2872 = vadd.f32 %v2813, %v2871
        %2873 = vmatmul.bf16.gmra.mxu0 %v1789
        %v2874 = vpop.f32.mrf.mxu0
        %v2875 = vadd.f32 %v2816, %v2874
        %v2876 = vpop.f32.mrf.mxu0
        %v2877 = vadd.f32 %v2818, %v2876
        %2878 = vmatmul.bf16.gmra.mxu0 %v1790
        %v2879 = vpop.f32.mrf.mxu0
        %v2880 = vadd.f32 %v2821, %v2879
        %v2881 = vpop.f32.mrf.mxu0
        %v2882 = vadd.f32 %v2823, %v2881
        %2883 = vmatmul.bf16.gmra.mxu0 %v1791
        %v2884 = vpop.f32.mrf.mxu0
        %v2885 = vadd.f32 %v2826, %v2884
        %v2886 = vpop.f32.mrf.mxu0
        %v2887 = vadd.f32 %v2828, %v2886
        %2888 = vmatmul.bf16.gmra.mxu0 %v1792
        %v2889 = vpop.f32.mrf.mxu0
        %v2890 = vadd.f32 %v2831, %v2889
        %v2891 = vpop.f32.mrf.mxu0
        %v2892 = vadd.f32 %v2833, %v2891
        %2893 = vmatmul.bf16.gmra.mxu0 %v1793
        %v2894 = vpop.f32.mrf.mxu0
        %v2895 = vadd.f32 %v2836, %v2894
        %v2896 = vpop.f32.mrf.mxu0
        %v2897 = vadd.f32 %v2838, %v2896
        %2898 = vmatmul.bf16.gmra.mxu0 %v1794
        %v2899 = vpop.f32.mrf.mxu0
        %v2900 = vadd.f32 %v2841, %v2899
        %v2901 = vpop.f32.mrf.mxu0
        %v2902 = vadd.f32 %v2843, %v2901
        %2903 = vmatmul.bf16.gmra.mxu0 %v1795
        %v2904 = vpop.f32.mrf.mxu0
        %v2905 = vadd.f32 %v2846, %v2904
        %v2906 = vpop.f32.mrf.mxu0
        %v2907 = vadd.f32 %v2848, %v2906
        %2908 = vmatmul.bf16.gmra.mxu0 %v1796
        %v2909 = vpop.f32.mrf.mxu0
        %v2910 = vadd.f32 %v2851, %v2909
        %v2911 = vpop.f32.mrf.mxu0
        %v2912 = vadd.f32 %v2853, %v2911
        %2913 = vdwg.mxu0
        %v2914 = vld [vmem:[%s4] sm:$0x1]
        %v2915 = vperm.slane %v2914, 0
        %v2916 = vmul.f32 %v2865, %v2915
        %v2917 = vmul.f32 %v2867, %v2915
        %v2918 = vmul.f32 %v2870, %v2915
        %v2919 = vmul.f32 %v2872, %v2915
        %v2920 = vmul.f32 %v2875, %v2915
        %v2921 = vmul.f32 %v2877, %v2915
        %v2922 = vmul.f32 %v2880, %v2915
        %v2923 = vmul.f32 %v2882, %v2915
        %v2924 = vmul.f32 %v2885, %v2915
        %v2925 = vmul.f32 %v2887, %v2915
        %v2926 = vmul.f32 %v2890, %v2915
        %v2927 = vmul.f32 %v2892, %v2915
        %v2928 = vmul.f32 %v2895, %v2915
        %v2929 = vmul.f32 %v2897, %v2915
        %v2930 = vmul.f32 %v2900, %v2915
        %v2931 = vmul.f32 %v2902, %v2915
        %v2932 = vmul.f32 %v2905, %v2915
        %v2933 = vmul.f32 %v2907, %v2915
        %v2934 = vmul.f32 %v2910, %v2915
        %v2935 = vmul.f32 %v2912, %v2915
        %v2936 = vld [vmem:[%s4 + $0x1] sm:$0x1]
        %v2937 = vperm.slane %v2936, 0
        %v2938 = vadd.f32 %v2916, %v2937
        %v2939 = vadd.f32 %v2917, %v2937
        %v2940 = vadd.f32 %v2918, %v2937
        %v2941 = vadd.f32 %v2919, %v2937
        %v2942 = vadd.f32 %v2920, %v2937
        %v2943 = vadd.f32 %v2921, %v2937
        %v2944 = vadd.f32 %v2922, %v2937
        %v2945 = vadd.f32 %v2923, %v2937
        %v2946 = vadd.f32 %v2924, %v2937
        %v2947 = vadd.f32 %v2925, %v2937
        %v2948 = vadd.f32 %v2926, %v2937
        %v2949 = vadd.f32 %v2927, %v2937
        %v2950 = vadd.f32 %v2928, %v2937
        %v2951 = vadd.f32 %v2929, %v2937
        %v2952 = vadd.f32 %v2930, %v2937
        %v2953 = vadd.f32 %v2931, %v2937
        %v2954 = vadd.f32 %v2932, %v2937
        %v2955 = vadd.f32 %v2933, %v2937
        %v2956 = vadd.f32 %v2934, %v2937
        %v2957 = vadd.f32 %v2935, %v2937
        %v2958 = vmax.f32 %v2938, 0.0
        %v2959 = vmax.f32 %v2939, 0.0
        %v2960 = vmax.f32 %v2940, 0.0
        %v2961 = vmax.f32 %v2941, 0.0
        %v2962 = vmax.f32 %v2942, 0.0
        %v2963 = vmax.f32 %v2943, 0.0
        %v2964 = vmax.f32 %v2944, 0.0
        %v2965 = vmax.f32 %v2945, 0.0
        %v2966 = vmax.f32 %v2946, 0.0
        %v2967 = vmax.f32 %v2947, 0.0
        %v2968 = vmax.f32 %v2948, 0.0
        %v2969 = vmax.f32 %v2949, 0.0
        %v2970 = vmax.f32 %v2950, 0.0
        %v2971 = vmax.f32 %v2951, 0.0
        %v2972 = vmax.f32 %v2952, 0.0
        %v2973 = vmax.f32 %v2953, 0.0
        %v2974 = vmax.f32 %v2954, 0.0
        %v2975 = vmax.f32 %v2955, 0.0
        %v2976 = vmax.f32 %v2956, 0.0
        %v2977 = vmax.f32 %v2957, 0.0
        %s2978 = smul.u32 %s25, 8
        %s2979 = ssub.s32 %s2978, 1
        %v2980 = vstv %s2979
        %v2981 = vadd.s32 %v2980, 1
        %v2982 = vadd.s32 %v2980, 2
        %v2983 = vadd.s32 %v2980, 3
        %v2984 = vadd.s32 %v2980, 4
        %v2985 = vadd.s32 %v2980, 5
        %v2986 = vadd.s32 %v2980, 6
        %v2987 = vadd.s32 %v2980, 7
        %v2988 = vadd.s32 %v2980, 8
        %v2989 = vadd.s32 %v2980, 9
        %vm2990 = vcmp.ge.s32.totalorder %v2980, 0
        %vm2991 = vcmp.ge.s32.totalorder %v2981, 0
        %vm2992 = vcmp.ge.s32.totalorder %v2982, 0
        %vm2993 = vcmp.ge.s32.totalorder %v2983, 0
        %vm2994 = vcmp.ge.s32.totalorder %v2984, 0
        %vm2995 = vcmp.ge.s32.totalorder %v2985, 0
        %vm2996 = vcmp.ge.s32.totalorder %v2986, 0
        %vm2997 = vcmp.ge.s32.totalorder %v2987, 0
        %vm2998 = vcmp.ge.s32.totalorder %v2988, 0
        %vm2999 = vcmp.ge.s32.totalorder %v2989, 0
        %vm3000 = vcmp.lt.s32.totalorder %v2980, 16
        %vm3001 = vcmp.lt.s32.totalorder %v2981, 16
        %vm3002 = vcmp.lt.s32.totalorder %v2982, 16
        %vm3003 = vcmp.lt.s32.totalorder %v2983, 16
        %vm3004 = vcmp.lt.s32.totalorder %v2984, 16
        %vm3005 = vcmp.lt.s32.totalorder %v2985, 16
        %vm3006 = vcmp.lt.s32.totalorder %v2986, 16
        %vm3007 = vcmp.lt.s32.totalorder %v2987, 16
        %vm3008 = vcmp.lt.s32.totalorder %v2988, 16
        %vm3009 = vcmp.lt.s32.totalorder %v2989, 16
        %vm3010 = vmand %vm2990, %vm3000
        %vm3011 = vmand %vm2991, %vm3001
        %vm3012 = vmand %vm2992, %vm3002
        %vm3013 = vmand %vm2993, %vm3003
        %vm3014 = vmand %vm2994, %vm3004
        %vm3015 = vmand %vm2995, %vm3005
        %vm3016 = vmand %vm2996, %vm3006
        %vm3017 = vmand %vm2997, %vm3007
        %vm3018 = vmand %vm2998, %vm3008
        %vm3019 = vmand %vm2999, %vm3009
        %v3020 = vsel %vm3010, %v2958, 0.0
        %v3021 = vsel %vm3010, %v2959, 0.0
        %v3022 = vsel %vm3011, %v2960, 0.0
        %v3023 = vsel %vm3011, %v2961, 0.0
        %v3024 = vsel %vm3012, %v2962, 0.0
        %v3025 = vsel %vm3012, %v2963, 0.0
        %v3026 = vsel %vm3013, %v2964, 0.0
        %v3027 = vsel %vm3013, %v2965, 0.0
        %v3028 = vsel %vm3014, %v2966, 0.0
        %v3029 = vsel %vm3014, %v2967, 0.0
        %v3030 = vsel %vm3015, %v2968, 0.0
        %v3031 = vsel %vm3015, %v2969, 0.0
        %v3032 = vsel %vm3016, %v2970, 0.0
        %v3033 = vsel %vm3016, %v2971, 0.0
        %v3034 = vsel %vm3017, %v2972, 0.0
        %v3035 = vsel %vm3017, %v2973, 0.0
        %v3036 = vsel %vm3018, %v2974, 0.0
        %v3037 = vsel %vm3018, %v2975, 0.0
        %v3038 = vsel %vm3019, %v2976, 0.0
        %v3039 = vsel %vm3019, %v2977, 0.0
        %3040 = vst [vmem:[#allocation2] sm:$0xff] 0.0
        %3041 = vst [vmem:[#allocation2 + $0x8] sm:$0xff] 0.0
        %3042 = vst [vmem:[#allocation2 + $0x10] sm:$0x3] 0.0
        %3043 = vst [vmem:[#allocation2 + $0x18] sm:$0xff] 0.0
        %3044 = vst [vmem:[#allocation2 + $0x20] sm:$0xff] 0.0
        %3045 = vst [vmem:[#allocation2 + $0x28] sm:$0x3] 0.0
        %3046 = vst [vmem:[#allocation2 + $0x30] sm:$0xff] 0.0
        %3047 = vst [vmem:[#allocation2 + $0x38] sm:$0xff] 0.0
        %3048 = vst [vmem:[#allocation2 + $0x40] sm:$0x3] 0.0
        %3049 = vst [vmem:[#allocation2 + $0x48] sm:$0xff] 0.0
        %3050 = vst [vmem:[#allocation2 + $0x50] sm:$0xff] 0.0
        %3051 = vst [vmem:[#allocation2 + $0x58] sm:$0x3] 0.0
        %3052 = vst [vmem:[#allocation2 + $0x60] sm:$0xff] 0.0
        %3053 = vst [vmem:[#allocation2 + $0x68] sm:$0xff] 0.0
        %3054 = vst [vmem:[#allocation2 + $0x70] sm:$0x3] 0.0
        %3055 = vst [vmem:[#allocation2 + $0x78] sm:$0xff] 0.0
        %3056 = vst [vmem:[#allocation2 + $0x80] sm:$0xff] 0.0
        %3057 = vst [vmem:[#allocation2 + $0x88] sm:$0x3] 0.0
        %3058 = vst [vmem:[#allocation2 + $0x90] sm:$0xff] 0.0
        %3059 = vst [vmem:[#allocation2 + $0x98] sm:$0xff] 0.0
        %3060 = vst [vmem:[#allocation2 + $0xa0] sm:$0x3] 0.0
        %3061 = vst [vmem:[#allocation2 + $0xa8] sm:$0xff] 0.0
        %3062 = vst [vmem:[#allocation2 + $0xb0] sm:$0xff] 0.0
        %3063 = vst [vmem:[#allocation2 + $0xb8] sm:$0x3] 0.0
        %3064 = vst [vmem:[#allocation2 + $0xc0] sm:$0xff] 0.0
        %3065 = vst [vmem:[#allocation2 + $0xc8] sm:$0xff] 0.0
        %3066 = vst [vmem:[#allocation2 + $0xd0] sm:$0x3] 0.0
        %3067 = vst [vmem:[#allocation2 + $0xd8] sm:$0xff] 0.0
        %3068 = vst [vmem:[#allocation2 + $0xe0] sm:$0xff] 0.0
        %3069 = vst [vmem:[#allocation2 + $0xe8] sm:$0x3] 0.0
        %3070 = vst [vmem:[#allocation2 + $0x1] sm:$0xff] %v3020
        %3071 = vst [vmem:[#allocation2 + $0x9] sm:$0xff] %v3021
        %3072 = vst [vmem:[#allocation2 + $0x19] sm:$0xff] %v3022
        %3073 = vst [vmem:[#allocation2 + $0x21] sm:$0xff] %v3023
        %3074 = vst [vmem:[#allocation2 + $0x31] sm:$0xff] %v3024
        %3075 = vst [vmem:[#allocation2 + $0x39] sm:$0xff] %v3025
        %3076 = vst [vmem:[#allocation2 + $0x49] sm:$0xff] %v3026
        %3077 = vst [vmem:[#allocation2 + $0x51] sm:$0xff] %v3027
        %3078 = vst [vmem:[#allocation2 + $0x61] sm:$0xff] %v3028
        %3079 = vst [vmem:[#allocation2 + $0x69] sm:$0xff] %v3029
        %3080 = vst [vmem:[#allocation2 + $0x79] sm:$0xff] %v3030
        %3081 = vst [vmem:[#allocation2 + $0x81] sm:$0xff] %v3031
        %3082 = vst [vmem:[#allocation2 + $0x91] sm:$0xff] %v3032
        %3083 = vst [vmem:[#allocation2 + $0x99] sm:$0xff] %v3033
        %3084 = vst [vmem:[#allocation2 + $0xa9] sm:$0xff] %v3034
        %3085 = vst [vmem:[#allocation2 + $0xb1] sm:$0xff] %v3035
        %3086 = vst [vmem:[#allocation2 + $0xc1] sm:$0xff] %v3036
        %3087 = vst [vmem:[#allocation2 + $0xc9] sm:$0xff] %v3037
        %3088 = vst [vmem:[#allocation2 + $0xd9] sm:$0xff] %v3038
        %3089 = vst [vmem:[#allocation2 + $0xe1] sm:$0xff] %v3039
        %v3090 = vld [vmem:[#allocation2] sm:$0xff]
        %v3091 = vld [vmem:[#allocation2 + $0x8] sm:$0xff]
        %v3092 = vld [vmem:[#allocation2 + $0x18] sm:$0xff]
        %v3093 = vld [vmem:[#allocation2 + $0x20] sm:$0xff]
        %v3094 = vld [vmem:[#allocation2 + $0x30] sm:$0xff]
        %v3095 = vld [vmem:[#allocation2 + $0x38] sm:$0xff]
        %v3096 = vld [vmem:[#allocation2 + $0x48] sm:$0xff]
        %v3097 = vld [vmem:[#allocation2 + $0x50] sm:$0xff]
        %v3098 = vld [vmem:[#allocation2 + $0x60] sm:$0xff]
        %v3099 = vld [vmem:[#allocation2 + $0x68] sm:$0xff]
        %v3100 = vld [vmem:[#allocation2 + $0x78] sm:$0xff]
        %v3101 = vld [vmem:[#allocation2 + $0x80] sm:$0xff]
        %v3102 = vld [vmem:[#allocation2 + $0x90] sm:$0xff]
        %v3103 = vld [vmem:[#allocation2 + $0x98] sm:$0xff]
        %v3104 = vld [vmem:[#allocation2 + $0xa8] sm:$0xff]
        %v3105 = vld [vmem:[#allocation2 + $0xb0] sm:$0xff]
        %v3106 = vpack.c.bf16 %v3090, %v3090
        %v3107 = vpack.c.bf16 %v3091, %v3091
        %v3108 = vpack.c.bf16 %v3092, %v3092
        %v3109 = vpack.c.bf16 %v3093, %v3093
        %v3110 = vpack.c.bf16 %v3094, %v3094
        %v3111 = vpack.c.bf16 %v3095, %v3095
        %v3112 = vpack.c.bf16 %v3096, %v3096
        %v3113 = vpack.c.bf16 %v3097, %v3097
        %v3114 = vpack.c.bf16 %v3098, %v3098
        %v3115 = vpack.c.bf16 %v3099, %v3099
        %v3116 = vpack.c.bf16 %v3100, %v3100
        %v3117 = vpack.c.bf16 %v3101, %v3101
        %v3118 = vpack.c.bf16 %v3102, %v3102
        %v3119 = vpack.c.bf16 %v3103, %v3103
        %v3120 = vpack.c.bf16 %v3104, %v3104
        %v3121 = vpack.c.bf16 %v3105, %v3105
        %v3122 = vld [vmem:[#allocation2 + $0x1] sm:$0xff]
        %v3123 = vld [vmem:[#allocation2 + $0x9] sm:$0xff]
        %v3124 = vld [vmem:[#allocation2 + $0x19] sm:$0xff]
        %v3125 = vld [vmem:[#allocation2 + $0x21] sm:$0xff]
        %v3126 = vld [vmem:[#allocation2 + $0x31] sm:$0xff]
        %v3127 = vld [vmem:[#allocation2 + $0x39] sm:$0xff]
        %v3128 = vld [vmem:[#allocation2 + $0x49] sm:$0xff]
        %v3129 = vld [vmem:[#allocation2 + $0x51] sm:$0xff]
        %v3130 = vld [vmem:[#allocation2 + $0x61] sm:$0xff]
        %v3131 = vld [vmem:[#allocation2 + $0x69] sm:$0xff]
        %v3132 = vld [vmem:[#allocation2 + $0x79] sm:$0xff]
        %v3133 = vld [vmem:[#allocation2 + $0x81] sm:$0xff]
        %v3134 = vld [vmem:[#allocation2 + $0x91] sm:$0xff]
        %v3135 = vld [vmem:[#allocation2 + $0x99] sm:$0xff]
        %v3136 = vld [vmem:[#allocation2 + $0xa9] sm:$0xff]
        %v3137 = vld [vmem:[#allocation2 + $0xb1] sm:$0xff]
        %v3138 = vpack.c.bf16 %v3122, %v3122
        %v3139 = vpack.c.bf16 %v3123, %v3123
        %v3140 = vpack.c.bf16 %v3124, %v3124
        %v3141 = vpack.c.bf16 %v3125, %v3125
        %v3142 = vpack.c.bf16 %v3126, %v3126
        %v3143 = vpack.c.bf16 %v3127, %v3127
        %v3144 = vpack.c.bf16 %v3128, %v3128
        %v3145 = vpack.c.bf16 %v3129, %v3129
        %v3146 = vpack.c.bf16 %v3130, %v3130
        %v3147 = vpack.c.bf16 %v3131, %v3131
        %v3148 = vpack.c.bf16 %v3132, %v3132
        %v3149 = vpack.c.bf16 %v3133, %v3133
        %v3150 = vpack.c.bf16 %v3134, %v3134
        %v3151 = vpack.c.bf16 %v3135, %v3135
        %v3152 = vpack.c.bf16 %v3136, %v3136
        %v3153 = vpack.c.bf16 %v3137, %v3137
        %v3154 = vld [vmem:[#allocation2 + $0x2] sm:$0xff]
        %v3155 = vld [vmem:[#allocation2 + $0xa] sm:$0xff]
        %v3156 = vld [vmem:[#allocation2 + $0x1a] sm:$0xff]
        %v3157 = vld [vmem:[#allocation2 + $0x22] sm:$0xff]
        %v3158 = vld [vmem:[#allocation2 + $0x32] sm:$0xff]
        %v3159 = vld [vmem:[#allocation2 + $0x3a] sm:$0xff]
        %v3160 = vld [vmem:[#allocation2 + $0x4a] sm:$0xff]
        %v3161 = vld [vmem:[#allocation2 + $0x52] sm:$0xff]
        %v3162 = vld [vmem:[#allocation2 + $0x62] sm:$0xff]
        %v3163 = vld [vmem:[#allocation2 + $0x6a] sm:$0xff]
        %v3164 = vld [vmem:[#allocation2 + $0x7a] sm:$0xff]
        %v3165 = vld [vmem:[#allocation2 + $0x82] sm:$0xff]
        %v3166 = vld [vmem:[#allocation2 + $0x92] sm:$0xff]
        %v3167 = vld [vmem:[#allocation2 + $0x9a] sm:$0xff]
        %v3168 = vld [vmem:[#allocation2 + $0xaa] sm:$0xff]
        %v3169 = vld [vmem:[#allocation2 + $0xb2] sm:$0xff]
        %v3170 = vpack.c.bf16 %v3154, %v3154
        %v3171 = vpack.c.bf16 %v3155, %v3155
        %v3172 = vpack.c.bf16 %v3156, %v3156
        %v3173 = vpack.c.bf16 %v3157, %v3157
        %v3174 = vpack.c.bf16 %v3158, %v3158
        %v3175 = vpack.c.bf16 %v3159, %v3159
        %v3176 = vpack.c.bf16 %v3160, %v3160
        %v3177 = vpack.c.bf16 %v3161, %v3161
        %v3178 = vpack.c.bf16 %v3162, %v3162
        %v3179 = vpack.c.bf16 %v3163, %v3163
        %v3180 = vpack.c.bf16 %v3164, %v3164
        %v3181 = vpack.c.bf16 %v3165, %v3165
        %v3182 = vpack.c.bf16 %v3166, %v3166
        %v3183 = vpack.c.bf16 %v3167, %v3167
        %v3184 = vpack.c.bf16 %v3168, %v3168
        %v3185 = vpack.c.bf16 %v3169, %v3169
        %s3186 = scalar_lea.vmem [#allocation2], 24
        %v3187 = vld [vmem:[%s3186] sm:$0xff]
        %v3188 = vld [vmem:[%s3186 + $0x8] sm:$0xff]
        %v3189 = vld [vmem:[%s3186 + $0x18] sm:$0xff]
        %v3190 = vld [vmem:[%s3186 + $0x20] sm:$0xff]
        %v3191 = vld [vmem:[%s3186 + $0x30] sm:$0xff]
        %v3192 = vld [vmem:[%s3186 + $0x38] sm:$0xff]
        %v3193 = vld [vmem:[%s3186 + $0x48] sm:$0xff]
        %v3194 = vld [vmem:[%s3186 + $0x50] sm:$0xff]
        %v3195 = vld [vmem:[%s3186 + $0x60] sm:$0xff]
        %v3196 = vld [vmem:[%s3186 + $0x68] sm:$0xff]
        %v3197 = vld [vmem:[%s3186 + $0x78] sm:$0xff]
        %v3198 = vld [vmem:[%s3186 + $0x80] sm:$0xff]
        %v3199 = vld [vmem:[%s3186 + $0x90] sm:$0xff]
        %v3200 = vld [vmem:[%s3186 + $0x98] sm:$0xff]
        %v3201 = vld [vmem:[%s3186 + $0xa8] sm:$0xff]
        %v3202 = vld [vmem:[%s3186 + $0xb0] sm:$0xff]
        %v3203 = vpack.c.bf16 %v3187, %v3187
        %v3204 = vpack.c.bf16 %v3188, %v3188
        %v3205 = vpack.c.bf16 %v3189, %v3189
        %v3206 = vpack.c.bf16 %v3190, %v3190
        %v3207 = vpack.c.bf16 %v3191, %v3191
        %v3208 = vpack.c.bf16 %v3192, %v3192
        %v3209 = vpack.c.bf16 %v3193, %v3193
        %v3210 = vpack.c.bf16 %v3194, %v3194
        %v3211 = vpack.c.bf16 %v3195, %v3195
        %v3212 = vpack.c.bf16 %v3196, %v3196
        %v3213 = vpack.c.bf16 %v3197, %v3197
        %v3214 = vpack.c.bf16 %v3198, %v3198
        %v3215 = vpack.c.bf16 %v3199, %v3199
        %v3216 = vpack.c.bf16 %v3200, %v3200
        %v3217 = vpack.c.bf16 %v3201, %v3201
        %v3218 = vpack.c.bf16 %v3202, %v3202
        %v3219 = vld [vmem:[%s3186 + $0x1] sm:$0xff]
        %v3220 = vld [vmem:[%s3186 + $0x9] sm:$0xff]
        %v3221 = vld [vmem:[%s3186 + $0x19] sm:$0xff]
        %v3222 = vld [vmem:[%s3186 + $0x21] sm:$0xff]
        %v3223 = vld [vmem:[%s3186 + $0x31] sm:$0xff]
        %v3224 = vld [vmem:[%s3186 + $0x39] sm:$0xff]
        %v3225 = vld [vmem:[%s3186 + $0x49] sm:$0xff]
        %v3226 = vld [vmem:[%s3186 + $0x51] sm:$0xff]
        %v3227 = vld [vmem:[%s3186 + $0x61] sm:$0xff]
        %v3228 = vld [vmem:[%s3186 + $0x69] sm:$0xff]
        %v3229 = vld [vmem:[%s3186 + $0x79] sm:$0xff]
        %v3230 = vld [vmem:[%s3186 + $0x81] sm:$0xff]
        %v3231 = vld [vmem:[%s3186 + $0x91] sm:$0xff]
        %v3232 = vld [vmem:[%s3186 + $0x99] sm:$0xff]
        %v3233 = vld [vmem:[%s3186 + $0xa9] sm:$0xff]
        %v3234 = vld [vmem:[%s3186 + $0xb1] sm:$0xff]
        %v3235 = vpack.c.bf16 %v3219, %v3219
        %v3236 = vpack.c.bf16 %v3220, %v3220
        %v3237 = vpack.c.bf16 %v3221, %v3221
        %v3238 = vpack.c.bf16 %v3222, %v3222
        %v3239 = vpack.c.bf16 %v3223, %v3223
        %v3240 = vpack.c.bf16 %v3224, %v3224
        %v3241 = vpack.c.bf16 %v3225, %v3225
        %v3242 = vpack.c.bf16 %v3226, %v3226
        %v3243 = vpack.c.bf16 %v3227, %v3227
        %v3244 = vpack.c.bf16 %v3228, %v3228
        %v3245 = vpack.c.bf16 %v3229, %v3229
        %v3246 = vpack.c.bf16 %v3230, %v3230
        %v3247 = vpack.c.bf16 %v3231, %v3231
        %v3248 = vpack.c.bf16 %v3232, %v3232
        %v3249 = vpack.c.bf16 %v3233, %v3233
        %v3250 = vpack.c.bf16 %v3234, %v3234
        %v3251 = vld [vmem:[%s3186 + $0x2] sm:$0xff]
        %v3252 = vld [vmem:[%s3186 + $0xa] sm:$0xff]
        %v3253 = vld [vmem:[%s3186 + $0x1a] sm:$0xff]
        %v3254 = vld [vmem:[%s3186 + $0x22] sm:$0xff]
        %v3255 = vld [vmem:[%s3186 + $0x32] sm:$0xff]
        %v3256 = vld [vmem:[%s3186 + $0x3a] sm:$0xff]
        %v3257 = vld [vmem:[%s3186 + $0x4a] sm:$0xff]
        %v3258 = vld [vmem:[%s3186 + $0x52] sm:$0xff]
        %v3259 = vld [vmem:[%s3186 + $0x62] sm:$0xff]
        %v3260 = vld [vmem:[%s3186 + $0x6a] sm:$0xff]
        %v3261 = vld [vmem:[%s3186 + $0x7a] sm:$0xff]
        %v3262 = vld [vmem:[%s3186 + $0x82] sm:$0xff]
        %v3263 = vld [vmem:[%s3186 + $0x92] sm:$0xff]
        %v3264 = vld [vmem:[%s3186 + $0x9a] sm:$0xff]
        %v3265 = vld [vmem:[%s3186 + $0xaa] sm:$0xff]
        %v3266 = vld [vmem:[%s3186 + $0xb2] sm:$0xff]
        %v3267 = vpack.c.bf16 %v3251, %v3251
        %v3268 = vpack.c.bf16 %v3252, %v3252
        %v3269 = vpack.c.bf16 %v3253, %v3253
        %v3270 = vpack.c.bf16 %v3254, %v3254
        %v3271 = vpack.c.bf16 %v3255, %v3255
        %v3272 = vpack.c.bf16 %v3256, %v3256
        %v3273 = vpack.c.bf16 %v3257, %v3257
        %v3274 = vpack.c.bf16 %v3258, %v3258
        %v3275 = vpack.c.bf16 %v3259, %v3259
        %v3276 = vpack.c.bf16 %v3260, %v3260
        %v3277 = vpack.c.bf16 %v3261, %v3261
        %v3278 = vpack.c.bf16 %v3262, %v3262
        %v3279 = vpack.c.bf16 %v3263, %v3263
        %v3280 = vpack.c.bf16 %v3264, %v3264
        %v3281 = vpack.c.bf16 %v3265, %v3265
        %v3282 = vpack.c.bf16 %v3266, %v3266
        %s3283 = scalar_lea.vmem [#allocation2], 48
        %v3284 = vld [vmem:[%s3283] sm:$0xff]
        %v3285 = vld [vmem:[%s3283 + $0x8] sm:$0xff]
        %v3286 = vld [vmem:[%s3283 + $0x18] sm:$0xff]
        %v3287 = vld [vmem:[%s3283 + $0x20] sm:$0xff]
        %v3288 = vld [vmem:[%s3283 + $0x30] sm:$0xff]
        %v3289 = vld [vmem:[%s3283 + $0x38] sm:$0xff]
        %v3290 = vld [vmem:[%s3283 + $0x48] sm:$0xff]
        %v3291 = vld [vmem:[%s3283 + $0x50] sm:$0xff]
        %v3292 = vld [vmem:[%s3283 + $0x60] sm:$0xff]
        %v3293 = vld [vmem:[%s3283 + $0x68] sm:$0xff]
        %v3294 = vld [vmem:[%s3283 + $0x78] sm:$0xff]
        %v3295 = vld [vmem:[%s3283 + $0x80] sm:$0xff]
        %v3296 = vld [vmem:[%s3283 + $0x90] sm:$0xff]
        %v3297 = vld [vmem:[%s3283 + $0x98] sm:$0xff]
        %v3298 = vld [vmem:[%s3283 + $0xa8] sm:$0xff]
        %v3299 = vld [vmem:[%s3283 + $0xb0] sm:$0xff]
        %v3300 = vpack.c.bf16 %v3284, %v3284
        %v3301 = vpack.c.bf16 %v3285, %v3285
        %v3302 = vpack.c.bf16 %v3286, %v3286
        %v3303 = vpack.c.bf16 %v3287, %v3287
        %v3304 = vpack.c.bf16 %v3288, %v3288
        %v3305 = vpack.c.bf16 %v3289, %v3289
        %v3306 = vpack.c.bf16 %v3290, %v3290
        %v3307 = vpack.c.bf16 %v3291, %v3291
        %v3308 = vpack.c.bf16 %v3292, %v3292
        %v3309 = vpack.c.bf16 %v3293, %v3293
        %v3310 = vpack.c.bf16 %v3294, %v3294
        %v3311 = vpack.c.bf16 %v3295, %v3295
        %v3312 = vpack.c.bf16 %v3296, %v3296
        %v3313 = vpack.c.bf16 %v3297, %v3297
        %v3314 = vpack.c.bf16 %v3298, %v3298
        %v3315 = vpack.c.bf16 %v3299, %v3299
        %v3316 = vld [vmem:[%s3283 + $0x1] sm:$0xff]
        %v3317 = vld [vmem:[%s3283 + $0x9] sm:$0xff]
        %v3318 = vld [vmem:[%s3283 + $0x19] sm:$0xff]
        %v3319 = vld [vmem:[%s3283 + $0x21] sm:$0xff]
        %v3320 = vld [vmem:[%s3283 + $0x31] sm:$0xff]
        %v3321 = vld [vmem:[%s3283 + $0x39] sm:$0xff]
        %v3322 = vld [vmem:[%s3283 + $0x49] sm:$0xff]
        %v3323 = vld [vmem:[%s3283 + $0x51] sm:$0xff]
        %v3324 = vld [vmem:[%s3283 + $0x61] sm:$0xff]
        %v3325 = vld [vmem:[%s3283 + $0x69] sm:$0xff]
        %v3326 = vld [vmem:[%s3283 + $0x79] sm:$0xff]
        %v3327 = vld [vmem:[%s3283 + $0x81] sm:$0xff]
        %v3328 = vld [vmem:[%s3283 + $0x91] sm:$0xff]
        %v3329 = vld [vmem:[%s3283 + $0x99] sm:$0xff]
        %v3330 = vld [vmem:[%s3283 + $0xa9] sm:$0xff]
        %v3331 = vld [vmem:[%s3283 + $0xb1] sm:$0xff]
        %v3332 = vpack.c.bf16 %v3316, %v3316
        %v3333 = vpack.c.bf16 %v3317, %v3317
        %v3334 = vpack.c.bf16 %v3318, %v3318
        %v3335 = vpack.c.bf16 %v3319, %v3319
        %v3336 = vpack.c.bf16 %v3320, %v3320
        %v3337 = vpack.c.bf16 %v3321, %v3321
        %v3338 = vpack.c.bf16 %v3322, %v3322
        %v3339 = vpack.c.bf16 %v3323, %v3323
        %v3340 = vpack.c.bf16 %v3324, %v3324
        %v3341 = vpack.c.bf16 %v3325, %v3325
        %v3342 = vpack.c.bf16 %v3326, %v3326
        %v3343 = vpack.c.bf16 %v3327, %v3327
        %v3344 = vpack.c.bf16 %v3328, %v3328
        %v3345 = vpack.c.bf16 %v3329, %v3329
        %v3346 = vpack.c.bf16 %v3330, %v3330
        %v3347 = vpack.c.bf16 %v3331, %v3331
        %v3348 = vld [vmem:[%s3283 + $0x2] sm:$0xff]
        %v3349 = vld [vmem:[%s3283 + $0xa] sm:$0xff]
        %v3350 = vld [vmem:[%s3283 + $0x1a] sm:$0xff]
        %v3351 = vld [vmem:[%s3283 + $0x22] sm:$0xff]
        %v3352 = vld [vmem:[%s3283 + $0x32] sm:$0xff]
        %v3353 = vld [vmem:[%s3283 + $0x3a] sm:$0xff]
        %v3354 = vld [vmem:[%s3283 + $0x4a] sm:$0xff]
        %v3355 = vld [vmem:[%s3283 + $0x52] sm:$0xff]
        %v3356 = vld [vmem:[%s3283 + $0x62] sm:$0xff]
        %v3357 = vld [vmem:[%s3283 + $0x6a] sm:$0xff]
        %v3358 = vld [vmem:[%s3283 + $0x7a] sm:$0xff]
        %v3359 = vld [vmem:[%s3283 + $0x82] sm:$0xff]
        %v3360 = vld [vmem:[%s3283 + $0x92] sm:$0xff]
        %v3361 = vld [vmem:[%s3283 + $0x9a] sm:$0xff]
        %v3362 = vld [vmem:[%s3283 + $0xaa] sm:$0xff]
        %v3363 = vld [vmem:[%s3283 + $0xb2] sm:$0xff]
        %v3364 = vpack.c.bf16 %v3348, %v3348
        %v3365 = vpack.c.bf16 %v3349, %v3349
        %v3366 = vpack.c.bf16 %v3350, %v3350
        %v3367 = vpack.c.bf16 %v3351, %v3351
        %v3368 = vpack.c.bf16 %v3352, %v3352
        %v3369 = vpack.c.bf16 %v3353, %v3353
        %v3370 = vpack.c.bf16 %v3354, %v3354
        %v3371 = vpack.c.bf16 %v3355, %v3355
        %v3372 = vpack.c.bf16 %v3356, %v3356
        %v3373 = vpack.c.bf16 %v3357, %v3357
        %v3374 = vpack.c.bf16 %v3358, %v3358
        %v3375 = vpack.c.bf16 %v3359, %v3359
        %v3376 = vpack.c.bf16 %v3360, %v3360
        %v3377 = vpack.c.bf16 %v3361, %v3361
        %v3378 = vpack.c.bf16 %v3362, %v3362
        %v3379 = vpack.c.bf16 %v3363, %v3363
        %v3396 = vunpack.c.l.b16 %v3106
        %v3397 = vunpack.c.l.b16 %v3107
        %v3398 = vunpack.c.l.b16 %v3108
        %v3399 = vunpack.c.l.b16 %v3109
        %v3400 = vunpack.c.l.b16 %v3110
        %v3401 = vunpack.c.l.b16 %v3111
        %v3402 = vunpack.c.l.b16 %v3112
        %v3403 = vunpack.c.l.b16 %v3113
        %v3404 = vunpack.c.l.b16 %v3114
        %v3405 = vunpack.c.l.b16 %v3115
        %v3406 = vunpack.c.l.b16 %v3116
        %v3407 = vunpack.c.l.b16 %v3117
        %v3408 = vunpack.c.l.b16 %v3118
        %v3409 = vunpack.c.l.b16 %v3119
        %v3410 = vunpack.c.l.b16 %v3120
        %v3411 = vunpack.c.l.b16 %v3121
        %v3412 = vpack.c.b16 %v3397, %v3396
        %v3413 = vpack.c.b16 %v3399, %v3398
        %v3414 = vpack.c.b16 %v3401, %v3400
        %v3415 = vpack.c.b16 %v3403, %v3402
        %v3416 = vpack.c.b16 %v3405, %v3404
        %v3417 = vpack.c.b16 %v3407, %v3406
        %v3418 = vpack.c.b16 %v3409, %v3408
        %v3419 = vpack.c.b16 %v3411, %v3410
        %v3444 = vunpack.c.l.b16 %v3138
        %v3445 = vunpack.c.l.b16 %v3139
        %v3446 = vunpack.c.l.b16 %v3140
        %v3447 = vunpack.c.l.b16 %v3141
        %v3448 = vunpack.c.l.b16 %v3142
        %v3449 = vunpack.c.l.b16 %v3143
        %v3450 = vunpack.c.l.b16 %v3144
        %v3451 = vunpack.c.l.b16 %v3145
        %v3452 = vunpack.c.l.b16 %v3146
        %v3453 = vunpack.c.l.b16 %v3147
        %v3454 = vunpack.c.l.b16 %v3148
        %v3455 = vunpack.c.l.b16 %v3149
        %v3456 = vunpack.c.l.b16 %v3150
        %v3457 = vunpack.c.l.b16 %v3151
        %v3458 = vunpack.c.l.b16 %v3152
        %v3459 = vunpack.c.l.b16 %v3153
        %v3460 = vpack.c.b16 %v3445, %v3444
        %v3461 = vpack.c.b16 %v3447, %v3446
        %v3462 = vpack.c.b16 %v3449, %v3448
        %v3463 = vpack.c.b16 %v3451, %v3450
        %v3464 = vpack.c.b16 %v3453, %v3452
        %v3465 = vpack.c.b16 %v3455, %v3454
        %v3466 = vpack.c.b16 %v3457, %v3456
        %v3467 = vpack.c.b16 %v3459, %v3458
        %v3492 = vunpack.c.l.b16 %v3170
        %v3493 = vunpack.c.l.b16 %v3171
        %v3494 = vunpack.c.l.b16 %v3172
        %v3495 = vunpack.c.l.b16 %v3173
        %v3496 = vunpack.c.l.b16 %v3174
        %v3497 = vunpack.c.l.b16 %v3175
        %v3498 = vunpack.c.l.b16 %v3176
        %v3499 = vunpack.c.l.b16 %v3177
        %v3500 = vunpack.c.l.b16 %v3178
        %v3501 = vunpack.c.l.b16 %v3179
        %v3502 = vunpack.c.l.b16 %v3180
        %v3503 = vunpack.c.l.b16 %v3181
        %v3504 = vunpack.c.l.b16 %v3182
        %v3505 = vunpack.c.l.b16 %v3183
        %v3506 = vunpack.c.l.b16 %v3184
        %v3507 = vunpack.c.l.b16 %v3185
        %v3508 = vpack.c.b16 %v3493, %v3492
        %v3509 = vpack.c.b16 %v3495, %v3494
        %v3510 = vpack.c.b16 %v3497, %v3496
        %v3511 = vpack.c.b16 %v3499, %v3498
        %v3512 = vpack.c.b16 %v3501, %v3500
        %v3513 = vpack.c.b16 %v3503, %v3502
        %v3514 = vpack.c.b16 %v3505, %v3504
        %v3515 = vpack.c.b16 %v3507, %v3506
        %v3540 = vunpack.c.l.b16 %v3203
        %v3541 = vunpack.c.l.b16 %v3204
        %v3542 = vunpack.c.l.b16 %v3205
        %v3543 = vunpack.c.l.b16 %v3206
        %v3544 = vunpack.c.l.b16 %v3207
        %v3545 = vunpack.c.l.b16 %v3208
        %v3546 = vunpack.c.l.b16 %v3209
        %v3547 = vunpack.c.l.b16 %v3210
        %v3548 = vunpack.c.l.b16 %v3211
        %v3549 = vunpack.c.l.b16 %v3212
        %v3550 = vunpack.c.l.b16 %v3213
        %v3551 = vunpack.c.l.b16 %v3214
        %v3552 = vunpack.c.l.b16 %v3215
        %v3553 = vunpack.c.l.b16 %v3216
        %v3554 = vunpack.c.l.b16 %v3217
        %v3555 = vunpack.c.l.b16 %v3218
        %v3556 = vpack.c.b16 %v3541, %v3540
        %v3557 = vpack.c.b16 %v3543, %v3542
        %v3558 = vpack.c.b16 %v3545, %v3544
        %v3559 = vpack.c.b16 %v3547, %v3546
        %v3560 = vpack.c.b16 %v3549, %v3548
        %v3561 = vpack.c.b16 %v3551, %v3550
        %v3562 = vpack.c.b16 %v3553, %v3552
        %v3563 = vpack.c.b16 %v3555, %v3554
        %v3588 = vunpack.c.l.b16 %v3235
        %v3589 = vunpack.c.l.b16 %v3236
        %v3590 = vunpack.c.l.b16 %v3237
        %v3591 = vunpack.c.l.b16 %v3238
        %v3592 = vunpack.c.l.b16 %v3239
        %v3593 = vunpack.c.l.b16 %v3240
        %v3594 = vunpack.c.l.b16 %v3241
        %v3595 = vunpack.c.l.b16 %v3242
        %v3596 = vunpack.c.l.b16 %v3243
        %v3597 = vunpack.c.l.b16 %v3244
        %v3598 = vunpack.c.l.b16 %v3245
        %v3599 = vunpack.c.l.b16 %v3246
        %v3600 = vunpack.c.l.b16 %v3247
        %v3601 = vunpack.c.l.b16 %v3248
        %v3602 = vunpack.c.l.b16 %v3249
        %v3603 = vunpack.c.l.b16 %v3250
        %v3604 = vpack.c.b16 %v3589, %v3588
        %v3605 = vpack.c.b16 %v3591, %v3590
        %v3606 = vpack.c.b16 %v3593, %v3592
        %v3607 = vpack.c.b16 %v3595, %v3594
        %v3608 = vpack.c.b16 %v3597, %v3596
        %v3609 = vpack.c.b16 %v3599, %v3598
        %v3610 = vpack.c.b16 %v3601, %v3600
        %v3611 = vpack.c.b16 %v3603, %v3602
        %v3636 = vunpack.c.l.b16 %v3267
        %v3637 = vunpack.c.l.b16 %v3268
        %v3638 = vunpack.c.l.b16 %v3269
        %v3639 = vunpack.c.l.b16 %v3270
        %v3640 = vunpack.c.l.b16 %v3271
        %v3641 = vunpack.c.l.b16 %v3272
        %v3642 = vunpack.c.l.b16 %v3273
        %v3643 = vunpack.c.l.b16 %v3274
        %v3644 = vunpack.c.l.b16 %v3275
        %v3645 = vunpack.c.l.b16 %v3276
        %v3646 = vunpack.c.l.b16 %v3277
        %v3647 = vunpack.c.l.b16 %v3278
        %v3648 = vunpack.c.l.b16 %v3279
        %v3649 = vunpack.c.l.b16 %v3280
        %v3650 = vunpack.c.l.b16 %v3281
        %v3651 = vunpack.c.l.b16 %v3282
        %v3652 = vpack.c.b16 %v3637, %v3636
        %v3653 = vpack.c.b16 %v3639, %v3638
        %v3654 = vpack.c.b16 %v3641, %v3640
        %v3655 = vpack.c.b16 %v3643, %v3642
        %v3656 = vpack.c.b16 %v3645, %v3644
        %v3657 = vpack.c.b16 %v3647, %v3646
        %v3658 = vpack.c.b16 %v3649, %v3648
        %v3659 = vpack.c.b16 %v3651, %v3650
        %v3684 = vunpack.c.l.b16 %v3300
        %v3685 = vunpack.c.l.b16 %v3301
        %v3686 = vunpack.c.l.b16 %v3302
        %v3687 = vunpack.c.l.b16 %v3303
        %v3688 = vunpack.c.l.b16 %v3304
        %v3689 = vunpack.c.l.b16 %v3305
        %v3690 = vunpack.c.l.b16 %v3306
        %v3691 = vunpack.c.l.b16 %v3307
        %v3692 = vunpack.c.l.b16 %v3308
        %v3693 = vunpack.c.l.b16 %v3309
        %v3694 = vunpack.c.l.b16 %v3310
        %v3695 = vunpack.c.l.b16 %v3311
        %v3696 = vunpack.c.l.b16 %v3312
        %v3697 = vunpack.c.l.b16 %v3313
        %v3698 = vunpack.c.l.b16 %v3314
        %v3699 = vunpack.c.l.b16 %v3315
        %v3700 = vpack.c.b16 %v3685, %v3684
        %v3701 = vpack.c.b16 %v3687, %v3686
        %v3702 = vpack.c.b16 %v3689, %v3688
        %v3703 = vpack.c.b16 %v3691, %v3690
        %v3704 = vpack.c.b16 %v3693, %v3692
        %v3705 = vpack.c.b16 %v3695, %v3694
        %v3706 = vpack.c.b16 %v3697, %v3696
        %v3707 = vpack.c.b16 %v3699, %v3698
        %v3732 = vunpack.c.l.b16 %v3332
        %v3733 = vunpack.c.l.b16 %v3333
        %v3734 = vunpack.c.l.b16 %v3334
        %v3735 = vunpack.c.l.b16 %v3335
        %v3736 = vunpack.c.l.b16 %v3336
        %v3737 = vunpack.c.l.b16 %v3337
        %v3738 = vunpack.c.l.b16 %v3338
        %v3739 = vunpack.c.l.b16 %v3339
        %v3740 = vunpack.c.l.b16 %v3340
        %v3741 = vunpack.c.l.b16 %v3341
        %v3742 = vunpack.c.l.b16 %v3342
        %v3743 = vunpack.c.l.b16 %v3343
        %v3744 = vunpack.c.l.b16 %v3344
        %v3745 = vunpack.c.l.b16 %v3345
        %v3746 = vunpack.c.l.b16 %v3346
        %v3747 = vunpack.c.l.b16 %v3347
        %v3748 = vpack.c.b16 %v3733, %v3732
        %v3749 = vpack.c.b16 %v3735, %v3734
        %v3750 = vpack.c.b16 %v3737, %v3736
        %v3751 = vpack.c.b16 %v3739, %v3738
        %v3752 = vpack.c.b16 %v3741, %v3740
        %v3753 = vpack.c.b16 %v3743, %v3742
        %v3754 = vpack.c.b16 %v3745, %v3744
        %v3755 = vpack.c.b16 %v3747, %v3746
        %v3780 = vunpack.c.l.b16 %v3364
        %v3781 = vunpack.c.l.b16 %v3365
        %v3782 = vunpack.c.l.b16 %v3366
        %v3783 = vunpack.c.l.b16 %v3367
        %v3784 = vunpack.c.l.b16 %v3368
        %v3785 = vunpack.c.l.b16 %v3369
        %v3786 = vunpack.c.l.b16 %v3370
        %v3787 = vunpack.c.l.b16 %v3371
        %v3788 = vunpack.c.l.b16 %v3372
        %v3789 = vunpack.c.l.b16 %v3373
        %v3790 = vunpack.c.l.b16 %v3374
        %v3791 = vunpack.c.l.b16 %v3375
        %v3792 = vunpack.c.l.b16 %v3376
        %v3793 = vunpack.c.l.b16 %v3377
        %v3794 = vunpack.c.l.b16 %v3378
        %v3795 = vunpack.c.l.b16 %v3379
        %v3796 = vpack.c.b16 %v3781, %v3780
        %v3797 = vpack.c.b16 %v3783, %v3782
        %v3798 = vpack.c.b16 %v3785, %v3784
        %v3799 = vpack.c.b16 %v3787, %v3786
        %v3800 = vpack.c.b16 %v3789, %v3788
        %v3801 = vpack.c.b16 %v3791, %v3790
        %v3802 = vpack.c.b16 %v3793, %v3792
        %v3803 = vpack.c.b16 %v3795, %v3794
        %v3812 = vld [vmem:[#allocation3] sm:$0xf]
        %v3813 = vld [vmem:[#allocation3 + $0x4] sm:$0xf]
        %v3814 = vld [vmem:[#allocation3 + $0x8] sm:$0xf]
        %v3815 = vld [vmem:[#allocation3 + $0xc] sm:$0xf]
        %v3816 = vld [vmem:[#allocation3 + $0x10] sm:$0xf]
        %v3817 = vld [vmem:[#allocation3 + $0x14] sm:$0xf]
        %v3818 = vld [vmem:[#allocation3 + $0x18] sm:$0xf]
        %v3819 = vld [vmem:[#allocation3 + $0x1c] sm:$0xf]
        %v3820 = vld [vmem:[#allocation3 + $0x20] sm:$0xf]
        %v3821 = vld [vmem:[#allocation3 + $0x24] sm:$0xf]
        %v3822 = vld [vmem:[#allocation3 + $0x28] sm:$0xf]
        %v3823 = vld [vmem:[#allocation3 + $0x2c] sm:$0xf]
        %v3824 = vld [vmem:[#allocation3 + $0x30] sm:$0xf]
        %v3825 = vld [vmem:[#allocation3 + $0x34] sm:$0xf]
        %v3826 = vld [vmem:[#allocation3 + $0x38] sm:$0xf]
        %v3827 = vld [vmem:[#allocation3 + $0x3c] sm:$0xf]
        %v3828 = vld [vmem:[#allocation3 + $0x40] sm:$0xf]
        %v3829 = vld [vmem:[#allocation3 + $0x44] sm:$0xf]
        %v3830 = vld [vmem:[#allocation3 + $0x48] sm:$0xf]
        %v3831 = vld [vmem:[#allocation3 + $0x4c] sm:$0xf]
        %v3832 = vld [vmem:[#allocation3 + $0x50] sm:$0xf]
        %v3833 = vld [vmem:[#allocation3 + $0x54] sm:$0xf]
        %v3834 = vld [vmem:[#allocation3 + $0x58] sm:$0xf]
        %v3835 = vld [vmem:[#allocation3 + $0x5c] sm:$0xf]
        %v3836 = vld [vmem:[#allocation3 + $0x60] sm:$0xf]
        %v3837 = vld [vmem:[#allocation3 + $0x64] sm:$0xf]
        %v3838 = vld [vmem:[#allocation3 + $0x68] sm:$0xf]
        %v3839 = vld [vmem:[#allocation3 + $0x6c] sm:$0xf]
        %v3840 = vld [vmem:[#allocation3 + $0x70] sm:$0xf]
        %v3841 = vld [vmem:[#allocation3 + $0x74] sm:$0xf]
        %v3842 = vld [vmem:[#allocation3 + $0x78] sm:$0xf]
        %v3843 = vld [vmem:[#allocation3 + $0x7c] sm:$0xf]
        %v3844 = vld [vmem:[#allocation3 + $0x80] sm:$0xf]
        %v3845 = vld [vmem:[#allocation3 + $0x84] sm:$0xf]
        %v3846 = vld [vmem:[#allocation3 + $0x88] sm:$0xf]
        %v3847 = vld [vmem:[#allocation3 + $0x8c] sm:$0xf]
        %v3848 = vld [vmem:[#allocation3 + $0x90] sm:$0xf]
        %v3849 = vld [vmem:[#allocation3 + $0x94] sm:$0xf]
        %v3850 = vld [vmem:[#allocation3 + $0x98] sm:$0xf]
        %v3851 = vld [vmem:[#allocation3 + $0x9c] sm:$0xf]
        %v3852 = vld [vmem:[#allocation3 + $0xa0] sm:$0xf]
        %v3853 = vld [vmem:[#allocation3 + $0xa4] sm:$0xf]
        %v3854 = vld [vmem:[#allocation3 + $0xa8] sm:$0xf]
        %v3855 = vld [vmem:[#allocation3 + $0xac] sm:$0xf]
        %v3856 = vld [vmem:[#allocation3 + $0xb0] sm:$0xf]
        %v3857 = vld [vmem:[#allocation3 + $0xb4] sm:$0xf]
        %v3858 = vld [vmem:[#allocation3 + $0xb8] sm:$0xf]
        %v3859 = vld [vmem:[#allocation3 + $0xbc] sm:$0xf]
        %v3860 = vld [vmem:[#allocation3 + $0xc0] sm:$0xf]
        %v3861 = vld [vmem:[#allocation3 + $0xc4] sm:$0xf]
        %v3862 = vld [vmem:[#allocation3 + $0xc8] sm:$0xf]
        %v3863 = vld [vmem:[#allocation3 + $0xcc] sm:$0xf]
        %v3864 = vld [vmem:[#allocation3 + $0xd0] sm:$0xf]
        %v3865 = vld [vmem:[#allocation3 + $0xd4] sm:$0xf]
        %v3866 = vld [vmem:[#allocation3 + $0xd8] sm:$0xf]
        %v3867 = vld [vmem:[#allocation3 + $0xdc] sm:$0xf]
        %v3868 = vld [vmem:[#allocation3 + $0xe0] sm:$0xf]
        %v3869 = vld [vmem:[#allocation3 + $0xe4] sm:$0xf]
        %v3870 = vld [vmem:[#allocation3 + $0xe8] sm:$0xf]
        %v3871 = vld [vmem:[#allocation3 + $0xec] sm:$0xf]
        %v3872 = vld [vmem:[#allocation3 + $0xf0] sm:$0xf]
        %v3873 = vld [vmem:[#allocation3 + $0xf4] sm:$0xf]
        %v3874 = vld [vmem:[#allocation3 + $0xf8] sm:$0xf]
        %v3875 = vld [vmem:[#allocation3 + $0xfc] sm:$0xf]
        %v3876 = vld [vmem:[#allocation3 + $0x100] sm:$0xf]
        %v3877 = vld [vmem:[#allocation3 + $0x104] sm:$0xf]
        %v3878 = vld [vmem:[#allocation3 + $0x108] sm:$0xf]
        %v3879 = vld [vmem:[#allocation3 + $0x10c] sm:$0xf]
        %v3880 = vld [vmem:[#allocation3 + $0x110] sm:$0xf]
        %v3881 = vld [vmem:[#allocation3 + $0x114] sm:$0xf]
        %v3882 = vld [vmem:[#allocation3 + $0x118] sm:$0xf]
        %v3883 = vld [vmem:[#allocation3 + $0x11c] sm:$0xf]
        %v3884 = vld [vmem:[#allocation3 + $0x120] sm:$0xf]
        %v3885 = vld [vmem:[#allocation3 + $0x124] sm:$0xf]
        %v3886 = vld [vmem:[#allocation3 + $0x128] sm:$0xf]
        %v3887 = vld [vmem:[#allocation3 + $0x12c] sm:$0xf]
        %v3888 = vld [vmem:[#allocation3 + $0x130] sm:$0xf]
        %v3889 = vld [vmem:[#allocation3 + $0x134] sm:$0xf]
        %v3890 = vld [vmem:[#allocation3 + $0x138] sm:$0xf]
        %v3891 = vld [vmem:[#allocation3 + $0x13c] sm:$0xf]
        %v3892 = vld [vmem:[#allocation3 + $0x140] sm:$0xf]
        %v3893 = vld [vmem:[#allocation3 + $0x144] sm:$0xf]
        %v3894 = vld [vmem:[#allocation3 + $0x148] sm:$0xf]
        %v3895 = vld [vmem:[#allocation3 + $0x14c] sm:$0xf]
        %v3896 = vld [vmem:[#allocation3 + $0x150] sm:$0xf]
        %v3897 = vld [vmem:[#allocation3 + $0x154] sm:$0xf]
        %v3898 = vld [vmem:[#allocation3 + $0x158] sm:$0xf]
        %v3899 = vld [vmem:[#allocation3 + $0x15c] sm:$0xf]
        %v3900 = vld [vmem:[#allocation3 + $0x160] sm:$0xf]
        %v3901 = vld [vmem:[#allocation3 + $0x164] sm:$0xf]
        %v3902 = vld [vmem:[#allocation3 + $0x168] sm:$0xf]
        %v3903 = vld [vmem:[#allocation3 + $0x16c] sm:$0xf]
        %v3904 = vld [vmem:[#allocation3 + $0x170] sm:$0xf]
        %v3905 = vld [vmem:[#allocation3 + $0x174] sm:$0xf]
        %v3906 = vld [vmem:[#allocation3 + $0x178] sm:$0xf]
        %v3907 = vld [vmem:[#allocation3 + $0x17c] sm:$0xf]
        %v3908 = vld [vmem:[#allocation3 + $0x180] sm:$0xf]
        %v3909 = vld [vmem:[#allocation3 + $0x184] sm:$0xf]
        %v3910 = vld [vmem:[#allocation3 + $0x188] sm:$0xf]
        %v3911 = vld [vmem:[#allocation3 + $0x18c] sm:$0xf]
        %v3912 = vld [vmem:[#allocation3 + $0x190] sm:$0xf]
        %v3913 = vld [vmem:[#allocation3 + $0x194] sm:$0xf]
        %v3914 = vld [vmem:[#allocation3 + $0x198] sm:$0xf]
        %v3915 = vld [vmem:[#allocation3 + $0x19c] sm:$0xf]
        %v3916 = vld [vmem:[#allocation3 + $0x1a0] sm:$0xf]
        %v3917 = vld [vmem:[#allocation3 + $0x1a4] sm:$0xf]
        %v3918 = vld [vmem:[#allocation3 + $0x1a8] sm:$0xf]
        %v3919 = vld [vmem:[#allocation3 + $0x1ac] sm:$0xf]
        %v3920 = vld [vmem:[#allocation3 + $0x1b0] sm:$0xf]
        %v3921 = vld [vmem:[#allocation3 + $0x1b4] sm:$0xf]
        %v3922 = vld [vmem:[#allocation3 + $0x1b8] sm:$0xf]
        %v3923 = vld [vmem:[#allocation3 + $0x1bc] sm:$0xf]
        %v3924 = vld [vmem:[#allocation3 + $0x1c0] sm:$0xf]
        %v3925 = vld [vmem:[#allocation3 + $0x1c4] sm:$0xf]
        %v3926 = vld [vmem:[#allocation3 + $0x1c8] sm:$0xf]
        %v3927 = vld [vmem:[#allocation3 + $0x1cc] sm:$0xf]
        %v3928 = vld [vmem:[#allocation3 + $0x1d0] sm:$0xf]
        %v3929 = vld [vmem:[#allocation3 + $0x1d4] sm:$0xf]
        %v3930 = vld [vmem:[#allocation3 + $0x1d8] sm:$0xf]
        %v3931 = vld [vmem:[#allocation3 + $0x1dc] sm:$0xf]
        %v3932 = vld [vmem:[#allocation3 + $0x1e0] sm:$0xf]
        %v3933 = vld [vmem:[#allocation3 + $0x1e4] sm:$0xf]
        %v3934 = vld [vmem:[#allocation3 + $0x1e8] sm:$0xf]
        %v3935 = vld [vmem:[#allocation3 + $0x1ec] sm:$0xf]
        %v3936 = vld [vmem:[#allocation3 + $0x1f0] sm:$0xf]
        %v3937 = vld [vmem:[#allocation3 + $0x1f4] sm:$0xf]
        %v3938 = vld [vmem:[#allocation3 + $0x1f8] sm:$0xf]
        %v3939 = vld [vmem:[#allocation3 + $0x1fc] sm:$0xf]
        %v3940 = vld [vmem:[#allocation3 + $0x200] sm:$0xf]
        %v3941 = vld [vmem:[#allocation3 + $0x204] sm:$0xf]
        %v3942 = vld [vmem:[#allocation3 + $0x208] sm:$0xf]
        %v3943 = vld [vmem:[#allocation3 + $0x20c] sm:$0xf]
        %v3944 = vld [vmem:[#allocation3 + $0x210] sm:$0xf]
        %v3945 = vld [vmem:[#allocation3 + $0x214] sm:$0xf]
        %v3946 = vld [vmem:[#allocation3 + $0x218] sm:$0xf]
        %v3947 = vld [vmem:[#allocation3 + $0x21c] sm:$0xf]
        %v3948 = vld [vmem:[#allocation3 + $0x220] sm:$0xf]
        %v3949 = vld [vmem:[#allocation3 + $0x224] sm:$0xf]
        %v3950 = vld [vmem:[#allocation3 + $0x228] sm:$0xf]
        %v3951 = vld [vmem:[#allocation3 + $0x22c] sm:$0xf]
        %v3952 = vld [vmem:[#allocation3 + $0x230] sm:$0xf]
        %v3953 = vld [vmem:[#allocation3 + $0x234] sm:$0xf]
        %v3954 = vld [vmem:[#allocation3 + $0x238] sm:$0xf]
        %v3955 = vld [vmem:[#allocation3 + $0x23c] sm:$0xf]
        %v4100 = vunpack.c.l.b16 %v3812
        %v4101 = vunpack.c.l.b16 %v3813
        %v4102 = vunpack.c.l.b16 %v3814
        %v4103 = vunpack.c.l.b16 %v3815
        %v4104 = vunpack.c.l.b16 %v3816
        %v4105 = vunpack.c.l.b16 %v3817
        %v4106 = vunpack.c.l.b16 %v3818
        %v4107 = vunpack.c.l.b16 %v3819
        %v4108 = vunpack.c.l.b16 %v3820
        %v4109 = vunpack.c.l.b16 %v3821
        %v4110 = vunpack.c.l.b16 %v3822
        %v4111 = vunpack.c.l.b16 %v3823
        %v4112 = vunpack.c.l.b16 %v3824
        %v4113 = vunpack.c.l.b16 %v3825
        %v4114 = vunpack.c.l.b16 %v3826
        %v4115 = vunpack.c.l.b16 %v3827
        %v4116 = vunpack.c.l.b16 %v3828
        %v4117 = vunpack.c.l.b16 %v3829
        %v4118 = vunpack.c.l.b16 %v3830
        %v4119 = vunpack.c.l.b16 %v3831
        %v4120 = vunpack.c.l.b16 %v3832
        %v4121 = vunpack.c.l.b16 %v3833
        %v4122 = vunpack.c.l.b16 %v3834
        %v4123 = vunpack.c.l.b16 %v3835
        %v4124 = vunpack.c.l.b16 %v3836
        %v4125 = vunpack.c.l.b16 %v3837
        %v4126 = vunpack.c.l.b16 %v3838
        %v4127 = vunpack.c.l.b16 %v3839
        %v4128 = vunpack.c.l.b16 %v3840
        %v4129 = vunpack.c.l.b16 %v3841
        %v4130 = vunpack.c.l.b16 %v3842
        %v4131 = vunpack.c.l.b16 %v3843
        %v4132 = vunpack.c.l.b16 %v3844
        %v4133 = vunpack.c.l.b16 %v3845
        %v4134 = vunpack.c.l.b16 %v3846
        %v4135 = vunpack.c.l.b16 %v3847
        %v4136 = vunpack.c.l.b16 %v3848
        %v4137 = vunpack.c.l.b16 %v3849
        %v4138 = vunpack.c.l.b16 %v3850
        %v4139 = vunpack.c.l.b16 %v3851
        %v4140 = vunpack.c.l.b16 %v3852
        %v4141 = vunpack.c.l.b16 %v3853
        %v4142 = vunpack.c.l.b16 %v3854
        %v4143 = vunpack.c.l.b16 %v3855
        %v4144 = vunpack.c.l.b16 %v3856
        %v4145 = vunpack.c.l.b16 %v3857
        %v4146 = vunpack.c.l.b16 %v3858
        %v4147 = vunpack.c.l.b16 %v3859
        %v4148 = vunpack.c.l.b16 %v3860
        %v4149 = vunpack.c.l.b16 %v3861
        %v4150 = vunpack.c.l.b16 %v3862
        %v4151 = vunpack.c.l.b16 %v3863
        %v4152 = vunpack.c.l.b16 %v3864
        %v4153 = vunpack.c.l.b16 %v3865
        %v4154 = vunpack.c.l.b16 %v3866
        %v4155 = vunpack.c.l.b16 %v3867
        %v4156 = vunpack.c.l.b16 %v3868
        %v4157 = vunpack.c.l.b16 %v3869
        %v4158 = vunpack.c.l.b16 %v3870
        %v4159 = vunpack.c.l.b16 %v3871
        %v4160 = vunpack.c.l.b16 %v3872
        %v4161 = vunpack.c.l.b16 %v3873
        %v4162 = vunpack.c.l.b16 %v3874
        %v4163 = vunpack.c.l.b16 %v3875
        %v4164 = vunpack.c.l.b16 %v3876
        %v4165 = vunpack.c.l.b16 %v3877
        %v4166 = vunpack.c.l.b16 %v3878
        %v4167 = vunpack.c.l.b16 %v3879
        %v4168 = vunpack.c.l.b16 %v3880
        %v4169 = vunpack.c.l.b16 %v3881
        %v4170 = vunpack.c.l.b16 %v3882
        %v4171 = vunpack.c.l.b16 %v3883
        %v4172 = vunpack.c.l.b16 %v3884
        %v4173 = vunpack.c.l.b16 %v3885
        %v4174 = vunpack.c.l.b16 %v3886
        %v4175 = vunpack.c.l.b16 %v3887
        %v4176 = vunpack.c.l.b16 %v3888
        %v4177 = vunpack.c.l.b16 %v3889
        %v4178 = vunpack.c.l.b16 %v3890
        %v4179 = vunpack.c.l.b16 %v3891
        %v4180 = vunpack.c.l.b16 %v3892
        %v4181 = vunpack.c.l.b16 %v3893
        %v4182 = vunpack.c.l.b16 %v3894
        %v4183 = vunpack.c.l.b16 %v3895
        %v4184 = vunpack.c.l.b16 %v3896
        %v4185 = vunpack.c.l.b16 %v3897
        %v4186 = vunpack.c.l.b16 %v3898
        %v4187 = vunpack.c.l.b16 %v3899
        %v4188 = vunpack.c.l.b16 %v3900
        %v4189 = vunpack.c.l.b16 %v3901
        %v4190 = vunpack.c.l.b16 %v3902
        %v4191 = vunpack.c.l.b16 %v3903
        %v4192 = vunpack.c.l.b16 %v3904
        %v4193 = vunpack.c.l.b16 %v3905
        %v4194 = vunpack.c.l.b16 %v3906
        %v4195 = vunpack.c.l.b16 %v3907
        %v4196 = vunpack.c.l.b16 %v3908
        %v4197 = vunpack.c.l.b16 %v3909
        %v4198 = vunpack.c.l.b16 %v3910
        %v4199 = vunpack.c.l.b16 %v3911
        %v4200 = vunpack.c.l.b16 %v3912
        %v4201 = vunpack.c.l.b16 %v3913
        %v4202 = vunpack.c.l.b16 %v3914
        %v4203 = vunpack.c.l.b16 %v3915
        %v4204 = vunpack.c.l.b16 %v3916
        %v4205 = vunpack.c.l.b16 %v3917
        %v4206 = vunpack.c.l.b16 %v3918
        %v4207 = vunpack.c.l.b16 %v3919
        %v4208 = vunpack.c.l.b16 %v3920
        %v4209 = vunpack.c.l.b16 %v3921
        %v4210 = vunpack.c.l.b16 %v3922
        %v4211 = vunpack.c.l.b16 %v3923
        %v4212 = vunpack.c.l.b16 %v3924
        %v4213 = vunpack.c.l.b16 %v3925
        %v4214 = vunpack.c.l.b16 %v3926
        %v4215 = vunpack.c.l.b16 %v3927
        %v4216 = vunpack.c.l.b16 %v3928
        %v4217 = vunpack.c.l.b16 %v3929
        %v4218 = vunpack.c.l.b16 %v3930
        %v4219 = vunpack.c.l.b16 %v3931
        %v4220 = vunpack.c.l.b16 %v3932
        %v4221 = vunpack.c.l.b16 %v3933
        %v4222 = vunpack.c.l.b16 %v3934
        %v4223 = vunpack.c.l.b16 %v3935
        %v4224 = vunpack.c.l.b16 %v3936
        %v4225 = vunpack.c.l.b16 %v3937
        %v4226 = vunpack.c.l.b16 %v3938
        %v4227 = vunpack.c.l.b16 %v3939
        %v4228 = vunpack.c.l.b16 %v3940
        %v4229 = vunpack.c.l.b16 %v3941
        %v4230 = vunpack.c.l.b16 %v3942
        %v4231 = vunpack.c.l.b16 %v3943
        %v4232 = vunpack.c.l.b16 %v3944
        %v4233 = vunpack.c.l.b16 %v3945
        %v4234 = vunpack.c.l.b16 %v3946
        %v4235 = vunpack.c.l.b16 %v3947
        %v4236 = vunpack.c.l.b16 %v3948
        %v4237 = vunpack.c.l.b16 %v3949
        %v4238 = vunpack.c.l.b16 %v3950
        %v4239 = vunpack.c.l.b16 %v3951
        %v4240 = vunpack.c.l.b16 %v3952
        %v4241 = vunpack.c.l.b16 %v3953
        %v4242 = vunpack.c.l.b16 %v3954
        %v4243 = vunpack.c.l.b16 %v3955
        %v4244 = vpack.c.b16 %v4101, %v4100
        %v4245 = vpack.c.b16 %v4103, %v4102
        %v4246 = vpack.c.b16 %v4105, %v4104
        %v4247 = vpack.c.b16 %v4107, %v4106
        %v4248 = vpack.c.b16 %v4109, %v4108
        %v4249 = vpack.c.b16 %v4111, %v4110
        %v4250 = vpack.c.b16 %v4113, %v4112
        %v4251 = vpack.c.b16 %v4115, %v4114
        %v4252 = vpack.c.b16 %v4117, %v4116
        %v4253 = vpack.c.b16 %v4119, %v4118
        %v4254 = vpack.c.b16 %v4121, %v4120
        %v4255 = vpack.c.b16 %v4123, %v4122
        %v4256 = vpack.c.b16 %v4125, %v4124
        %v4257 = vpack.c.b16 %v4127, %v4126
        %v4258 = vpack.c.b16 %v4129, %v4128
        %v4259 = vpack.c.b16 %v4131, %v4130
        %v4260 = vpack.c.b16 %v4133, %v4132
        %v4261 = vpack.c.b16 %v4135, %v4134
        %v4262 = vpack.c.b16 %v4137, %v4136
        %v4263 = vpack.c.b16 %v4139, %v4138
        %v4264 = vpack.c.b16 %v4141, %v4140
        %v4265 = vpack.c.b16 %v4143, %v4142
        %v4266 = vpack.c.b16 %v4145, %v4144
        %v4267 = vpack.c.b16 %v4147, %v4146
        %v4268 = vpack.c.b16 %v4149, %v4148
        %v4269 = vpack.c.b16 %v4151, %v4150
        %v4270 = vpack.c.b16 %v4153, %v4152
        %v4271 = vpack.c.b16 %v4155, %v4154
        %v4272 = vpack.c.b16 %v4157, %v4156
        %v4273 = vpack.c.b16 %v4159, %v4158
        %v4274 = vpack.c.b16 %v4161, %v4160
        %v4275 = vpack.c.b16 %v4163, %v4162
        %v4276 = vpack.c.b16 %v4165, %v4164
        %v4277 = vpack.c.b16 %v4167, %v4166
        %v4278 = vpack.c.b16 %v4169, %v4168
        %v4279 = vpack.c.b16 %v4171, %v4170
        %v4280 = vpack.c.b16 %v4173, %v4172
        %v4281 = vpack.c.b16 %v4175, %v4174
        %v4282 = vpack.c.b16 %v4177, %v4176
        %v4283 = vpack.c.b16 %v4179, %v4178
        %v4284 = vpack.c.b16 %v4181, %v4180
        %v4285 = vpack.c.b16 %v4183, %v4182
        %v4286 = vpack.c.b16 %v4185, %v4184
        %v4287 = vpack.c.b16 %v4187, %v4186
        %v4288 = vpack.c.b16 %v4189, %v4188
        %v4289 = vpack.c.b16 %v4191, %v4190
        %v4290 = vpack.c.b16 %v4193, %v4192
        %v4291 = vpack.c.b16 %v4195, %v4194
        %v4292 = vpack.c.b16 %v4197, %v4196
        %v4293 = vpack.c.b16 %v4199, %v4198
        %v4294 = vpack.c.b16 %v4201, %v4200
        %v4295 = vpack.c.b16 %v4203, %v4202
        %v4296 = vpack.c.b16 %v4205, %v4204
        %v4297 = vpack.c.b16 %v4207, %v4206
        %v4298 = vpack.c.b16 %v4209, %v4208
        %v4299 = vpack.c.b16 %v4211, %v4210
        %v4300 = vpack.c.b16 %v4213, %v4212
        %v4301 = vpack.c.b16 %v4215, %v4214
        %v4302 = vpack.c.b16 %v4217, %v4216
        %v4303 = vpack.c.b16 %v4219, %v4218
        %v4304 = vpack.c.b16 %v4221, %v4220
        %v4305 = vpack.c.b16 %v4223, %v4222
        %v4306 = vpack.c.b16 %v4225, %v4224
        %v4307 = vpack.c.b16 %v4227, %v4226
        %v4308 = vpack.c.b16 %v4229, %v4228
        %v4309 = vpack.c.b16 %v4231, %v4230
        %v4310 = vpack.c.b16 %v4233, %v4232
        %v4311 = vpack.c.b16 %v4235, %v4234
        %v4312 = vpack.c.b16 %v4237, %v4236
        %v4313 = vpack.c.b16 %v4239, %v4238
        %v4314 = vpack.c.b16 %v4241, %v4240
        %v4315 = vpack.c.b16 %v4243, %v4242
        %4388 = vmatpush.bf16.msra.mxu0 %v4251
        %4389 = vmatpush.bf16.msra.mxu0 %v4250
        %4390 = vmatpush.bf16.msra.mxu0 %v4249
        %4391 = vmatpush.bf16.msra.mxu0 %v4248
        %4392 = vmatpush.bf16.msra.mxu0 %v4247
        %4393 = vmatpush.bf16.msra.mxu0 %v4246
        %4394 = vmatpush.bf16.msra.mxu0 %v4245
        %4395 = vmatpush.bf16.msra.mxu0 %v4244
        %4396 = vmatmul.bf16.gmra.mxu0 %v3412
        %v4397 = vpop.f32.mrf.mxu0
        %v4398 = vadd.f32 0.0, %v4397
        %v4399 = vpop.f32.mrf.mxu0
        %v4400 = vadd.f32 0.0, %v4399
        %4401 = vmatmul.bf16.gmra.mxu0 %v3413
        %v4402 = vpop.f32.mrf.mxu0
        %v4403 = vadd.f32 0.0, %v4402
        %v4404 = vpop.f32.mrf.mxu0
        %v4405 = vadd.f32 0.0, %v4404
        %4406 = vmatmul.bf16.gmra.mxu0 %v3414
        %v4407 = vpop.f32.mrf.mxu0
        %v4408 = vadd.f32 0.0, %v4407
        %v4409 = vpop.f32.mrf.mxu0
        %v4410 = vadd.f32 0.0, %v4409
        %4411 = vmatmul.bf16.gmra.mxu0 %v3415
        %v4412 = vpop.f32.mrf.mxu0
        %v4413 = vadd.f32 0.0, %v4412
        %v4414 = vpop.f32.mrf.mxu0
        %v4415 = vadd.f32 0.0, %v4414
        %4416 = vmatmul.bf16.gmra.mxu0 %v3416
        %v4417 = vpop.f32.mrf.mxu0
        %v4418 = vadd.f32 0.0, %v4417
        %v4419 = vpop.f32.mrf.mxu0
        %v4420 = vadd.f32 0.0, %v4419
        %4421 = vmatmul.bf16.gmra.mxu0 %v3417
        %v4422 = vpop.f32.mrf.mxu0
        %v4423 = vadd.f32 0.0, %v4422
        %v4424 = vpop.f32.mrf.mxu0
        %v4425 = vadd.f32 0.0, %v4424
        %4426 = vmatmul.bf16.gmra.mxu0 %v3418
        %v4427 = vpop.f32.mrf.mxu0
        %v4428 = vadd.f32 0.0, %v4427
        %v4429 = vpop.f32.mrf.mxu0
        %v4430 = vadd.f32 0.0, %v4429
        %4431 = vmatmul.bf16.gmra.mxu0 %v3419
        %v4432 = vpop.f32.mrf.mxu0
        %v4433 = vadd.f32 0.0, %v4432
        %v4434 = vpop.f32.mrf.mxu0
        %v4435 = vadd.f32 0.0, %v4434
        %4436 = vdwg.mxu0
        %4437 = vmatpush.bf16.msra.mxu0 %v4259
        %4438 = vmatpush.bf16.msra.mxu0 %v4258
        %4439 = vmatpush.bf16.msra.mxu0 %v4257
        %4440 = vmatpush.bf16.msra.mxu0 %v4256
        %4441 = vmatpush.bf16.msra.mxu0 %v4255
        %4442 = vmatpush.bf16.msra.mxu0 %v4254
        %4443 = vmatpush.bf16.msra.mxu0 %v4253
        %4444 = vmatpush.bf16.msra.mxu0 %v4252
        %4445 = vmatmul.bf16.gmra.mxu0 %v3460
        %v4446 = vpop.f32.mrf.mxu0
        %v4447 = vadd.f32 %v4398, %v4446
        %v4448 = vpop.f32.mrf.mxu0
        %v4449 = vadd.f32 %v4400, %v4448
        %4450 = vmatmul.bf16.gmra.mxu0 %v3461
        %v4451 = vpop.f32.mrf.mxu0
        %v4452 = vadd.f32 %v4403, %v4451
        %v4453 = vpop.f32.mrf.mxu0
        %v4454 = vadd.f32 %v4405, %v4453
        %4455 = vmatmul.bf16.gmra.mxu0 %v3462
        %v4456 = vpop.f32.mrf.mxu0
        %v4457 = vadd.f32 %v4408, %v4456
        %v4458 = vpop.f32.mrf.mxu0
        %v4459 = vadd.f32 %v4410, %v4458
        %4460 = vmatmul.bf16.gmra.mxu0 %v3463
        %v4461 = vpop.f32.mrf.mxu0
        %v4462 = vadd.f32 %v4413, %v4461
        %v4463 = vpop.f32.mrf.mxu0
        %v4464 = vadd.f32 %v4415, %v4463
        %4465 = vmatmul.bf16.gmra.mxu0 %v3464
        %v4466 = vpop.f32.mrf.mxu0
        %v4467 = vadd.f32 %v4418, %v4466
        %v4468 = vpop.f32.mrf.mxu0
        %v4469 = vadd.f32 %v4420, %v4468
        %4470 = vmatmul.bf16.gmra.mxu0 %v3465
        %v4471 = vpop.f32.mrf.mxu0
        %v4472 = vadd.f32 %v4423, %v4471
        %v4473 = vpop.f32.mrf.mxu0
        %v4474 = vadd.f32 %v4425, %v4473
        %4475 = vmatmul.bf16.gmra.mxu0 %v3466
        %v4476 = vpop.f32.mrf.mxu0
        %v4477 = vadd.f32 %v4428, %v4476
        %v4478 = vpop.f32.mrf.mxu0
        %v4479 = vadd.f32 %v4430, %v4478
        %4480 = vmatmul.bf16.gmra.mxu0 %v3467
        %v4481 = vpop.f32.mrf.mxu0
        %v4482 = vadd.f32 %v4433, %v4481
        %v4483 = vpop.f32.mrf.mxu0
        %v4484 = vadd.f32 %v4435, %v4483
        %4485 = vdwg.mxu0
        %4486 = vmatpush.bf16.msra.mxu0 %v4267
        %4487 = vmatpush.bf16.msra.mxu0 %v4266
        %4488 = vmatpush.bf16.msra.mxu0 %v4265
        %4489 = vmatpush.bf16.msra.mxu0 %v4264
        %4490 = vmatpush.bf16.msra.mxu0 %v4263
        %4491 = vmatpush.bf16.msra.mxu0 %v4262
        %4492 = vmatpush.bf16.msra.mxu0 %v4261
        %4493 = vmatpush.bf16.msra.mxu0 %v4260
        %4494 = vmatmul.bf16.gmra.mxu0 %v3508
        %v4495 = vpop.f32.mrf.mxu0
        %v4496 = vadd.f32 %v4447, %v4495
        %v4497 = vpop.f32.mrf.mxu0
        %v4498 = vadd.f32 %v4449, %v4497
        %4499 = vmatmul.bf16.gmra.mxu0 %v3509
        %v4500 = vpop.f32.mrf.mxu0
        %v4501 = vadd.f32 %v4452, %v4500
        %v4502 = vpop.f32.mrf.mxu0
        %v4503 = vadd.f32 %v4454, %v4502
        %4504 = vmatmul.bf16.gmra.mxu0 %v3510
        %v4505 = vpop.f32.mrf.mxu0
        %v4506 = vadd.f32 %v4457, %v4505
        %v4507 = vpop.f32.mrf.mxu0
        %v4508 = vadd.f32 %v4459, %v4507
        %4509 = vmatmul.bf16.gmra.mxu0 %v3511
        %v4510 = vpop.f32.mrf.mxu0
        %v4511 = vadd.f32 %v4462, %v4510
        %v4512 = vpop.f32.mrf.mxu0
        %v4513 = vadd.f32 %v4464, %v4512
        %4514 = vmatmul.bf16.gmra.mxu0 %v3512
        %v4515 = vpop.f32.mrf.mxu0
        %v4516 = vadd.f32 %v4467, %v4515
        %v4517 = vpop.f32.mrf.mxu0
        %v4518 = vadd.f32 %v4469, %v4517
        %4519 = vmatmul.bf16.gmra.mxu0 %v3513
        %v4520 = vpop.f32.mrf.mxu0
        %v4521 = vadd.f32 %v4472, %v4520
        %v4522 = vpop.f32.mrf.mxu0
        %v4523 = vadd.f32 %v4474, %v4522
        %4524 = vmatmul.bf16.gmra.mxu0 %v3514
        %v4525 = vpop.f32.mrf.mxu0
        %v4526 = vadd.f32 %v4477, %v4525
        %v4527 = vpop.f32.mrf.mxu0
        %v4528 = vadd.f32 %v4479, %v4527
        %4529 = vmatmul.bf16.gmra.mxu0 %v3515
        %v4530 = vpop.f32.mrf.mxu0
        %v4531 = vadd.f32 %v4482, %v4530
        %v4532 = vpop.f32.mrf.mxu0
        %v4533 = vadd.f32 %v4484, %v4532
        %4534 = vdwg.mxu0
        %4535 = vmatpush.bf16.msra.mxu0 %v4275
        %4536 = vmatpush.bf16.msra.mxu0 %v4274
        %4537 = vmatpush.bf16.msra.mxu0 %v4273
        %4538 = vmatpush.bf16.msra.mxu0 %v4272
        %4539 = vmatpush.bf16.msra.mxu0 %v4271
        %4540 = vmatpush.bf16.msra.mxu0 %v4270
        %4541 = vmatpush.bf16.msra.mxu0 %v4269
        %4542 = vmatpush.bf16.msra.mxu0 %v4268
        %4543 = vmatmul.bf16.gmra.mxu0 %v3556
        %v4544 = vpop.f32.mrf.mxu0
        %v4545 = vadd.f32 %v4496, %v4544
        %v4546 = vpop.f32.mrf.mxu0
        %v4547 = vadd.f32 %v4498, %v4546
        %4548 = vmatmul.bf16.gmra.mxu0 %v3557
        %v4549 = vpop.f32.mrf.mxu0
        %v4550 = vadd.f32 %v4501, %v4549
        %v4551 = vpop.f32.mrf.mxu0
        %v4552 = vadd.f32 %v4503, %v4551
        %4553 = vmatmul.bf16.gmra.mxu0 %v3558
        %v4554 = vpop.f32.mrf.mxu0
        %v4555 = vadd.f32 %v4506, %v4554
        %v4556 = vpop.f32.mrf.mxu0
        %v4557 = vadd.f32 %v4508, %v4556
        %4558 = vmatmul.bf16.gmra.mxu0 %v3559
        %v4559 = vpop.f32.mrf.mxu0
        %v4560 = vadd.f32 %v4511, %v4559
        %v4561 = vpop.f32.mrf.mxu0
        %v4562 = vadd.f32 %v4513, %v4561
        %4563 = vmatmul.bf16.gmra.mxu0 %v3560
        %v4564 = vpop.f32.mrf.mxu0
        %v4565 = vadd.f32 %v4516, %v4564
        %v4566 = vpop.f32.mrf.mxu0
        %v4567 = vadd.f32 %v4518, %v4566
        %4568 = vmatmul.bf16.gmra.mxu0 %v3561
        %v4569 = vpop.f32.mrf.mxu0
        %v4570 = vadd.f32 %v4521, %v4569
        %v4571 = vpop.f32.mrf.mxu0
        %v4572 = vadd.f32 %v4523, %v4571
        %4573 = vmatmul.bf16.gmra.mxu0 %v3562
        %v4574 = vpop.f32.mrf.mxu0
        %v4575 = vadd.f32 %v4526, %v4574
        %v4576 = vpop.f32.mrf.mxu0
        %v4577 = vadd.f32 %v4528, %v4576
        %4578 = vmatmul.bf16.gmra.mxu0 %v3563
        %v4579 = vpop.f32.mrf.mxu0
        %v4580 = vadd.f32 %v4531, %v4579
        %v4581 = vpop.f32.mrf.mxu0
        %v4582 = vadd.f32 %v4533, %v4581
        %4583 = vdwg.mxu0
        %4584 = vmatpush.bf16.msra.mxu0 %v4283
        %4585 = vmatpush.bf16.msra.mxu0 %v4282
        %4586 = vmatpush.bf16.msra.mxu0 %v4281
        %4587 = vmatpush.bf16.msra.mxu0 %v4280
        %4588 = vmatpush.bf16.msra.mxu0 %v4279
        %4589 = vmatpush.bf16.msra.mxu0 %v4278
        %4590 = vmatpush.bf16.msra.mxu0 %v4277
        %4591 = vmatpush.bf16.msra.mxu0 %v4276
        %4592 = vmatmul.bf16.gmra.mxu0 %v3604
        %v4593 = vpop.f32.mrf.mxu0
        %v4594 = vadd.f32 %v4545, %v4593
        %v4595 = vpop.f32.mrf.mxu0
        %v4596 = vadd.f32 %v4547, %v4595
        %4597 = vmatmul.bf16.gmra.mxu0 %v3605
        %v4598 = vpop.f32.mrf.mxu0
        %v4599 = vadd.f32 %v4550, %v4598
        %v4600 = vpop.f32.mrf.mxu0
        %v4601 = vadd.f32 %v4552, %v4600
        %4602 = vmatmul.bf16.gmra.mxu0 %v3606
        %v4603 = vpop.f32.mrf.mxu0
        %v4604 = vadd.f32 %v4555, %v4603
        %v4605 = vpop.f32.mrf.mxu0
        %v4606 = vadd.f32 %v4557, %v4605
        %4607 = vmatmul.bf16.gmra.mxu0 %v3607
        %v4608 = vpop.f32.mrf.mxu0
        %v4609 = vadd.f32 %v4560, %v4608
        %v4610 = vpop.f32.mrf.mxu0
        %v4611 = vadd.f32 %v4562, %v4610
        %4612 = vmatmul.bf16.gmra.mxu0 %v3608
        %v4613 = vpop.f32.mrf.mxu0
        %v4614 = vadd.f32 %v4565, %v4613
        %v4615 = vpop.f32.mrf.mxu0
        %v4616 = vadd.f32 %v4567, %v4615
        %4617 = vmatmul.bf16.gmra.mxu0 %v3609
        %v4618 = vpop.f32.mrf.mxu0
        %v4619 = vadd.f32 %v4570, %v4618
        %v4620 = vpop.f32.mrf.mxu0
        %v4621 = vadd.f32 %v4572, %v4620
        %4622 = vmatmul.bf16.gmra.mxu0 %v3610
        %v4623 = vpop.f32.mrf.mxu0
        %v4624 = vadd.f32 %v4575, %v4623
        %v4625 = vpop.f32.mrf.mxu0
        %v4626 = vadd.f32 %v4577, %v4625
        %4627 = vmatmul.bf16.gmra.mxu0 %v3611
        %v4628 = vpop.f32.mrf.mxu0
        %v4629 = vadd.f32 %v4580, %v4628
        %v4630 = vpop.f32.mrf.mxu0
        %v4631 = vadd.f32 %v4582, %v4630
        %4632 = vdwg.mxu0
        %4633 = vmatpush.bf16.msra.mxu0 %v4291
        %4634 = vmatpush.bf16.msra.mxu0 %v4290
        %4635 = vmatpush.bf16.msra.mxu0 %v4289
        %4636 = vmatpush.bf16.msra.mxu0 %v4288
        %4637 = vmatpush.bf16.msra.mxu0 %v4287
        %4638 = vmatpush.bf16.msra.mxu0 %v4286
        %4639 = vmatpush.bf16.msra.mxu0 %v4285
        %4640 = vmatpush.bf16.msra.mxu0 %v4284
        %4641 = vmatmul.bf16.gmra.mxu0 %v3652
        %v4642 = vpop.f32.mrf.mxu0
        %v4643 = vadd.f32 %v4594, %v4642
        %v4644 = vpop.f32.mrf.mxu0
        %v4645 = vadd.f32 %v4596, %v4644
        %4646 = vmatmul.bf16.gmra.mxu0 %v3653
        %v4647 = vpop.f32.mrf.mxu0
        %v4648 = vadd.f32 %v4599, %v4647
        %v4649 = vpop.f32.mrf.mxu0
        %v4650 = vadd.f32 %v4601, %v4649
        %4651 = vmatmul.bf16.gmra.mxu0 %v3654
        %v4652 = vpop.f32.mrf.mxu0
        %v4653 = vadd.f32 %v4604, %v4652
        %v4654 = vpop.f32.mrf.mxu0
        %v4655 = vadd.f32 %v4606, %v4654
        %4656 = vmatmul.bf16.gmra.mxu0 %v3655
        %v4657 = vpop.f32.mrf.mxu0
        %v4658 = vadd.f32 %v4609, %v4657
        %v4659 = vpop.f32.mrf.mxu0
        %v4660 = vadd.f32 %v4611, %v4659
        %4661 = vmatmul.bf16.gmra.mxu0 %v3656
        %v4662 = vpop.f32.mrf.mxu0
        %v4663 = vadd.f32 %v4614, %v4662
        %v4664 = vpop.f32.mrf.mxu0
        %v4665 = vadd.f32 %v4616, %v4664
        %4666 = vmatmul.bf16.gmra.mxu0 %v3657
        %v4667 = vpop.f32.mrf.mxu0
        %v4668 = vadd.f32 %v4619, %v4667
        %v4669 = vpop.f32.mrf.mxu0
        %v4670 = vadd.f32 %v4621, %v4669
        %4671 = vmatmul.bf16.gmra.mxu0 %v3658
        %v4672 = vpop.f32.mrf.mxu0
        %v4673 = vadd.f32 %v4624, %v4672
        %v4674 = vpop.f32.mrf.mxu0
        %v4675 = vadd.f32 %v4626, %v4674
        %4676 = vmatmul.bf16.gmra.mxu0 %v3659
        %v4677 = vpop.f32.mrf.mxu0
        %v4678 = vadd.f32 %v4629, %v4677
        %v4679 = vpop.f32.mrf.mxu0
        %v4680 = vadd.f32 %v4631, %v4679
        %4681 = vdwg.mxu0
        %4682 = vmatpush.bf16.msra.mxu0 %v4299
        %4683 = vmatpush.bf16.msra.mxu0 %v4298
        %4684 = vmatpush.bf16.msra.mxu0 %v4297
        %4685 = vmatpush.bf16.msra.mxu0 %v4296
        %4686 = vmatpush.bf16.msra.mxu0 %v4295
        %4687 = vmatpush.bf16.msra.mxu0 %v4294
        %4688 = vmatpush.bf16.msra.mxu0 %v4293
        %4689 = vmatpush.bf16.msra.mxu0 %v4292
        %4690 = vmatmul.bf16.gmra.mxu0 %v3700
        %v4691 = vpop.f32.mrf.mxu0
        %v4692 = vadd.f32 %v4643, %v4691
        %v4693 = vpop.f32.mrf.mxu0
        %v4694 = vadd.f32 %v4645, %v4693
        %4695 = vmatmul.bf16.gmra.mxu0 %v3701
        %v4696 = vpop.f32.mrf.mxu0
        %v4697 = vadd.f32 %v4648, %v4696
        %v4698 = vpop.f32.mrf.mxu0
        %v4699 = vadd.f32 %v4650, %v4698
        %4700 = vmatmul.bf16.gmra.mxu0 %v3702
        %v4701 = vpop.f32.mrf.mxu0
        %v4702 = vadd.f32 %v4653, %v4701
        %v4703 = vpop.f32.mrf.mxu0
        %v4704 = vadd.f32 %v4655, %v4703
        %4705 = vmatmul.bf16.gmra.mxu0 %v3703
        %v4706 = vpop.f32.mrf.mxu0
        %v4707 = vadd.f32 %v4658, %v4706
        %v4708 = vpop.f32.mrf.mxu0
        %v4709 = vadd.f32 %v4660, %v4708
        %4710 = vmatmul.bf16.gmra.mxu0 %v3704
        %v4711 = vpop.f32.mrf.mxu0
        %v4712 = vadd.f32 %v4663, %v4711
        %v4713 = vpop.f32.mrf.mxu0
        %v4714 = vadd.f32 %v4665, %v4713
        %4715 = vmatmul.bf16.gmra.mxu0 %v3705
        %v4716 = vpop.f32.mrf.mxu0
        %v4717 = vadd.f32 %v4668, %v4716
        %v4718 = vpop.f32.mrf.mxu0
        %v4719 = vadd.f32 %v4670, %v4718
        %4720 = vmatmul.bf16.gmra.mxu0 %v3706
        %v4721 = vpop.f32.mrf.mxu0
        %v4722 = vadd.f32 %v4673, %v4721
        %v4723 = vpop.f32.mrf.mxu0
        %v4724 = vadd.f32 %v4675, %v4723
        %4725 = vmatmul.bf16.gmra.mxu0 %v3707
        %v4726 = vpop.f32.mrf.mxu0
        %v4727 = vadd.f32 %v4678, %v4726
        %v4728 = vpop.f32.mrf.mxu0
        %v4729 = vadd.f32 %v4680, %v4728
        %4730 = vdwg.mxu0
        %4731 = vmatpush.bf16.msra.mxu0 %v4307
        %4732 = vmatpush.bf16.msra.mxu0 %v4306
        %4733 = vmatpush.bf16.msra.mxu0 %v4305
        %4734 = vmatpush.bf16.msra.mxu0 %v4304
        %4735 = vmatpush.bf16.msra.mxu0 %v4303
        %4736 = vmatpush.bf16.msra.mxu0 %v4302
        %4737 = vmatpush.bf16.msra.mxu0 %v4301
        %4738 = vmatpush.bf16.msra.mxu0 %v4300
        %4739 = vmatmul.bf16.gmra.mxu0 %v3748
        %v4740 = vpop.f32.mrf.mxu0
        %v4741 = vadd.f32 %v4692, %v4740
        %v4742 = vpop.f32.mrf.mxu0
        %v4743 = vadd.f32 %v4694, %v4742
        %4744 = vmatmul.bf16.gmra.mxu0 %v3749
        %v4745 = vpop.f32.mrf.mxu0
        %v4746 = vadd.f32 %v4697, %v4745
        %v4747 = vpop.f32.mrf.mxu0
        %v4748 = vadd.f32 %v4699, %v4747
        %4749 = vmatmul.bf16.gmra.mxu0 %v3750
        %v4750 = vpop.f32.mrf.mxu0
        %v4751 = vadd.f32 %v4702, %v4750
        %v4752 = vpop.f32.mrf.mxu0
        %v4753 = vadd.f32 %v4704, %v4752
        %4754 = vmatmul.bf16.gmra.mxu0 %v3751
        %v4755 = vpop.f32.mrf.mxu0
        %v4756 = vadd.f32 %v4707, %v4755
        %v4757 = vpop.f32.mrf.mxu0
        %v4758 = vadd.f32 %v4709, %v4757
        %4759 = vmatmul.bf16.gmra.mxu0 %v3752
        %v4760 = vpop.f32.mrf.mxu0
        %v4761 = vadd.f32 %v4712, %v4760
        %v4762 = vpop.f32.mrf.mxu0
        %v4763 = vadd.f32 %v4714, %v4762
        %4764 = vmatmul.bf16.gmra.mxu0 %v3753
        %v4765 = vpop.f32.mrf.mxu0
        %v4766 = vadd.f32 %v4717, %v4765
        %v4767 = vpop.f32.mrf.mxu0
        %v4768 = vadd.f32 %v4719, %v4767
        %4769 = vmatmul.bf16.gmra.mxu0 %v3754
        %v4770 = vpop.f32.mrf.mxu0
        %v4771 = vadd.f32 %v4722, %v4770
        %v4772 = vpop.f32.mrf.mxu0
        %v4773 = vadd.f32 %v4724, %v4772
        %4774 = vmatmul.bf16.gmra.mxu0 %v3755
        %v4775 = vpop.f32.mrf.mxu0
        %v4776 = vadd.f32 %v4727, %v4775
        %v4777 = vpop.f32.mrf.mxu0
        %v4778 = vadd.f32 %v4729, %v4777
        %4779 = vdwg.mxu0
        %4780 = vmatpush.bf16.msra.mxu0 %v4315
        %4781 = vmatpush.bf16.msra.mxu0 %v4314
        %4782 = vmatpush.bf16.msra.mxu0 %v4313
        %4783 = vmatpush.bf16.msra.mxu0 %v4312
        %4784 = vmatpush.bf16.msra.mxu0 %v4311
        %4785 = vmatpush.bf16.msra.mxu0 %v4310
        %4786 = vmatpush.bf16.msra.mxu0 %v4309
        %4787 = vmatpush.bf16.msra.mxu0 %v4308
        %4788 = vmatmul.bf16.gmra.mxu0 %v3796
        %v4789 = vpop.f32.mrf.mxu0
        %v4790 = vadd.f32 %v4741, %v4789
        %v4791 = vpop.f32.mrf.mxu0
        %v4792 = vadd.f32 %v4743, %v4791
        %4793 = vmatmul.bf16.gmra.mxu0 %v3797
        %v4794 = vpop.f32.mrf.mxu0
        %v4795 = vadd.f32 %v4746, %v4794
        %v4796 = vpop.f32.mrf.mxu0
        %v4797 = vadd.f32 %v4748, %v4796
        %4798 = vmatmul.bf16.gmra.mxu0 %v3798
        %v4799 = vpop.f32.mrf.mxu0
        %v4800 = vadd.f32 %v4751, %v4799
        %v4801 = vpop.f32.mrf.mxu0
        %v4802 = vadd.f32 %v4753, %v4801
        %4803 = vmatmul.bf16.gmra.mxu0 %v3799
        %v4804 = vpop.f32.mrf.mxu0
        %v4805 = vadd.f32 %v4756, %v4804
        %v4806 = vpop.f32.mrf.mxu0
        %v4807 = vadd.f32 %v4758, %v4806
        %4808 = vmatmul.bf16.gmra.mxu0 %v3800
        %v4809 = vpop.f32.mrf.mxu0
        %v4810 = vadd.f32 %v4761, %v4809
        %v4811 = vpop.f32.mrf.mxu0
        %v4812 = vadd.f32 %v4763, %v4811
        %4813 = vmatmul.bf16.gmra.mxu0 %v3801
        %v4814 = vpop.f32.mrf.mxu0
        %v4815 = vadd.f32 %v4766, %v4814
        %v4816 = vpop.f32.mrf.mxu0
        %v4817 = vadd.f32 %v4768, %v4816
        %4818 = vmatmul.bf16.gmra.mxu0 %v3802
        %v4819 = vpop.f32.mrf.mxu0
        %v4820 = vadd.f32 %v4771, %v4819
        %v4821 = vpop.f32.mrf.mxu0
        %v4822 = vadd.f32 %v4773, %v4821
        %4823 = vmatmul.bf16.gmra.mxu0 %v3803
        %v4824 = vpop.f32.mrf.mxu0
        %v4825 = vadd.f32 %v4776, %v4824
        %v4826 = vpop.f32.mrf.mxu0
        %v4827 = vadd.f32 %v4778, %v4826
        %4828 = vdwg.mxu0
        %v4829 = vld [vmem:[%s4 + $0x2] sm:$0x1]
        %v4830 = vperm.slane %v4829, 0
        %v4831 = vmul.f32 %v4790, %v4830
        %v4832 = vmul.f32 %v4792, %v4830
        %v4833 = vmul.f32 %v4795, %v4830
        %v4834 = vmul.f32 %v4797, %v4830
        %v4835 = vmul.f32 %v4800, %v4830
        %v4836 = vmul.f32 %v4802, %v4830
        %v4837 = vmul.f32 %v4805, %v4830
        %v4838 = vmul.f32 %v4807, %v4830
        %v4839 = vmul.f32 %v4810, %v4830
        %v4840 = vmul.f32 %v4812, %v4830
        %v4841 = vmul.f32 %v4815, %v4830
        %v4842 = vmul.f32 %v4817, %v4830
        %v4843 = vmul.f32 %v4820, %v4830
        %v4844 = vmul.f32 %v4822, %v4830
        %v4845 = vmul.f32 %v4825, %v4830
        %v4846 = vmul.f32 %v4827, %v4830
        %v4847 = vld [vmem:[%s4 + $0x3] sm:$0x1]
        %v4848 = vperm.slane %v4847, 0
        %v4849 = vadd.f32 %v4831, %v4848
        %v4850 = vadd.f32 %v4832, %v4848
        %v4851 = vadd.f32 %v4833, %v4848
        %v4852 = vadd.f32 %v4834, %v4848
        %v4853 = vadd.f32 %v4835, %v4848
        %v4854 = vadd.f32 %v4836, %v4848
        %v4855 = vadd.f32 %v4837, %v4848
        %v4856 = vadd.f32 %v4838, %v4848
        %v4857 = vadd.f32 %v4839, %v4848
        %v4858 = vadd.f32 %v4840, %v4848
        %v4859 = vadd.f32 %v4841, %v4848
        %v4860 = vadd.f32 %v4842, %v4848
        %v4861 = vadd.f32 %v4843, %v4848
        %v4862 = vadd.f32 %v4844, %v4848
        %v4863 = vadd.f32 %v4845, %v4848
        %v4864 = vadd.f32 %v4846, %v4848
        %v4865 = vld [vmem:[%s1036] sm:$0xf]
        %v4866 = vld [vmem:[%s1036 + $0x4] sm:$0xf]
        %v4867 = vld [vmem:[%s1036 + $0x8] sm:$0x1]
        %v4868 = vld [vmem:[%s1036 + $0xc] sm:$0xf]
        %v4869 = vld [vmem:[%s1036 + $0x10] sm:$0xf]
        %v4870 = vld [vmem:[%s1036 + $0x14] sm:$0x1]
        %v4871 = vld [vmem:[%s1036 + $0x18] sm:$0xf]
        %v4872 = vld [vmem:[%s1036 + $0x1c] sm:$0xf]
        %v4873 = vld [vmem:[%s1036 + $0x20] sm:$0x1]
        %v4874 = vld [vmem:[%s1036 + $0x24] sm:$0xf]
        %v4875 = vld [vmem:[%s1036 + $0x28] sm:$0xf]
        %v4876 = vld [vmem:[%s1036 + $0x2c] sm:$0x1]
        %v4877 = vld [vmem:[%s1036 + $0x30] sm:$0xf]
        %v4878 = vld [vmem:[%s1036 + $0x34] sm:$0xf]
        %v4879 = vld [vmem:[%s1036 + $0x38] sm:$0x1]
        %v4880 = vld [vmem:[%s1036 + $0x3c] sm:$0xf]
        %v4881 = vld [vmem:[%s1036 + $0x40] sm:$0xf]
        %v4882 = vld [vmem:[%s1036 + $0x44] sm:$0x1]
        %v4883 = vld [vmem:[%s1036 + $0x48] sm:$0xf]
        %v4884 = vld [vmem:[%s1036 + $0x4c] sm:$0xf]
        %v4885 = vld [vmem:[%s1036 + $0x50] sm:$0x1]
        %v4886 = vld [vmem:[%s1036 + $0x54] sm:$0xf]
        %v4887 = vld [vmem:[%s1036 + $0x58] sm:$0xf]
        %v4888 = vld [vmem:[%s1036 + $0x5c] sm:$0x1]
        %v4890 = vshrl.u32 %v4865, 16
        %v4892 = vrot.slane %v4890, 4
        %v4893 = vshll.u32 %v4865, 16
        %v4895 = vrot.slane %v4893, 5
        %v4896 = vor.u32 %v4892, %v4895
        %v4897 = vrot.slane %v4896, 4
        %v4899 = vshll.u32 %v4866, 16
        %v4901 = vrot.slane %v4899, 5
        %v4902 = vsel %vm301, %v4897, %v4901
        %v4903 = vshrl.u32 %v4866, 16
        %v4905 = vrot.slane %v4903, 4
        %v4906 = vor.u32 %v4905, %v4901
        %v4907 = vrot.slane %v4906, 4
        %v4909 = vshll.u32 %v4867, 16
        %v4911 = vrot.slane %v4909, 5
        %v4912 = vsel %vm301, %v4907, %v4911
        %v4914 = vshrl.u32 %v4868, 16
        %v4916 = vrot.slane %v4914, 4
        %v4917 = vshll.u32 %v4868, 16
        %v4919 = vrot.slane %v4917, 5
        %v4920 = vor.u32 %v4916, %v4919
        %v4921 = vrot.slane %v4920, 4
        %v4923 = vshll.u32 %v4869, 16
        %v4925 = vrot.slane %v4923, 5
        %v4926 = vsel %vm301, %v4921, %v4925
        %v4927 = vshrl.u32 %v4869, 16
        %v4929 = vrot.slane %v4927, 4
        %v4930 = vor.u32 %v4929, %v4925
        %v4931 = vrot.slane %v4930, 4
        %v4933 = vshll.u32 %v4870, 16
        %v4935 = vrot.slane %v4933, 5
        %v4936 = vsel %vm301, %v4931, %v4935
        %v4938 = vshrl.u32 %v4871, 16
        %v4940 = vrot.slane %v4938, 4
        %v4941 = vshll.u32 %v4871, 16
        %v4943 = vrot.slane %v4941, 5
        %v4944 = vor.u32 %v4940, %v4943
        %v4945 = vrot.slane %v4944, 4
        %v4947 = vshll.u32 %v4872, 16
        %v4949 = vrot.slane %v4947, 5
        %v4950 = vsel %vm301, %v4945, %v4949
        %v4951 = vshrl.u32 %v4872, 16
        %v4953 = vrot.slane %v4951, 4
        %v4954 = vor.u32 %v4953, %v4949
        %v4955 = vrot.slane %v4954, 4
        %v4957 = vshll.u32 %v4873, 16
        %v4959 = vrot.slane %v4957, 5
        %v4960 = vsel %vm301, %v4955, %v4959
        %v4962 = vshrl.u32 %v4874, 16
        %v4964 = vrot.slane %v4962, 4
        %v4965 = vshll.u32 %v4874, 16
        %v4967 = vrot.slane %v4965, 5
        %v4968 = vor.u32 %v4964, %v4967
        %v4969 = vrot.slane %v4968, 4
        %v4971 = vshll.u32 %v4875, 16
        %v4973 = vrot.slane %v4971, 5
        %v4974 = vsel %vm301, %v4969, %v4973
        %v4975 = vshrl.u32 %v4875, 16
        %v4977 = vrot.slane %v4975, 4
        %v4978 = vor.u32 %v4977, %v4973
        %v4979 = vrot.slane %v4978, 4
        %v4981 = vshll.u32 %v4876, 16
        %v4983 = vrot.slane %v4981, 5
        %v4984 = vsel %vm301, %v4979, %v4983
        %v4986 = vshrl.u32 %v4877, 16
        %v4988 = vrot.slane %v4986, 4
        %v4989 = vshll.u32 %v4877, 16
        %v4991 = vrot.slane %v4989, 5
        %v4992 = vor.u32 %v4988, %v4991
        %v4993 = vrot.slane %v4992, 4
        %v4995 = vshll.u32 %v4878, 16
        %v4997 = vrot.slane %v4995, 5
        %v4998 = vsel %vm301, %v4993, %v4997
        %v4999 = vshrl.u32 %v4878, 16
        %v5001 = vrot.slane %v4999, 4
        %v5002 = vor.u32 %v5001, %v4997
        %v5003 = vrot.slane %v5002, 4
        %v5005 = vshll.u32 %v4879, 16
        %v5007 = vrot.slane %v5005, 5
        %v5008 = vsel %vm301, %v5003, %v5007
        %v5010 = vshrl.u32 %v4880, 16
        %v5012 = vrot.slane %v5010, 4
        %v5013 = vshll.u32 %v4880, 16
        %v5015 = vrot.slane %v5013, 5
        %v5016 = vor.u32 %v5012, %v5015
        %v5017 = vrot.slane %v5016, 4
        %v5019 = vshll.u32 %v4881, 16
        %v5021 = vrot.slane %v5019, 5
        %v5022 = vsel %vm301, %v5017, %v5021
        %v5023 = vshrl.u32 %v4881, 16
        %v5025 = vrot.slane %v5023, 4
        %v5026 = vor.u32 %v5025, %v5021
        %v5027 = vrot.slane %v5026, 4
        %v5029 = vshll.u32 %v4882, 16
        %v5031 = vrot.slane %v5029, 5
        %v5032 = vsel %vm301, %v5027, %v5031
        %v5034 = vshrl.u32 %v4883, 16
        %v5036 = vrot.slane %v5034, 4
        %v5037 = vshll.u32 %v4883, 16
        %v5039 = vrot.slane %v5037, 5
        %v5040 = vor.u32 %v5036, %v5039
        %v5041 = vrot.slane %v5040, 4
        %v5043 = vshll.u32 %v4884, 16
        %v5045 = vrot.slane %v5043, 5
        %v5046 = vsel %vm301, %v5041, %v5045
        %v5047 = vshrl.u32 %v4884, 16
        %v5049 = vrot.slane %v5047, 4
        %v5050 = vor.u32 %v5049, %v5045
        %v5051 = vrot.slane %v5050, 4
        %v5053 = vshll.u32 %v4885, 16
        %v5055 = vrot.slane %v5053, 5
        %v5056 = vsel %vm301, %v5051, %v5055
        %v5058 = vshrl.u32 %v4886, 16
        %v5060 = vrot.slane %v5058, 4
        %v5061 = vshll.u32 %v4886, 16
        %v5063 = vrot.slane %v5061, 5
        %v5064 = vor.u32 %v5060, %v5063
        %v5065 = vrot.slane %v5064, 4
        %v5067 = vshll.u32 %v4887, 16
        %v5069 = vrot.slane %v5067, 5
        %v5070 = vsel %vm301, %v5065, %v5069
        %v5071 = vshrl.u32 %v4887, 16
        %v5073 = vrot.slane %v5071, 4
        %v5074 = vor.u32 %v5073, %v5069
        %v5075 = vrot.slane %v5074, 4
        %v5077 = vshll.u32 %v4888, 16
        %v5079 = vrot.slane %v5077, 5
        %v5080 = vsel %vm301, %v5075, %v5079
        %v5081 = vld [vmem:[%s3] sm:$0xf]
        %v5082 = vld [vmem:[%s3 + $0x4] sm:$0xf]
        %v5083 = vld [vmem:[%s3 + $0x8] sm:$0xf]
        %v5084 = vld [vmem:[%s3 + $0xc] sm:$0xf]
        %v5085 = vld [vmem:[%s3 + $0x10] sm:$0xf]
        %v5086 = vld [vmem:[%s3 + $0x14] sm:$0xf]
        %v5087 = vld [vmem:[%s3 + $0x18] sm:$0xf]
        %v5088 = vld [vmem:[%s3 + $0x1c] sm:$0xf]
        %v5089 = vld [vmem:[%s3 + $0x20] sm:$0xf]
        %v5090 = vld [vmem:[%s3 + $0x24] sm:$0xf]
        %v5091 = vld [vmem:[%s3 + $0x28] sm:$0xf]
        %v5092 = vld [vmem:[%s3 + $0x2c] sm:$0xf]
        %v5093 = vld [vmem:[%s3 + $0x30] sm:$0xf]
        %v5094 = vld [vmem:[%s3 + $0x34] sm:$0xf]
        %v5095 = vld [vmem:[%s3 + $0x38] sm:$0xf]
        %v5096 = vld [vmem:[%s3 + $0x3c] sm:$0xf]
        %v5097 = vunpack.c.l.b16 %v4902
        %v5098 = vunpack.c.l.b16 %v4912
        %v5099 = vunpack.c.l.b16 %v4926
        %v5100 = vunpack.c.l.b16 %v4936
        %v5101 = vunpack.c.l.b16 %v4950
        %v5102 = vunpack.c.l.b16 %v4960
        %v5103 = vunpack.c.l.b16 %v4974
        %v5104 = vunpack.c.l.b16 %v4984
        %v5105 = vunpack.c.l.b16 %v4998
        %v5106 = vunpack.c.l.b16 %v5008
        %v5107 = vunpack.c.l.b16 %v5022
        %v5108 = vunpack.c.l.b16 %v5032
        %v5109 = vunpack.c.l.b16 %v5046
        %v5110 = vunpack.c.l.b16 %v5056
        %v5111 = vunpack.c.l.b16 %v5070
        %v5112 = vunpack.c.l.b16 %v5080
        %v5113 = vpack.c.b16 %v5098, %v5097
        %v5114 = vpack.c.b16 %v5100, %v5099
        %v5115 = vpack.c.b16 %v5102, %v5101
        %v5116 = vpack.c.b16 %v5104, %v5103
        %v5117 = vpack.c.b16 %v5106, %v5105
        %v5118 = vpack.c.b16 %v5108, %v5107
        %v5119 = vpack.c.b16 %v5110, %v5109
        %v5120 = vpack.c.b16 %v5112, %v5111
        %v5145 = vunpack.c.l.b16 %v5081
        %v5146 = vunpack.c.l.b16 %v5082
        %v5147 = vunpack.c.l.b16 %v5083
        %v5148 = vunpack.c.l.b16 %v5084
        %v5149 = vunpack.c.l.b16 %v5085
        %v5150 = vunpack.c.l.b16 %v5086
        %v5151 = vunpack.c.l.b16 %v5087
        %v5152 = vunpack.c.l.b16 %v5088
        %v5153 = vunpack.c.l.b16 %v5089
        %v5154 = vunpack.c.l.b16 %v5090
        %v5155 = vunpack.c.l.b16 %v5091
        %v5156 = vunpack.c.l.b16 %v5092
        %v5157 = vunpack.c.l.b16 %v5093
        %v5158 = vunpack.c.l.b16 %v5094
        %v5159 = vunpack.c.l.b16 %v5095
        %v5160 = vunpack.c.l.b16 %v5096
        %v5161 = vpack.c.b16 %v5146, %v5145
        %v5162 = vpack.c.b16 %v5148, %v5147
        %v5163 = vpack.c.b16 %v5150, %v5149
        %v5164 = vpack.c.b16 %v5152, %v5151
        %v5165 = vpack.c.b16 %v5154, %v5153
        %v5166 = vpack.c.b16 %v5156, %v5155
        %v5167 = vpack.c.b16 %v5158, %v5157
        %v5168 = vpack.c.b16 %v5160, %v5159
        %5177 = vmatpush.bf16.msra.mxu0 %v5168
        %5178 = vmatpush.bf16.msra.mxu0 %v5167
        %5179 = vmatpush.bf16.msra.mxu0 %v5166
        %5180 = vmatpush.bf16.msra.mxu0 %v5165
        %5181 = vmatpush.bf16.msra.mxu0 %v5164
        %5182 = vmatpush.bf16.msra.mxu0 %v5163
        %5183 = vmatpush.bf16.msra.mxu0 %v5162
        %5184 = vmatpush.bf16.msra.mxu0 %v5161
        %5185 = vmatmul.bf16.gmra.mxu0 %v5113
        %v5186 = vpop.f32.mrf.mxu0
        %v5187 = vadd.f32 0.0, %v5186
        %v5188 = vpop.f32.mrf.mxu0
        %v5189 = vadd.f32 0.0, %v5188
        %5190 = vmatmul.bf16.gmra.mxu0 %v5114
        %v5191 = vpop.f32.mrf.mxu0
        %v5192 = vadd.f32 0.0, %v5191
        %v5193 = vpop.f32.mrf.mxu0
        %v5194 = vadd.f32 0.0, %v5193
        %5195 = vmatmul.bf16.gmra.mxu0 %v5115
        %v5196 = vpop.f32.mrf.mxu0
        %v5197 = vadd.f32 0.0, %v5196
        %v5198 = vpop.f32.mrf.mxu0
        %v5199 = vadd.f32 0.0, %v5198
        %5200 = vmatmul.bf16.gmra.mxu0 %v5116
        %v5201 = vpop.f32.mrf.mxu0
        %v5202 = vadd.f32 0.0, %v5201
        %v5203 = vpop.f32.mrf.mxu0
        %v5204 = vadd.f32 0.0, %v5203
        %5205 = vmatmul.bf16.gmra.mxu0 %v5117
        %v5206 = vpop.f32.mrf.mxu0
        %v5207 = vadd.f32 0.0, %v5206
        %v5208 = vpop.f32.mrf.mxu0
        %v5209 = vadd.f32 0.0, %v5208
        %5210 = vmatmul.bf16.gmra.mxu0 %v5118
        %v5211 = vpop.f32.mrf.mxu0
        %v5212 = vadd.f32 0.0, %v5211
        %v5213 = vpop.f32.mrf.mxu0
        %v5214 = vadd.f32 0.0, %v5213
        %5215 = vmatmul.bf16.gmra.mxu0 %v5119
        %v5216 = vpop.f32.mrf.mxu0
        %v5217 = vadd.f32 0.0, %v5216
        %v5218 = vpop.f32.mrf.mxu0
        %v5219 = vadd.f32 0.0, %v5218
        %5220 = vmatmul.bf16.gmra.mxu0 %v5120
        %v5221 = vpop.f32.mrf.mxu0
        %v5222 = vadd.f32 0.0, %v5221
        %v5223 = vpop.f32.mrf.mxu0
        %v5224 = vadd.f32 0.0, %v5223
        %5225 = vdwg.mxu0
        %v5226 = vld [vmem:[%s4 + $0x4] sm:$0x1]
        %v5227 = vperm.slane %v5226, 0
        %v5228 = vmul.f32 %v5187, %v5227
        %v5229 = vmul.f32 %v5189, %v5227
        %v5230 = vmul.f32 %v5192, %v5227
        %v5231 = vmul.f32 %v5194, %v5227
        %v5232 = vmul.f32 %v5197, %v5227
        %v5233 = vmul.f32 %v5199, %v5227
        %v5234 = vmul.f32 %v5202, %v5227
        %v5235 = vmul.f32 %v5204, %v5227
        %v5236 = vmul.f32 %v5207, %v5227
        %v5237 = vmul.f32 %v5209, %v5227
        %v5238 = vmul.f32 %v5212, %v5227
        %v5239 = vmul.f32 %v5214, %v5227
        %v5240 = vmul.f32 %v5217, %v5227
        %v5241 = vmul.f32 %v5219, %v5227
        %v5242 = vmul.f32 %v5222, %v5227
        %v5243 = vmul.f32 %v5224, %v5227
        %v5244 = vld [vmem:[%s4 + $0x5] sm:$0x1]
        %v5245 = vperm.slane %v5244, 0
        %v5246 = vadd.f32 %v5228, %v5245
        %v5247 = vadd.f32 %v5229, %v5245
        %v5248 = vadd.f32 %v5230, %v5245
        %v5249 = vadd.f32 %v5231, %v5245
        %v5250 = vadd.f32 %v5232, %v5245
        %v5251 = vadd.f32 %v5233, %v5245
        %v5252 = vadd.f32 %v5234, %v5245
        %v5253 = vadd.f32 %v5235, %v5245
        %v5254 = vadd.f32 %v5236, %v5245
        %v5255 = vadd.f32 %v5237, %v5245
        %v5256 = vadd.f32 %v5238, %v5245
        %v5257 = vadd.f32 %v5239, %v5245
        %v5258 = vadd.f32 %v5240, %v5245
        %v5259 = vadd.f32 %v5241, %v5245
        %v5260 = vadd.f32 %v5242, %v5245
        %v5261 = vadd.f32 %v5243, %v5245
        %v5262 = vadd.f32 %v4849, %v5246
        %v5263 = vadd.f32 %v4850, %v5247
        %v5264 = vadd.f32 %v4851, %v5248
        %v5265 = vadd.f32 %v4852, %v5249
        %v5266 = vadd.f32 %v4853, %v5250
        %v5267 = vadd.f32 %v4854, %v5251
        %v5268 = vadd.f32 %v4855, %v5252
        %v5269 = vadd.f32 %v4856, %v5253
        %v5270 = vadd.f32 %v4857, %v5254
        %v5271 = vadd.f32 %v4858, %v5255
        %v5272 = vadd.f32 %v4859, %v5256
        %v5273 = vadd.f32 %v4860, %v5257
        %v5274 = vadd.f32 %v4861, %v5258
        %v5275 = vadd.f32 %v4862, %v5259
        %v5276 = vadd.f32 %v4863, %v5260
        %v5277 = vadd.f32 %v4864, %v5261
        %v5278 = vmax.f32 %v5262, 0.0
        %v5279 = vmax.f32 %v5263, 0.0
        %v5280 = vmax.f32 %v5264, 0.0
        %v5281 = vmax.f32 %v5265, 0.0
        %v5282 = vmax.f32 %v5266, 0.0
        %v5283 = vmax.f32 %v5267, 0.0
        %v5284 = vmax.f32 %v5268, 0.0
        %v5285 = vmax.f32 %v5269, 0.0
        %v5286 = vmax.f32 %v5270, 0.0
        %v5287 = vmax.f32 %v5271, 0.0
        %v5288 = vmax.f32 %v5272, 0.0
        %v5289 = vmax.f32 %v5273, 0.0
        %v5290 = vmax.f32 %v5274, 0.0
        %v5291 = vmax.f32 %v5275, 0.0
        %v5292 = vmax.f32 %v5276, 0.0
        %v5293 = vmax.f32 %v5277, 0.0
        %v5294 = vpack.c.bf16 %v5278, %v5278
        %v5295 = vpack.c.bf16 %v5279, %v5279
        %v5296 = vpack.c.bf16 %v5280, %v5280
        %v5297 = vpack.c.bf16 %v5281, %v5281
        %v5298 = vpack.c.bf16 %v5282, %v5282
        %v5299 = vpack.c.bf16 %v5283, %v5283
        %v5300 = vpack.c.bf16 %v5284, %v5284
        %v5301 = vpack.c.bf16 %v5285, %v5285
        %v5302 = vpack.c.bf16 %v5286, %v5286
        %v5303 = vpack.c.bf16 %v5287, %v5287
        %v5304 = vpack.c.bf16 %v5288, %v5288
        %v5305 = vpack.c.bf16 %v5289, %v5289
        %v5306 = vpack.c.bf16 %v5290, %v5290
        %v5307 = vpack.c.bf16 %v5291, %v5291
        %v5308 = vpack.c.bf16 %v5292, %v5292
        %v5309 = vpack.c.bf16 %v5293, %v5293
        %5310 = vst [vmem:[%s258] sm:$0xf] %v5294
        %5311 = vst [vmem:[%s258 + $0x4] sm:$0xf] %v5295
        %5312 = vst [vmem:[%s258 + $0x8] sm:$0xf] %v5296
        %5313 = vst [vmem:[%s258 + $0xc] sm:$0xf] %v5297
        %5314 = vst [vmem:[%s258 + $0x10] sm:$0xf] %v5298
        %5315 = vst [vmem:[%s258 + $0x14] sm:$0xf] %v5299
        %5316 = vst [vmem:[%s258 + $0x18] sm:$0xf] %v5300
        %5317 = vst [vmem:[%s258 + $0x1c] sm:$0xf] %v5301
        %5318 = vst [vmem:[%s258 + $0x20] sm:$0xf] %v5302
        %5319 = vst [vmem:[%s258 + $0x24] sm:$0xf] %v5303
        %5320 = vst [vmem:[%s258 + $0x28] sm:$0xf] %v5304
        %5321 = vst [vmem:[%s258 + $0x2c] sm:$0xf] %v5305
        %5322 = vst [vmem:[%s258 + $0x30] sm:$0xf] %v5306
        %5323 = vst [vmem:[%s258 + $0x34] sm:$0xf] %v5307
        %5324 = vst [vmem:[%s258 + $0x38] sm:$0xf] %v5308
        %5325 = vst [vmem:[%s258 + $0x3c] sm:$0xf] %v5309
        %s5326 = sand.u32 %s156, 1
        %s5327 = scalar_lea.sflag [#allocation5], %s5326
        %s5328 = sand.u32 %s156, 1
        %s5329 = smul.addr %s5328, 64
        %s5330 = scalar_lea.vmem [#allocation6], %s5329
        // Predicated region
        $region45: #{tpu_custom_call.1} parent=39 // pred_check
          %p5331 = pneg %p166
        $region46: #{tpu_custom_call.1} parent=39 // pred_check_branch
          %5333 = sbr.rel (%p5331) target = $region48
        $region47: #{tpu_custom_call.1} parent=39 // pred_region
          %s5334 = smul.u32 16, %s25
          %5336 = vsyncadd %s5327, 0
          %s5337 = smul.addr %s24, 32
          %s5338 = sadd.s32 %s5334, %s5337
          %s5339 = smul.addr %s5338, 4
          %s5340 = scalar_lea.hbm %s5, %s5339
          %s5341 = sshll.u32 %s5330, 4
          %s5342 = int_to_ptr.vmem [resolvable:$true] %s5341
          %s5343 = sshll.u32 %s5340, 4
          %s5344 = int_to_ptr.hbm [resolvable:$true] %s5343
          %5349 = dma.vmem_to_hbm [thread:$0]  %s5342, 1024, %s5344, %s5327, 64, 64, 4
        $region48: #{tpu_custom_call.1} parent=39 // pred_fallthru
          _
      $region40: #{tpu_custom_call.1} parent=5 // pred_fallthru
        _
      %p5350 = scmp.le.s32.totalorder 2, %s15
      // Predicated region
      $region49: #{tpu_custom_call.1} parent=5 // pred_check
        %p5351 = pneg %p5350
      $region50: #{tpu_custom_call.1} parent=5 // pred_check_branch
        %5353 = sbr.rel (%p5351) target = $region52
      $region51: #{tpu_custom_call.1} parent=5 // pred_region
        %s5354 = ssub.s32 %s15, 2
        // Predicated region
        $region53: #{tpu_custom_call.1} parent=51 // pred_check
          %p5355 = pneg %p172
        $region54: #{tpu_custom_call.1} parent=51 // pred_check_branch
          %5357 = sbr.rel (%p5355) target = $region56
        $region55: #{tpu_custom_call.1} parent=51 // pred_region
          %s5358 = sand.u32 %s157, 1
          %s5359 = scalar_lea.sflag [#allocation5], %s5358
          %s5360 = sand.u32 %s157, 1
          %s5361 = smul.addr %s5360, 64
          %s5362 = scalar_lea.vmem [#allocation6], %s5361
          %5364 = dma.done %s5359, 1024
        $region56: #{tpu_custom_call.1} parent=51 // pred_fallthru
          _
      $region52: #{tpu_custom_call.1} parent=5 // pred_fallthru
        _
    $region6: #{tpu_custom_call.1} parent=1 // loop_footer
      %s19 = sadd.s32 1, %s15
    $region7: #{tpu_custom_call.1} parent=1 // loop_footer_branch
      %14 = sbr.rel target = $region3
    $region8: #{tpu_custom_call.1} parent=1 // loop_exit
      _
    %5365 = vsyncpa [#allocation4], 1
    %s5366 = scalar_lea.sflag [#allocation4], 1
    %5367 = vsyncpa %s5366, 1
    %5368 = vsyncpa [#allocation5], 1
    %s5369 = scalar_lea.sflag [#allocation5], 1
    %5370 = vsyncpa %s5369, 1

</llo_original>
